<compile_context>
chip_gen: v5e
topology: v5e:2x2
jax: 0.10.0
libtpu: 0.0.40
codegen_flags: <defaults>
</compile_context>

<pallas_src>
import functools

import jax
import jax.numpy as jnp
from jax.experimental import pallas as pl
from jax.experimental.pallas import tpu as pltpu

MXU_DTYPE = jnp.bfloat16          # MXU operand dtype (accumulation stays f32)
_BN_EPS = 1e-5
_VMEM = pl.BlockSpec(memory_space=pltpu.MemorySpace.VMEM)


# ---------------------------------------------------------------------------
# Fused residual-tower (+ head conv) kernel
# ---------------------------------------------------------------------------

def _tower_kernel(x_ref, w_ref, g_ref, be_ref, wh_ref, gh_ref, bh_ref,
                  hb_ref, xpad, res_buf, *, B, H, W, eps, num_stages):
    """One grid step = one conv stage of the tower.

    Stage 0          : x = relu(bn(conv_init(x)))
    Stage 2i+1       : t = relu(bn(conv1(x)))
    Stage 2i+2       : x = relu(x_prev + bn(conv2(t)))      (residual add)
    Last stage extra : hb = relu(bn_head(x @ W_head))       (policy+value 1x1)

    x_ref  : (B, H+2, Wp, C)   pre-padded input, MXU_DTYPE (used at stage 0)
    w_ref  : (1, 9, C, C)      this stage's 3x3 taps, MXU_DTYPE
    g_ref, be_ref : (1, 1, C)  this stage's BN gamma / beta, f32
    wh_ref : (C, 8)            fused head 1x1 conv weight (2 policy, 1 value, pad)
    gh_ref, bh_ref : (1, 8)    head BN gamma / beta (pad channels: gamma 1, beta 0)
    hb_ref : (B*H*W, 8)        output, written at the last stage only
    xpad   : VMEM (B, H+2, Wp, C) MXU_DTYPE  zero-halo activation buffer
    res_buf: VMEM (B*H*W, C) f32            residual trunk (even-stage outputs)
    """
    s = pl.program_id(0)
    C = w_ref.shape[-1]
    M = B * H * W
    inv_m = 1.0 / float(M)

    # Stage 0: load the pre-padded input (halo already zero) and clear res_buf.
    @pl.when(s == 0)
    def _():
        xpad[...] = x_ref[...]
        res_buf[...] = jnp.zeros_like(res_buf)

    # 3x3 conv = 9 shifted MXU matmuls on the bf16 halo buffer (f32 accumulate).
    acc = jnp.dot(xpad[:, 0:H, 0:W, :].reshape(M, C), w_ref[0, 0],
                  preferred_element_type=jnp.float32)
    for kh in range(3):
        for kw in range(3):
            if kh == 0 and kw == 0:
                continue
            patch = xpad[:, kh:kh + H, kw:kw + W, :].reshape(M, C)
            acc = acc + jnp.dot(patch, w_ref[0, kh * 3 + kw],
                                preferred_element_type=jnp.float32)

    # Training-mode BatchNorm over all B*H*W rows, single pass (sum / sum-sq).
    ssum = jnp.sum(acc, axis=0, keepdims=True)
    ssq = jnp.sum(acc * acc, axis=0, keepdims=True)
    mean = ssum * inv_m
    var = ssq * inv_m - mean * mean
    y = (acc - mean) * jax.lax.rsqrt(var + eps) * g_ref[0] + be_ref[0]

    # Residual add on even stages >= 2 (second conv of each residual block).
    is_res = jnp.logical_and(s >= 2, s % 2 == 0)
    y = y + jnp.where(is_res, res_buf[...], 0.0)
    h_new = jnp.maximum(y, 0.0)

    # Even-stage outputs become the residual consumed two stages later.
    @pl.when(s % 2 == 0)
    def _():
        res_buf[...] = h_new

    # Write the new activation into the interior of the halo buffer (halo stays
    # zero) so the next stage can run its 9 taps straight out of VMEM.
    xpad[:, 1:H + 1, 1:W + 1, :] = h_new.reshape(B, H, W, C).astype(xpad.dtype)

    # Last stage: fused policy+value 1x1 head conv + BN + ReLU (8 padded lanes).
    @pl.when(s == num_stages - 1)
    def _():
        hc = jnp.dot(h_new.astype(MXU_DTYPE), wh_ref[...],
                     preferred_element_type=jnp.float32)
        hs = jnp.sum(hc, axis=0, keepdims=True)
        hq = jnp.sum(hc * hc, axis=0, keepdims=True)
        hm = hs * inv_m
        hv = hq * inv_m - hm * hm
        hy = (hc - hm) * jax.lax.rsqrt(hv + eps) * gh_ref[...] + bh_ref[...]
        hb_ref[...] = jnp.maximum(hy, 0.0)


def tower_forward(x_pad, w_stack, g_stack, be_stack, wh, gh, bh, *, B, H, W,
                  eps=_BN_EPS):
    num_stages = w_stack.shape[0]
    C = w_stack.shape[-1]
    Hp, Wp = x_pad.shape[1], x_pad.shape[2]
    M = B * H * W
    n_head = wh.shape[-1]

    kernel = functools.partial(_tower_kernel, B=B, H=H, W=W, eps=eps,
                               num_stages=num_stages)
    flops = num_stages * (2 * 9 * M * C * C) + 2 * M * C * n_head
    bytes_accessed = (w_stack.size * 2 + x_pad.size * 2 + M * n_head * 4
                      + (g_stack.size + be_stack.size) * 4 + wh.size * 2)

    return pl.pallas_call(
        kernel,
        out_shape=jax.ShapeDtypeStruct((M, n_head), jnp.float32),
        grid=(num_stages,),
        in_specs=[
            pl.BlockSpec((B, Hp, Wp, C), lambda s: (0, 0, 0, 0)),   # x (resident)
            pl.BlockSpec((1, 9, C, C), lambda s: (s, 0, 0, 0)),      # stage weights
            pl.BlockSpec((1, 1, C), lambda s: (s, 0, 0)),            # BN gamma
            pl.BlockSpec((1, 1, C), lambda s: (s, 0, 0)),            # BN beta
            pl.BlockSpec((C, n_head), lambda s: (0, 0)),             # head conv w
            pl.BlockSpec((1, n_head), lambda s: (0, 0)),             # head BN gamma
            pl.BlockSpec((1, n_head), lambda s: (0, 0)),             # head BN beta
        ],
        out_specs=pl.BlockSpec((M, n_head), lambda s: (0, 0)),
        scratch_shapes=[pltpu.VMEM((B, Hp, Wp, C), MXU_DTYPE),
                        pltpu.VMEM((M, C), jnp.float32)],
        compiler_params=pltpu.CompilerParams(
            dimension_semantics=("arbitrary",)),
        cost_estimate=pl.CostEstimate(flops=flops, transcendentals=0,
                                      bytes_accessed=bytes_accessed),
    )(x_pad, w_stack, g_stack, be_stack, wh, gh, bh)


# ---------------------------------------------------------------------------
# Fused FC heads kernel (policy FC + log-softmax, value FC1/ReLU/FC2/tanh)
# ---------------------------------------------------------------------------

def _heads_fc_kernel(pol_ref, val_ref, wp_ref, bp_ref, w1_ref, b1_ref,
                     w2_ref, b2_ref, policy_ref, value_ref):
    # Policy logits are lane-dense padded; padded bias = -1e30 so the padded
    # classes contribute exp(-inf)=0 to the softmax normalizer.
    logits = jnp.dot(pol_ref[...].astype(MXU_DTYPE), wp_ref[...],
                     preferred_element_type=jnp.float32) + bp_ref[...]
    m = jnp.max(logits, axis=-1, keepdims=True)
    sh = logits - m
    policy_ref[...] = sh - jnp.log(jnp.sum(jnp.exp(sh), axis=-1, keepdims=True))

    v1 = jnp.dot(val_ref[...].astype(MXU_DTYPE), w1_ref[...],
                 preferred_element_type=jnp.float32) + b1_ref[...]
    v1 = jnp.maximum(v1, 0.0)
    v2 = jnp.dot(v1.astype(MXU_DTYPE), w2_ref[...],
                 preferred_element_type=jnp.float32) + b2_ref[...]
    value_ref[...] = jnp.tanh(v2)


def heads_fc(pol_flat, val_flat, prepared):
    B = pol_flat.shape[0]
    n_pad = prepared["fc_policy_w"].shape[-1]
    return pl.pallas_call(
        _heads_fc_kernel,
        out_shape=(jax.ShapeDtypeStruct((B, n_pad), jnp.float32),
                   jax.ShapeDtypeStruct((B, 1), jnp.float32)),
        in_specs=[_VMEM] * 8,
        out_specs=(_VMEM, _VMEM),
    )(pol_flat, val_flat,
      prepared["fc_policy_w"], prepared["fc_policy_b"],
      prepared["fc_value1_w"], prepared["fc_value1_b"],
      prepared["fc_value2_w"], prepared["fc_value2_b"])


# ---------------------------------------------------------------------------
# Parameter preparation (done once, outside the hot forward path)
# ---------------------------------------------------------------------------

def prepare_params(p):
    """Convert torch-layout params into stacked, kernel-friendly layouts."""
    C = p["conv_init_w"].shape[0]            # filters

    def conv9(w):                            # (Cout, Cin, 3, 3) -> (9, C, Cout)
        cout, cin = w.shape[0], w.shape[1]
        w = jnp.transpose(w, (2, 3, 1, 0)).reshape(9, cin, cout)
        if cin < C:                          # zero-pad input channels (14 -> C)
            w = jnp.pad(w, ((0, 0), (0, C - cin), (0, 0)))
        return w.astype(MXU_DTYPE)

    # Conv biases are dropped on purpose: they cancel exactly in training-mode
    # BatchNorm (x + b - mean(x + b) == x - mean(x)).
    w_list, g_list, b_list = [conv9(p["conv_init_w"])], [p["bn_init_g"]], [p["bn_init_b"]]
    for blk in p["res"]:
        w_list += [conv9(blk["w1"]), conv9(blk["w2"])]
        g_list += [blk["g1"], blk["g2"]]
        b_list += [blk["be1"], blk["be2"]]

    out = {
        "w_stack": jnp.stack(w_list, axis=0),                              # (S,9,C,C)
        "g_stack": jnp.stack([g.reshape(1, C).astype(jnp.float32) for g in g_list], 0),
        "be_stack": jnp.stack([b.reshape(1, C).astype(jnp.float32) for b in b_list], 0),
    }

    # Fused policy+value 1x1 head conv padded to 8 output lanes.
    wh = jnp.concatenate([p["conv_policy_w"].reshape(2, C),
                          p["conv_value_w"].reshape(1, C)], axis=0)        # (3, C)
    wh = jnp.pad(wh, ((0, 5), (0, 0)))                                      # (8, C)
    out["head_conv_w"] = wh.T.astype(MXU_DTYPE)                             # (C, 8)
    out["head_bn_g"] = jnp.concatenate(
        [p["bn_policy_g"], p["bn_value_g"], jnp.ones((5,), jnp.float32)]
    ).reshape(1, 8).astype(jnp.float32)
    out["head_bn_b"] = jnp.concatenate(
        [p["bn_policy_b"], p["bn_value_b"], jnp.zeros((5,), jnp.float32)]
    ).reshape(1, 8).astype(jnp.float32)

    # FC weights: pre-transposed; fc_policy rows permuted to (spatial-major,
    # channel-minor) so the kernel consumes the natural flatten directly, and
    # its output padded to a lane-dense multiple of 128 (pad bias = -1e30).
    hw = p["fc_value1_w"].shape[1]
    n_out = p["fc_policy_w"].shape[0]
    n_pad = ((n_out + 127) // 128) * 128
    wp_fc = jnp.transpose(p["fc_policy_w"].reshape(n_out, 2, hw),
                          (2, 1, 0)).reshape(2 * hw, n_out)
    out["fc_policy_w"] = jnp.pad(wp_fc, ((0, 0), (0, n_pad - n_out))).astype(MXU_DTYPE)
    out["fc_policy_b"] = jnp.concatenate(
        [p["fc_policy_b"].astype(jnp.float32),
         jnp.full((n_pad - n_out,), -1e30, jnp.float32)]).reshape(1, -1)
    out["fc_value1_w"] = p["fc_value1_w"].T.astype(MXU_DTYPE)
    out["fc_value1_b"] = p["fc_value1_b"].reshape(1, -1).astype(jnp.float32)
    out["fc_value2_w"] = p["fc_value2_w"].T.astype(MXU_DTYPE)
    out["fc_value2_b"] = p["fc_value2_b"].reshape(1, -1).astype(jnp.float32)
    return out


# ---------------------------------------------------------------------------
# Forward pass (2 pallas_calls total + tiny layout glue)
# ---------------------------------------------------------------------------

def forward(prepared, x_nchw, *, n_policy):
    B, cin, H, W = x_nchw.shape
    HW = H * W
    C = prepared["w_stack"].shape[-1]
    Wp = ((W + 2 + 7) // 8) * 8                      # sublane-aligned padded width

    # One-time input prep: NCHW -> NHWC, zero halo, channel pad 14 -> C, bf16.
    x = jnp.transpose(x_nchw, (0, 2, 3, 1)).astype(jnp.float32)
    x = jnp.pad(x, ((0, 0), (1, 1), (1, Wp - W - 1), (0, C - cin)))
    x = x.astype(MXU_DTYPE)

    hb = tower_forward(x, prepared["w_stack"], prepared["g_stack"],
                       prepared["be_stack"], prepared["head_conv_w"],
                       prepared["head_bn_g"], prepared["head_bn_b"],
                       B=B, H=H, W=W)                 # (B*HW, 8) f32

    # Tiny layout glue (<4 KB): flatten matching the pre-permuted FC weights.
    pol_flat = hb[:, 0:2].reshape(B, 2 * HW)
    val_flat = hb[:, 2:3].reshape(B, HW)
    policy_pad, value = heads_fc(pol_flat, val_flat, prepared)
    return policy_pad[:, :n_policy], value


# ---------------------------------------------------------------------------
# Deterministic synthetic parameter init (torch layouts / shapes)
# ---------------------------------------------------------------------------

def init_params(key, filters, num_res, board_size=8, in_channels=14):
    keys = iter(jax.random.split(key, 128))

    def nrm(shape, fan_in):
        return (jax.random.normal(next(keys), shape, dtype=jnp.float32)
                / jnp.sqrt(float(fan_in)))

    def bias(shape):
        return 0.1 * jax.random.normal(next(keys), shape, dtype=jnp.float32)

    def bn_pair(c):
        g = 1.0 + 0.1 * jax.random.normal(next(keys), (c,), dtype=jnp.float32)
        b = 0.1 * jax.random.normal(next(keys), (c,), dtype=jnp.float32)
        return g, b

    p = {}
    p["conv_init_w"] = nrm((filters, in_channels, 3, 3), in_channels * 9)
    p["conv_init_b"] = bias((filters,))
    p["bn_init_g"], p["bn_init_b"] = bn_pair(filters)

    p["res"] = []
    for _ in range(num_res):
        blk = {}
        blk["w1"] = nrm((filters, filters, 3, 3), filters * 9)
        blk["b1"] = bias((filters,))
        blk["g1"], blk["be1"] = bn_pair(filters)
        blk["w2"] = nrm((filters, filters, 3, 3), filters * 9)
        blk["b2"] = bias((filters,))
        blk["g2"], blk["be2"] = bn_pair(filters)
        p["res"].append(blk)

    hw = board_size * board_size
    p["conv_policy_w"] = nrm((2, filters, 1, 1), filters)
    p["conv_policy_b"] = bias((2,))
    p["bn_policy_g"], p["bn_policy_b"] = bn_pair(2)
    p["fc_policy_w"] = nrm((hw * 73, 2 * hw), 2 * hw)
    p["fc_policy_b"] = bias((hw * 73,))

    p["conv_value_w"] = nrm((1, filters, 1, 1), filters)
    p["conv_value_b"] = bias((1,))
    p["bn_value_g"], p["bn_value_b"] = bn_pair(1)
    p["fc_value1_w"] = nrm((256, hw), hw)
    p["fc_value1_b"] = bias((256,))
    p["fc_value2_w"] = nrm((1, 256), 256)
    p["fc_value2_b"] = bias((1,))
    return p


# ---------------------------------------------------------------------------
# Pure-JAX reference (mirrors the PyTorch forward, incl. conv biases)
# ---------------------------------------------------------------------------

def ref_forward(params, x, num_res):
    def conv(x, w, b):
        k = w.shape[2]
        pad = (k - 1) // 2
        y = jax.lax.conv_general_dilated(
            x, w, window_strides=(1, 1), padding=[(pad, pad), (pad, pad)],
            dimension_numbers=("NCHW", "OIHW", "NCHW"))
        return y + b.reshape(1, -1, 1, 1)

    def bn(x, g, be, eps=1e-5):
        m = jnp.mean(x, axis=(0, 2, 3), keepdims=True)
        v = jnp.mean(jnp.square(x - m), axis=(0, 2, 3), keepdims=True)
        return ((x - m) / jnp.sqrt(v + eps) * g.reshape(1, -1, 1, 1)
                + be.reshape(1, -1, 1, 1))

    h = jax.nn.relu(bn(conv(x, params["conv_init_w"], params["conv_init_b"]),
                       params["bn_init_g"], params["bn_init_b"]))
    for i in range(num_res):
        blk = params["res"][i]
        r = h
        t = jax.nn.relu(bn(conv(h, blk["w1"], blk["b1"]), blk["g1"], blk["be1"]))
        t = bn(conv(t, blk["w2"], blk["b2"]), blk["g2"], blk["be2"])
        h = jax.nn.relu(r + t)

    ph = jax.nn.relu(bn(conv(h, params["conv_policy_w"], params["conv_policy_b"]),
                        params["bn_policy_g"], params["bn_policy_b"]))
    pf = ph.reshape(ph.shape[0], -1)
    logits = pf @ params["fc_policy_w"].T + params["fc_policy_b"]
    policy = jax.nn.log_softmax(logits, axis=1)

    vh = jax.nn.relu(bn(conv(h, params["conv_value_w"], params["conv_value_b"]),
                        params["bn_value_g"], params["bn_value_b"]))
    vf = vh.reshape(vh.shape[0], -1)
    v1 = jax.nn.relu(vf @ params["fc_value1_w"].T + params["fc_value1_b"])
    value = jnp.tanh(v1 @ params["fc_value2_w"].T + params["fc_value2_b"])
    return policy, value


# ---------------------------------------------------------------------------

if __name__ == "__main__":
    BOARD, FILTERS, NUM_RES, BATCH = 8, 128, 2, 2   # small but lane-dense (C=128)

    key = jax.random.PRNGKey(0)
    kp, kx = jax.random.split(key)
    params = init_params(kp, FILTERS, NUM_RES, board_size=BOARD)
    prepared = prepare_params(params)
    x = jax.random.normal(kx, (BATCH, 14, BOARD, BOARD), dtype=jnp.float32)

    n_policy = BOARD * BOARD * 73
    fwd = jax.jit(functools.partial(forward, n_policy=n_policy))
    policy, value = fwd(prepared, x)
    jax.block_until_ready((policy, value))

    assert policy.shape == (BATCH, n_policy)
    assert value.shape == (BATCH, 1)

    ref_policy, ref_value = ref_forward(params, x, NUM_RES)
    # bf16 MXU operands (f32 accumulation) drift ~1e-2 vs the pure-f32 reference.
    atol = 5e-2 if MXU_DTYPE == jnp.bfloat16 else 3e-3
    perr = float(jnp.max(jnp.abs(policy - ref_policy)))
    verr = float(jnp.max(jnp.abs(value - ref_value)))
    assert perr < atol, f"policy max err {perr}"
    assert verr < atol, f"value max err {verr}"

    print("KERNEL_OK")
</pallas_src>

<mosaic_0001>
module attributes {stable_mosaic.version = 11 : i64} {
  func.func @_heads_fc_kernel(%arg0: memref<2x128xf32, #tpu.memory_space<vmem>>, %arg1: memref<2x64xf32, #tpu.memory_space<vmem>>, %arg2: memref<128x4736xbf16, #tpu.memory_space<vmem>>, %arg3: memref<1x4736xf32, #tpu.memory_space<vmem>>, %arg4: memref<64x256xbf16, #tpu.memory_space<vmem>>, %arg5: memref<1x256xf32, #tpu.memory_space<vmem>>, %arg6: memref<256x1xbf16, #tpu.memory_space<vmem>>, %arg7: memref<1x1xf32, #tpu.memory_space<vmem>>, %arg8: memref<2x4736xf32, #tpu.memory_space<vmem>>, %arg9: memref<2x1xf32, #tpu.memory_space<vmem>>) attributes {dimension_semantics = [], scalar_prefetch = 0 : i64, scratch_operands = 0 : i64, tpu.core_type = #tpu.core_type<tc>} {
    %c0 = arith.constant 0 : index
    %c0_0 = arith.constant 0 : index
    %0 = vector.load %arg0[%c0, %c0_0] : memref<2x128xf32, #tpu.memory_space<vmem>>, vector<2x128xf32>
    %1 = arith.truncf %0 : vector<2x128xf32> to vector<2x128xbf16>
    %c0_1 = arith.constant 0 : index
    %c0_2 = arith.constant 0 : index
    %2 = vector.load %arg2[%c0_1, %c0_2] : memref<128x4736xbf16, #tpu.memory_space<vmem>>, vector<128x4736xbf16>
    %cst = arith.constant dense<0.000000e+00> : vector<2x4736xf32>
    %3 = tpu.matmul %1, %2, %cst {dimension_numbers = #tpu.dot_dimension_numbers<[1], [0], [0], [1], [0, 0, 1, 1], [], []>} : vector<2x128xbf16>, vector<128x4736xbf16>, vector<2x4736xf32> -> vector<2x4736xf32>
    %c0_3 = arith.constant 0 : index
    %c0_4 = arith.constant 0 : index
    %4 = vector.load %arg3[%c0_3, %c0_4] : memref<1x4736xf32, #tpu.memory_space<vmem>>, vector<1x4736xf32>
    %5 = vector.broadcast %4 : vector<1x4736xf32> to vector<2x4736xf32>
    %6 = arith.addf %3, %5 : vector<2x4736xf32>
    %cst_5 = arith.constant dense<0xFF800000> : vector<2xf32>
    %7 = vector.multi_reduction <maximumf>, %6, %cst_5 [1] : vector<2x4736xf32> to vector<2xf32>
    %8 = vector.shape_cast %7 : vector<2xf32> to vector<2x1xf32>
    %9 = vector.broadcast %8 : vector<2x1xf32> to vector<2x4736xf32>
    %10 = arith.subf %6, %9 : vector<2x4736xf32>
    %11 = math.exp %10 : vector<2x4736xf32>
    %cst_6 = arith.constant dense<0.000000e+00> : vector<2xf32>
    %12 = vector.multi_reduction <add>, %11, %cst_6 [1] : vector<2x4736xf32> to vector<2xf32>
    %13 = vector.shape_cast %12 : vector<2xf32> to vector<2x1xf32>
    %14 = math.log %13 : vector<2x1xf32>
    %15 = vector.broadcast %14 : vector<2x1xf32> to vector<2x4736xf32>
    %16 = arith.subf %10, %15 : vector<2x4736xf32>
    %c0_7 = arith.constant 0 : index
    %c0_8 = arith.constant 0 : index
    %17 = vector.load %arg8[%c0_7, %c0_8] : memref<2x4736xf32, #tpu.memory_space<vmem>>, vector<2x4736xf32>
    tpu.vector_store %arg8[%c0_7, %c0_8], %16 {strides = array<i32>} : memref<2x4736xf32, #tpu.memory_space<vmem>>, vector<2x4736xf32>,
    %c0_9 = arith.constant 0 : index
    %c0_10 = arith.constant 0 : index
    %18 = vector.load %arg1[%c0_9, %c0_10] : memref<2x64xf32, #tpu.memory_space<vmem>>, vector<2x64xf32>
    %19 = arith.truncf %18 : vector<2x64xf32> to vector<2x64xbf16>
    %c0_11 = arith.constant 0 : index
    %c0_12 = arith.constant 0 : index
    %20 = vector.load %arg4[%c0_11, %c0_12] : memref<64x256xbf16, #tpu.memory_space<vmem>>, vector<64x256xbf16>
    %cst_13 = arith.constant dense<0.000000e+00> : vector<2x256xf32>
    %21 = tpu.matmul %19, %20, %cst_13 {dimension_numbers = #tpu.dot_dimension_numbers<[1], [0], [0], [1], [0, 0, 1, 1], [], []>} : vector<2x64xbf16>, vector<64x256xbf16>, vector<2x256xf32> -> vector<2x256xf32>
    %c0_14 = arith.constant 0 : index
    %c0_15 = arith.constant 0 : index
    %22 = vector.load %arg5[%c0_14, %c0_15] : memref<1x256xf32, #tpu.memory_space<vmem>>, vector<1x256xf32>
    %23 = vector.broadcast %22 : vector<1x256xf32> to vector<2x256xf32>
    %24 = arith.addf %21, %23 : vector<2x256xf32>
    %cst_16 = arith.constant 0.000000e+00 : f32
    %25 = vector.broadcast %cst_16 : f32 to vector<2x256xf32>
    %26 = arith.maximumf %24, %25 : vector<2x256xf32>
    %27 = arith.truncf %26 : vector<2x256xf32> to vector<2x256xbf16>
    %c0_17 = arith.constant 0 : index
    %c0_18 = arith.constant 0 : index
    %28 = vector.load %arg6[%c0_17, %c0_18] : memref<256x1xbf16, #tpu.memory_space<vmem>>, vector<256x1xbf16>
    %cst_19 = arith.constant dense<0.000000e+00> : vector<2x1xf32>
    %29 = tpu.matmul %27, %28, %cst_19 {dimension_numbers = #tpu.dot_dimension_numbers<[1], [0], [0], [1], [0, 0, 1, 1], [], []>} : vector<2x256xbf16>, vector<256x1xbf16>, vector<2x1xf32> -> vector<2x1xf32>
    %c0_20 = arith.constant 0 : index
    %c0_21 = arith.constant 0 : index
    %30 = vector.load %arg7[%c0_20, %c0_21] : memref<1x1xf32, #tpu.memory_space<vmem>>, vector<1x1xf32>
    %31 = vector.broadcast %30 : vector<1x1xf32> to vector<2x1xf32>
    %32 = arith.addf %29, %31 : vector<2x1xf32>
    %33 = math.tanh %32 : vector<2x1xf32>
    %c0_22 = arith.constant 0 : index
    %c0_23 = arith.constant 0 : index
    %34 = vector.load %arg9[%c0_22, %c0_23] : memref<2x1xf32, #tpu.memory_space<vmem>>, vector<2x1xf32>
    tpu.vector_store %arg9[%c0_22, %c0_23], %33 {strides = array<i32>} : memref<2x1xf32, #tpu.memory_space<vmem>>, vector<2x1xf32>,
    return
  }
}

module attributes {stable_mosaic.version = 11 : i64} {
  func.func @_tower_kernel(%arg0: i32, %arg1: memref<2x10x16x128xbf16, #tpu.memory_space<vmem>>, %arg2: memref<1x9x128x128xbf16, #tpu.memory_space<vmem>>, %arg3: memref<1x1x128xf32, #tpu.memory_space<vmem>>, %arg4: memref<1x1x128xf32, #tpu.memory_space<vmem>>, %arg5: memref<128x8xbf16, #tpu.memory_space<vmem>>, %arg6: memref<1x8xf32, #tpu.memory_space<vmem>>, %arg7: memref<1x8xf32, #tpu.memory_space<vmem>>, %arg8: memref<128x8xf32, #tpu.memory_space<vmem>>, %arg9: memref<2x10x16x128xbf16, #tpu.memory_space<vmem>>, %arg10: memref<128x128xf32, #tpu.memory_space<vmem>>) attributes {dimension_semantics = [#tpu.dimension_semantics<arbitrary>], iteration_bounds = array<i64: 5>, scalar_prefetch = 0 : i64, scratch_operands = 2 : i64, tpu.core_type = #tpu.core_type<tc>, window_params = [{pipeline_mode = #tpu.pipeline_mode<synchronous>, transform_indices = @transform_0, window_bounds = array<i64: 2, 10, 16, 128>}, {transform_indices = @transform_1, window_bounds = array<i64: 1, 9, 128, 128>}, {transform_indices = @transform_2, window_bounds = array<i64: 1, 1, 128>}, {transform_indices = @transform_3, window_bounds = array<i64: 1, 1, 128>}, {pipeline_mode = #tpu.pipeline_mode<synchronous>, transform_indices = @transform_4, window_bounds = array<i64: 128, 8>}, {pipeline_mode = #tpu.pipeline_mode<synchronous>, transform_indices = @transform_5, window_bounds = array<i64: 1, 8>}, {pipeline_mode = #tpu.pipeline_mode<synchronous>, transform_indices = @transform_6, window_bounds = array<i64: 1, 8>}, {pipeline_mode = #tpu.pipeline_mode<synchronous>, transform_indices = @transform_7, window_bounds = array<i64: 128, 8>}]} {
    %c0_i32 = arith.constant 0 : i32
    %0 = arith.cmpi eq, %arg0, %c0_i32 : i32
    %1 = arith.extui %0 : i1 to i32
    %c0_i32_0 = arith.constant 0 : i32
    %2 = arith.cmpi ne, %1, %c0_i32_0 : i32
    scf.if %2 {
      %c0_106 = arith.constant 0 : index
      %c0_107 = arith.constant 0 : index
      %c0_108 = arith.constant 0 : index
      %c0_109 = arith.constant 0 : index
      %120 = vector.load %arg1[%c0_106, %c0_107, %c0_108, %c0_109] : memref<2x10x16x128xbf16, #tpu.memory_space<vmem>>, vector<2x10x16x128xbf16>
      %c0_110 = arith.constant 0 : index
      %c0_111 = arith.constant 0 : index
      %c0_112 = arith.constant 0 : index
      %c0_113 = arith.constant 0 : index
      %121 = vector.load %arg9[%c0_110, %c0_111, %c0_112, %c0_113] : memref<2x10x16x128xbf16, #tpu.memory_space<vmem>>, vector<2x10x16x128xbf16>
      tpu.vector_store %arg9[%c0_110, %c0_111, %c0_112, %c0_113], %120 {strides = array<i32>} : memref<2x10x16x128xbf16, #tpu.memory_space<vmem>>, vector<2x10x16x128xbf16>,
      %cst_114 = arith.constant 0.000000e+00 : f32
      %122 = vector.broadcast %cst_114 : f32 to vector<128x128xf32>
      %c0_115 = arith.constant 0 : index
      %c0_116 = arith.constant 0 : index
      %123 = vector.load %arg10[%c0_115, %c0_116] : memref<128x128xf32, #tpu.memory_space<vmem>>, vector<128x128xf32>
      tpu.vector_store %arg10[%c0_115, %c0_116], %122 {strides = array<i32>} : memref<128x128xf32, #tpu.memory_space<vmem>>, vector<128x128xf32>,
    } else {
    }
    %c0 = arith.constant 0 : index
    %c0_1 = arith.constant 0 : index
    %c0_2 = arith.constant 0 : index
    %c0_3 = arith.constant 0 : index
    %3 = vector.load %arg9[%c0, %c0_1, %c0_2, %c0_3] : memref<2x10x16x128xbf16, #tpu.memory_space<vmem>>, vector<2x8x8x128xbf16>
    %4 = vector.shape_cast %3 : vector<2x8x8x128xbf16> to vector<128x128xbf16>
    %c0_4 = arith.constant 0 : index
    %c0_5 = arith.constant 0 : index
    %c0_6 = arith.constant 0 : index
    %c0_7 = arith.constant 0 : index
    %5 = vector.load %arg2[%c0_4, %c0_5, %c0_6, %c0_7] : memref<1x9x128x128xbf16, #tpu.memory_space<vmem>>, vector<1x1x128x128xbf16>
    %6 = vector.shape_cast %5 : vector<1x1x128x128xbf16> to vector<128x128xbf16>
    %cst = arith.constant dense<0.000000e+00> : vector<128x128xf32>
    %7 = tpu.matmul %4, %6, %cst {dimension_numbers = #tpu.dot_dimension_numbers<[1], [0], [0], [1], [0, 0, 1, 1], [], []>} : vector<128x128xbf16>, vector<128x128xbf16>, vector<128x128xf32> -> vector<128x128xf32>
    %c0_8 = arith.constant 0 : index
    %c0_9 = arith.constant 0 : index
    %c1 = arith.constant 1 : index
    %c0_10 = arith.constant 0 : index
    %8 = vector.load %arg9[%c0_8, %c0_9, %c1, %c0_10] : memref<2x10x16x128xbf16, #tpu.memory_space<vmem>>, vector<2x8x8x128xbf16>
    %9 = vector.shape_cast %8 : vector<2x8x8x128xbf16> to vector<128x128xbf16>
    %c0_11 = arith.constant 0 : index
    %c1_12 = arith.constant 1 : index
    %c0_13 = arith.constant 0 : index
    %c0_14 = arith.constant 0 : index
    %10 = vector.load %arg2[%c0_11, %c1_12, %c0_13, %c0_14] : memref<1x9x128x128xbf16, #tpu.memory_space<vmem>>, vector<1x1x128x128xbf16>
    %11 = vector.shape_cast %10 : vector<1x1x128x128xbf16> to vector<128x128xbf16>
    %cst_15 = arith.constant dense<0.000000e+00> : vector<128x128xf32>
    %12 = tpu.matmul %9, %11, %cst_15 {dimension_numbers = #tpu.dot_dimension_numbers<[1], [0], [0], [1], [0, 0, 1, 1], [], []>} : vector<128x128xbf16>, vector<128x128xbf16>, vector<128x128xf32> -> vector<128x128xf32>
    %13 = arith.addf %7, %12 : vector<128x128xf32>
    %c0_16 = arith.constant 0 : index
    %c0_17 = arith.constant 0 : index
    %c2 = arith.constant 2 : index
    %c0_18 = arith.constant 0 : index
    %14 = vector.load %arg9[%c0_16, %c0_17, %c2, %c0_18] : memref<2x10x16x128xbf16, #tpu.memory_space<vmem>>, vector<2x8x8x128xbf16>
    %15 = vector.shape_cast %14 : vector<2x8x8x128xbf16> to vector<128x128xbf16>
    %c0_19 = arith.constant 0 : index
    %c2_20 = arith.constant 2 : index
    %c0_21 = arith.constant 0 : index
    %c0_22 = arith.constant 0 : index
    %16 = vector.load %arg2[%c0_19, %c2_20, %c0_21, %c0_22] : memref<1x9x128x128xbf16, #tpu.memory_space<vmem>>, vector<1x1x128x128xbf16>
    %17 = vector.shape_cast %16 : vector<1x1x128x128xbf16> to vector<128x128xbf16>
    %cst_23 = arith.constant dense<0.000000e+00> : vector<128x128xf32>
    %18 = tpu.matmul %15, %17, %cst_23 {dimension_numbers = #tpu.dot_dimension_numbers<[1], [0], [0], [1], [0, 0, 1, 1], [], []>} : vector<128x128xbf16>, vector<128x128xbf16>, vector<128x128xf32> -> vector<128x128xf32>
    %19 = arith.addf %13, %18 : vector<128x128xf32>
    %c0_24 = arith.constant 0 : index
    %c1_25 = arith.constant 1 : index
    %c0_26 = arith.constant 0 : index
    %c0_27 = arith.constant 0 : index
    %20 = vector.load %arg9[%c0_24, %c1_25, %c0_26, %c0_27] : memref<2x10x16x128xbf16, #tpu.memory_space<vmem>>, vector<2x8x8x128xbf16>
    %21 = vector.shape_cast %20 : vector<2x8x8x128xbf16> to vector<128x128xbf16>
    %c0_28 = arith.constant 0 : index
    %c3 = arith.constant 3 : index
    %c0_29 = arith.constant 0 : index
    %c0_30 = arith.constant 0 : index
    %22 = vector.load %arg2[%c0_28, %c3, %c0_29, %c0_30] : memref<1x9x128x128xbf16, #tpu.memory_space<vmem>>, vector<1x1x128x128xbf16>
    %23 = vector.shape_cast %22 : vector<1x1x128x128xbf16> to vector<128x128xbf16>
    %cst_31 = arith.constant dense<0.000000e+00> : vector<128x128xf32>
    %24 = tpu.matmul %21, %23, %cst_31 {dimension_numbers = #tpu.dot_dimension_numbers<[1], [0], [0], [1], [0, 0, 1, 1], [], []>} : vector<128x128xbf16>, vector<128x128xbf16>, vector<128x128xf32> -> vector<128x128xf32>
    %25 = arith.addf %19, %24 : vector<128x128xf32>
    %c0_32 = arith.constant 0 : index
    %c1_33 = arith.constant 1 : index
    %c1_34 = arith.constant 1 : index
    %c0_35 = arith.constant 0 : index
    %26 = vector.load %arg9[%c0_32, %c1_33, %c1_34, %c0_35] : memref<2x10x16x128xbf16, #tpu.memory_space<vmem>>, vector<2x8x8x128xbf16>
    %27 = vector.shape_cast %26 : vector<2x8x8x128xbf16> to vector<128x128xbf16>
    %c0_36 = arith.constant 0 : index
    %c4 = arith.constant 4 : index
    %c0_37 = arith.constant 0 : index
    %c0_38 = arith.constant 0 : index
    %28 = vector.load %arg2[%c0_36, %c4, %c0_37, %c0_38] : memref<1x9x128x128xbf16, #tpu.memory_space<vmem>>, vector<1x1x128x128xbf16>
    %29 = vector.shape_cast %28 : vector<1x1x128x128xbf16> to vector<128x128xbf16>
    %cst_39 = arith.constant dense<0.000000e+00> : vector<128x128xf32>
    %30 = tpu.matmul %27, %29, %cst_39 {dimension_numbers = #tpu.dot_dimension_numbers<[1], [0], [0], [1], [0, 0, 1, 1], [], []>} : vector<128x128xbf16>, vector<128x128xbf16>, vector<128x128xf32> -> vector<128x128xf32>
    %31 = arith.addf %25, %30 : vector<128x128xf32>
    %c0_40 = arith.constant 0 : index
    %c1_41 = arith.constant 1 : index
    %c2_42 = arith.constant 2 : index
    %c0_43 = arith.constant 0 : index
    %32 = vector.load %arg9[%c0_40, %c1_41, %c2_42, %c0_43] : memref<2x10x16x128xbf16, #tpu.memory_space<vmem>>, vector<2x8x8x128xbf16>
    %33 = vector.shape_cast %32 : vector<2x8x8x128xbf16> to vector<128x128xbf16>
    %c0_44 = arith.constant 0 : index
    %c5 = arith.constant 5 : index
    %c0_45 = arith.constant 0 : index
    %c0_46 = arith.constant 0 : index
    %34 = vector.load %arg2[%c0_44, %c5, %c0_45, %c0_46] : memref<1x9x128x128xbf16, #tpu.memory_space<vmem>>, vector<1x1x128x128xbf16>
    %35 = vector.shape_cast %34 : vector<1x1x128x128xbf16> to vector<128x128xbf16>
    %cst_47 = arith.constant dense<0.000000e+00> : vector<128x128xf32>
    %36 = tpu.matmul %33, %35, %cst_47 {dimension_numbers = #tpu.dot_dimension_numbers<[1], [0], [0], [1], [0, 0, 1, 1], [], []>} : vector<128x128xbf16>, vector<128x128xbf16>, vector<128x128xf32> -> vector<128x128xf32>
    %37 = arith.addf %31, %36 : vector<128x128xf32>
    %c0_48 = arith.constant 0 : index
    %c2_49 = arith.constant 2 : index
    %c0_50 = arith.constant 0 : index
    %c0_51 = arith.constant 0 : index
    %38 = vector.load %arg9[%c0_48, %c2_49, %c0_50, %c0_51] : memref<2x10x16x128xbf16, #tpu.memory_space<vmem>>, vector<2x8x8x128xbf16>
    %39 = vector.shape_cast %38 : vector<2x8x8x128xbf16> to vector<128x128xbf16>
    %c0_52 = arith.constant 0 : index
    %c6 = arith.constant 6 : index
    %c0_53 = arith.constant 0 : index
    %c0_54 = arith.constant 0 : index
    %40 = vector.load %arg2[%c0_52, %c6, %c0_53, %c0_54] : memref<1x9x128x128xbf16, #tpu.memory_space<vmem>>, vector<1x1x128x128xbf16>
    %41 = vector.shape_cast %40 : vector<1x1x128x128xbf16> to vector<128x128xbf16>
    %cst_55 = arith.constant dense<0.000000e+00> : vector<128x128xf32>
    %42 = tpu.matmul %39, %41, %cst_55 {dimension_numbers = #tpu.dot_dimension_numbers<[1], [0], [0], [1], [0, 0, 1, 1], [], []>} : vector<128x128xbf16>, vector<128x128xbf16>, vector<128x128xf32> -> vector<128x128xf32>
    %43 = arith.addf %37, %42 : vector<128x128xf32>
    %c0_56 = arith.constant 0 : index
    %c2_57 = arith.constant 2 : index
    %c1_58 = arith.constant 1 : index
    %c0_59 = arith.constant 0 : index
    %44 = vector.load %arg9[%c0_56, %c2_57, %c1_58, %c0_59] : memref<2x10x16x128xbf16, #tpu.memory_space<vmem>>, vector<2x8x8x128xbf16>
    %45 = vector.shape_cast %44 : vector<2x8x8x128xbf16> to vector<128x128xbf16>
    %c0_60 = arith.constant 0 : index
    %c7 = arith.constant 7 : index
    %c0_61 = arith.constant 0 : index
    %c0_62 = arith.constant 0 : index
    %46 = vector.load %arg2[%c0_60, %c7, %c0_61, %c0_62] : memref<1x9x128x128xbf16, #tpu.memory_space<vmem>>, vector<1x1x128x128xbf16>
    %47 = vector.shape_cast %46 : vector<1x1x128x128xbf16> to vector<128x128xbf16>
    %cst_63 = arith.constant dense<0.000000e+00> : vector<128x128xf32>
    %48 = tpu.matmul %45, %47, %cst_63 {dimension_numbers = #tpu.dot_dimension_numbers<[1], [0], [0], [1], [0, 0, 1, 1], [], []>} : vector<128x128xbf16>, vector<128x128xbf16>, vector<128x128xf32> -> vector<128x128xf32>
    %49 = arith.addf %43, %48 : vector<128x128xf32>
    %c0_64 = arith.constant 0 : index
    %c2_65 = arith.constant 2 : index
    %c2_66 = arith.constant 2 : index
    %c0_67 = arith.constant 0 : index
    %50 = vector.load %arg9[%c0_64, %c2_65, %c2_66, %c0_67] : memref<2x10x16x128xbf16, #tpu.memory_space<vmem>>, vector<2x8x8x128xbf16>
    %51 = vector.shape_cast %50 : vector<2x8x8x128xbf16> to vector<128x128xbf16>
    %c0_68 = arith.constant 0 : index
    %c8 = arith.constant 8 : index
    %c0_69 = arith.constant 0 : index
    %c0_70 = arith.constant 0 : index
    %52 = vector.load %arg2[%c0_68, %c8, %c0_69, %c0_70] : memref<1x9x128x128xbf16, #tpu.memory_space<vmem>>, vector<1x1x128x128xbf16>
    %53 = vector.shape_cast %52 : vector<1x1x128x128xbf16> to vector<128x128xbf16>
    %cst_71 = arith.constant dense<0.000000e+00> : vector<128x128xf32>
    %54 = tpu.matmul %51, %53, %cst_71 {dimension_numbers = #tpu.dot_dimension_numbers<[1], [0], [0], [1], [0, 0, 1, 1], [], []>} : vector<128x128xbf16>, vector<128x128xbf16>, vector<128x128xf32> -> vector<128x128xf32>
    %55 = arith.addf %49, %54 : vector<128x128xf32>
    %cst_72 = arith.constant dense<0.000000e+00> : vector<128xf32>
    %56 = vector.multi_reduction <add>, %55, %cst_72 [0] : vector<128x128xf32> to vector<128xf32>
    %57 = vector.shape_cast %56 : vector<128xf32> to vector<1x128xf32>
    %58 = arith.mulf %55, %55 : vector<128x128xf32>
    %cst_73 = arith.constant dense<0.000000e+00> : vector<128xf32>
    %59 = vector.multi_reduction <add>, %58, %cst_73 [0] : vector<128x128xf32> to vector<128xf32>
    %60 = vector.shape_cast %59 : vector<128xf32> to vector<1x128xf32>
    %cst_74 = arith.constant 7.812500e-03 : f32
    %61 = vector.broadcast %cst_74 : f32 to vector<1x128xf32>
    %62 = arith.mulf %57, %61 : vector<1x128xf32>
    %cst_75 = arith.constant 7.812500e-03 : f32
    %63 = vector.broadcast %cst_75 : f32 to vector<1x128xf32>
    %64 = arith.mulf %60, %63 : vector<1x128xf32>
    %65 = arith.mulf %62, %62 : vector<1x128xf32>
    %66 = arith.subf %64, %65 : vector<1x128xf32>
    %67 = vector.broadcast %62 : vector<1x128xf32> to vector<128x128xf32>
    %68 = arith.subf %55, %67 : vector<128x128xf32>
    %cst_76 = arith.constant 9.99999974E-6 : f32
    %69 = vector.broadcast %cst_76 : f32 to vector<1x128xf32>
    %70 = arith.addf %66, %69 : vector<1x128xf32>
    %71 = math.rsqrt %70 : vector<1x128xf32>
    %72 = vector.broadcast %71 : vector<1x128xf32> to vector<128x128xf32>
    %73 = arith.mulf %68, %72 : vector<128x128xf32>
    %c0_77 = arith.constant 0 : index
    %c0_78 = arith.constant 0 : index
    %c0_79 = arith.constant 0 : index
    %74 = vector.load %arg3[%c0_77, %c0_78, %c0_79] : memref<1x1x128xf32, #tpu.memory_space<vmem>>, vector<1x1x128xf32>
    %75 = vector.shape_cast %74 : vector<1x1x128xf32> to vector<1x128xf32>
    %76 = vector.broadcast %75 : vector<1x128xf32> to vector<128x128xf32>
    %77 = arith.mulf %73, %76 : vector<128x128xf32>
    %c0_80 = arith.constant 0 : index
    %c0_81 = arith.constant 0 : index
    %c0_82 = arith.constant 0 : index
    %78 = vector.load %arg4[%c0_80, %c0_81, %c0_82] : memref<1x1x128xf32, #tpu.memory_space<vmem>>, vector<1x1x128xf32>
    %79 = vector.shape_cast %78 : vector<1x1x128xf32> to vector<1x128xf32>
    %80 = vector.broadcast %79 : vector<1x128xf32> to vector<128x128xf32>
    %81 = arith.addf %77, %80 : vector<128x128xf32>
    %c2_i32 = arith.constant 2 : i32
    %82 = arith.cmpi sge, %arg0, %c2_i32 : i32
    %c2_i32_83 = arith.constant 2 : i32
    %c0_i32_84 = arith.constant 0 : i32
    %83 = arith.cmpi eq, %c2_i32_83, %c0_i32_84 : i32
    %c1_i32 = arith.constant 1 : i32
    %84 = arith.select %83, %c1_i32, %c2_i32_83 : i32
    %85 = arith.remsi %arg0, %84 : i32
    %c0_i32_85 = arith.constant 0 : i32
    %86 = arith.cmpi ne, %85, %c0_i32_85 : i32
    %c0_i32_86 = arith.constant 0 : i32
    %87 = arith.cmpi slt, %85, %c0_i32_86 : i32
    %c0_i32_87 = arith.constant 0 : i32
    %88 = arith.cmpi slt, %84, %c0_i32_87 : i32
    %89 = arith.xori %87, %88 : i1
    %90 = arith.andi %89, %86 : i1
    %91 = arith.addi %85, %84 : i32
    %92 = arith.select %90, %91, %85 : i32
    %c0_i32_88 = arith.constant 0 : i32
    %93 = arith.cmpi eq, %92, %c0_i32_88 : i32
    %94 = arith.andi %82, %93 : i1
    %c0_89 = arith.constant 0 : index
    %c0_90 = arith.constant 0 : index
    %95 = vector.load %arg10[%c0_89, %c0_90] : memref<128x128xf32, #tpu.memory_space<vmem>>, vector<128x128xf32>
    %cst_91 = arith.constant 0.000000e+00 : f32
    %96 = vector.broadcast %cst_91 : f32 to vector<128x128xf32>
    %97 = arith.select %94, %95, %96 : vector<128x128xf32>
    %98 = arith.addf %81, %97 : vector<128x128xf32>
    %cst_92 = arith.constant 0.000000e+00 : f32
    %99 = vector.broadcast %cst_92 : f32 to vector<128x128xf32>
    %100 = arith.maximumf %98, %99 : vector<128x128xf32>
    %c2_i32_93 = arith.constant 2 : i32
    %c0_i32_94 = arith.constant 0 : i32
    %101 = arith.cmpi eq, %c2_i32_93, %c0_i32_94 : i32
    %c1_i32_95 = arith.constant 1 : i32
    %102 = arith.select %101, %c1_i32_95, %c2_i32_93 : i32
    %103 = arith.remsi %arg0, %102 : i32
    %c0_i32_96 = arith.constant 0 : i32
    %104 = arith.cmpi ne, %103, %c0_i32_96 : i32
    %c0_i32_97 = arith.constant 0 : i32
    %105 = arith.cmpi slt, %103, %c0_i32_97 : i32
    %c0_i32_98 = arith.constant 0 : i32
    %106 = arith.cmpi slt, %102, %c0_i32_98 : i32
    %107 = arith.xori %105, %106 : i1
    %108 = arith.andi %107, %104 : i1
    %109 = arith.addi %103, %102 : i32
    %110 = arith.select %108, %109, %103 : i32
    %c0_i32_99 = arith.constant 0 : i32
    %111 = arith.cmpi eq, %110, %c0_i32_99 : i32
    %112 = arith.extui %111 : i1 to i32
    %c0_i32_100 = arith.constant 0 : i32
    %113 = arith.cmpi ne, %112, %c0_i32_100 : i32
    scf.if %113 {
      %c0_106 = arith.constant 0 : index
      %c0_107 = arith.constant 0 : index
      %120 = vector.load %arg10[%c0_106, %c0_107] : memref<128x128xf32, #tpu.memory_space<vmem>>, vector<128x128xf32>
      tpu.vector_store %arg10[%c0_106, %c0_107], %100 {strides = array<i32>} : memref<128x128xf32, #tpu.memory_space<vmem>>, vector<128x128xf32>,
    } else {
    }
    %114 = vector.shape_cast %100 : vector<128x128xf32> to vector<2x8x8x128xf32>
    %115 = arith.truncf %114 : vector<2x8x8x128xf32> to vector<2x8x8x128xbf16>
    %c0_101 = arith.constant 0 : index
    %c1_102 = arith.constant 1 : index
    %c1_103 = arith.constant 1 : index
    %c0_104 = arith.constant 0 : index
    %116 = vector.load %arg9[%c0_101, %c1_102, %c1_103, %c0_104] : memref<2x10x16x128xbf16, #tpu.memory_space<vmem>>, vector<2x8x8x128xbf16>
    tpu.vector_store %arg9[%c0_101, %c1_102, %c1_103, %c0_104], %115 {strides = array<i32>} : memref<2x10x16x128xbf16, #tpu.memory_space<vmem>>, vector<2x8x8x128xbf16>,
    %c4_i32 = arith.constant 4 : i32
    %117 = arith.cmpi eq, %arg0, %c4_i32 : i32
    %118 = arith.extui %117 : i1 to i32
    %c0_i32_105 = arith.constant 0 : i32
    %119 = arith.cmpi ne, %118, %c0_i32_105 : i32
    scf.if %119 {
      %120 = arith.truncf %100 : vector<128x128xf32> to vector<128x128xbf16>
      %c0_106 = arith.constant 0 : index
      %c0_107 = arith.constant 0 : index
      %121 = vector.load %arg5[%c0_106, %c0_107] : memref<128x8xbf16, #tpu.memory_space<vmem>>, vector<128x8xbf16>
      %cst_108 = arith.constant dense<0.000000e+00> : vector<128x8xf32>
      %122 = tpu.matmul %120, %121, %cst_108 {dimension_numbers = #tpu.dot_dimension_numbers<[1], [0], [0], [1], [0, 0, 1, 1], [], []>} : vector<128x128xbf16>, vector<128x8xbf16>, vector<128x8xf32> -> vector<128x8xf32>
      %cst_109 = arith.constant dense<0.000000e+00> : vector<8xf32>
      %123 = vector.multi_reduction <add>, %122, %cst_109 [0] : vector<128x8xf32> to vector<8xf32>
      %124 = vector.shape_cast %123 : vector<8xf32> to vector<1x8xf32>
      %125 = arith.mulf %122, %122 : vector<128x8xf32>
      %cst_110 = arith.constant dense<0.000000e+00> : vector<8xf32>
      %126 = vector.multi_reduction <add>, %125, %cst_110 [0] : vector<128x8xf32> to vector<8xf32>
      %127 = vector.shape_cast %126 : vector<8xf32> to vector<1x8xf32>
      %cst_111 = arith.constant 7.812500e-03 : f32
      %128 = vector.broadcast %cst_111 : f32 to vector<1x8xf32>
      %129 = arith.mulf %124, %128 : vector<1x8xf32>
      %cst_112 = arith.constant 7.812500e-03 : f32
      %130 = vector.broadcast %cst_112 : f32 to vector<1x8xf32>
      %131 = arith.mulf %127, %130 : vector<1x8xf32>
      %132 = arith.mulf %129, %129 : vector<1x8xf32>
      %133 = arith.subf %131, %132 : vector<1x8xf32>
      %134 = vector.broadcast %129 : vector<1x8xf32> to vector<128x8xf32>
      %135 = arith.subf %122, %134 : vector<128x8xf32>
      %cst_113 = arith.constant 9.99999974E-6 : f32
      %136 = vector.broadcast %cst_113 : f32 to vector<1x8xf32>
      %137 = arith.addf %133, %136 : vector<1x8xf32>
      %138 = math.rsqrt %137 : vector<1x8xf32>
      %139 = vector.broadcast %138 : vector<1x8xf32> to vector<128x8xf32>
      %140 = arith.mulf %135, %139 : vector<128x8xf32>
      %c0_114 = arith.constant 0 : index
      %c0_115 = arith.constant 0 : index
      %141 = vector.load %arg6[%c0_114, %c0_115] : memref<1x8xf32, #tpu.memory_space<vmem>>, vector<1x8xf32>
      %142 = vector.broadcast %141 : vector<1x8xf32> to vector<128x8xf32>
      %143 = arith.mulf %140, %142 : vector<128x8xf32>
      %c0_116 = arith.constant 0 : index
      %c0_117 = arith.constant 0 : index
      %144 = vector.load %arg7[%c0_116, %c0_117] : memref<1x8xf32, #tpu.memory_space<vmem>>, vector<1x8xf32>
      %145 = vector.broadcast %144 : vector<1x8xf32> to vector<128x8xf32>
      %146 = arith.addf %143, %145 : vector<128x8xf32>
      %cst_118 = arith.constant 0.000000e+00 : f32
      %147 = vector.broadcast %cst_118 : f32 to vector<128x8xf32>
      %148 = arith.maximumf %146, %147 : vector<128x8xf32>
      %c0_119 = arith.constant 0 : index
      %c0_120 = arith.constant 0 : index
      %149 = vector.load %arg8[%c0_119, %c0_120] : memref<128x8xf32, #tpu.memory_space<vmem>>, vector<128x8xf32>
      tpu.vector_store %arg8[%c0_119, %c0_120], %148 {strides = array<i32>} : memref<128x8xf32, #tpu.memory_space<vmem>>, vector<128x8xf32>,
    } else {
    }
    return
  }
  func.func @transform_0(%arg0: i32) -> (i32, i32, i32, i32) {
    %c0_i32 = arith.constant 0 : i32
    %c0_i32_0 = arith.constant 0 : i32
    %c0_i32_1 = arith.constant 0 : i32
    %c0_i32_2 = arith.constant 0 : i32
    %c0_i32_3 = arith.constant 0 : i32
    return %c0_i32, %c0_i32_0, %c0_i32_1, %c0_i32_2 : i32, i32, i32, i32
  }
  func.func @transform_1(%arg0: i32) -> (i32, i32, i32, i32) {
    %c0_i32 = arith.constant 0 : i32
    %c0_i32_0 = arith.constant 0 : i32
    %c0_i32_1 = arith.constant 0 : i32
    %c0_i32_2 = arith.constant 0 : i32
    return %arg0, %c0_i32, %c0_i32_0, %c0_i32_1 : i32, i32, i32, i32
  }
  func.func @transform_2(%arg0: i32) -> (i32, i32, i32) {
    %c0_i32 = arith.constant 0 : i32
    %c0_i32_0 = arith.constant 0 : i32
    %c0_i32_1 = arith.constant 0 : i32
    return %arg0, %c0_i32, %c0_i32_0 : i32, i32, i32
  }
  func.func @transform_3(%arg0: i32) -> (i32, i32, i32) {
    %c0_i32 = arith.constant 0 : i32
    %c0_i32_0 = arith.constant 0 : i32
    %c0_i32_1 = arith.constant 0 : i32
    return %arg0, %c0_i32, %c0_i32_0 : i32, i32, i32
  }
  func.func @transform_4(%arg0: i32) -> (i32, i32) {
    %c0_i32 = arith.constant 0 : i32
    %c0_i32_0 = arith.constant 0 : i32
    %c0_i32_1 = arith.constant 0 : i32
    return %c0_i32, %c0_i32_0 : i32, i32
  }
  func.func @transform_5(%arg0: i32) -> (i32, i32) {
    %c0_i32 = arith.constant 0 : i32
    %c0_i32_0 = arith.constant 0 : i32
    %c0_i32_1 = arith.constant 0 : i32
    return %c0_i32, %c0_i32_0 : i32, i32
  }
  func.func @transform_6(%arg0: i32) -> (i32, i32) {
    %c0_i32 = arith.constant 0 : i32
    %c0_i32_0 = arith.constant 0 : i32
    %c0_i32_1 = arith.constant 0 : i32
    return %c0_i32, %c0_i32_0 : i32, i32
  }
  func.func @transform_7(%arg0: i32) -> (i32, i32) {
    %c0_i32 = arith.constant 0 : i32
    %c0_i32_0 = arith.constant 0 : i32
    %c0_i32_1 = arith.constant 0 : i32
    return %c0_i32, %c0_i32_0 : i32, i32
  }
}

</mosaic_0001>

<llo_original>
// kernel: forward.3
$region0: #{forward.3}
  #allocation0 [shape = 'u32[]', space=smem, size = 0x4, offset = 0x4, fixed_abs, tag = 'smem constant byte address 0x4 - core index']
  #allocation1 [shape = 'u32[72,128]{1,0:T(1,128)}', space=vmem, size = 0x9000, scoped, tag = 'internal scratch']
  #allocation2 [shape = 'f32[1,1]{1,0:T(1,128)S(1)}', space=vmem, size = 0x200, scoped, tag = 'scoped memory for forward.3']
  %s0 = inlined_call_operand.vmem [shape: f32[2,128], index: 0, kind: input, shape index: {}]
  %s1 = inlined_call_operand.vmem [shape: f32[2,64], index: 1, kind: input, shape index: {}]
  %s2 = inlined_call_operand.vmem [shape: bf16[128,4736], index: 2, kind: input, shape index: {}]
  %s3 = inlined_call_operand.vmem [shape: f32[1,4736], index: 3, kind: input, shape index: {}]
  %s4 = inlined_call_operand.vmem [shape: bf16[64,256], index: 4, kind: input, shape index: {}]
  %s5 = inlined_call_operand.vmem [shape: f32[1,256], index: 5, kind: input, shape index: {}]
  %s6 = inlined_call_operand.vmem [shape: bf16[256,1], index: 6, kind: input, shape index: {}]
  %s7 = inlined_call_operand.<no memory space> [shape: f32[1,1], index: 7, kind: input, shape index: {}]
  %s8 = inlined_call_operand.hbm [shape: f32[2,4736], index: 8, kind: output, shape index: {0}]
  %s9 = inlined_call_operand.vmem [shape: f32[2,1], index: 9, kind: output, shape index: {1}]
  %10 = xla_tuple %s8, %s9
  %s11 = sld [smem:[#allocation0]]
  $region50: #{forward.3} parent=0
    _
  %s13 = ssub.s32 1, %s11
  %s14 = scalar_select 0, %s13, %s11
  %v15 = vstv %s7
  %16 = vst [vmem:[#allocation2] sm:$0x1] %v15
  $region1: #{forward.3} parent=0
    #allocation3 [shape = 'u8[37888]{0}', space=vmem, size = 0x9400, scoped, tag = 'output window, operand 0, single buffered']
    #allocation4 [shape = 's32[1]{0}', space=sflag, size = 0x4, scoped, tag = 'scoped memory for forward.3']
    %17 = vsyncpa [#allocation4], 0
    // Predicated region
    $region2: #{forward.3} parent=1 // pred_check
      _
    $region3: #{forward.3} parent=1 // pred_check_branch
      %19 = sbr.rel (0) target = $region5
    $region4: #{forward.3} parent=1 // pred_region
      _
    $region5: #{forward.3} parent=1 // pred_fallthru
      _
    // Predicated region
    $region6: #{forward.3} parent=1 // pred_check
      _
    $region7: #{forward.3} parent=1 // pred_check_branch
      %21 = sbr.rel (0) target = $region9
    $region8: #{forward.3} parent=1 // pred_region
      _
    $region9: #{forward.3} parent=1 // pred_fallthru
      _
    // Predicated region
    $region10: #{forward.3} parent=1 // pred_check
      _
    $region11: #{forward.3} parent=1 // pred_check_branch
      %23 = sbr.rel (0) target = $region13
    $region12: #{forward.3} parent=1 // pred_region
      _
    $region13: #{forward.3} parent=1 // pred_fallthru
      _
    // Predicated region
    $region14: #{forward.3} parent=1 // pred_check
      _
    $region15: #{forward.3} parent=1 // pred_check_branch
      %25 = sbr.rel (0) target = $region17
    $region16: #{forward.3} parent=1 // pred_region
      _
    $region17: #{forward.3} parent=1 // pred_fallthru
      _
    // Predicated region
    $region18: #{forward.3} parent=1 // pred_check
      _
    $region19: #{forward.3} parent=1 // pred_check_branch
      %27 = sbr.rel (0) target = $region21
    $region20: #{forward.3} parent=1 // pred_region
      _
    $region21: #{forward.3} parent=1 // pred_fallthru
      _
    // Predicated region
    $region22: #{forward.3} parent=1 // pred_check
      _
    $region23: #{forward.3} parent=1 // pred_check_branch
      %29 = sbr.rel (0) target = $region25
    $region24: #{forward.3} parent=1 // pred_region
      _
    $region25: #{forward.3} parent=1 // pred_fallthru
      _
    // Predicated region
    $region26: #{forward.3} parent=1 // pred_check
      _
    $region27: #{forward.3} parent=1 // pred_check_branch
      %31 = sbr.rel (0) target = $region29
    $region28: #{forward.3} parent=1 // pred_region
      _
    $region29: #{forward.3} parent=1 // pred_fallthru
      _
    // Predicated region
    $region30: #{forward.3} parent=1 // pred_check
      _
    $region31: #{forward.3} parent=1 // pred_check_branch
      %33 = sbr.rel (0) target = $region33
    $region32: #{forward.3} parent=1 // pred_region
      _
    $region33: #{forward.3} parent=1 // pred_fallthru
      _
    %v35 = vld [vmem:[%s0] sm:$0x3]
    %v36 = vpack.c.bf16 %v35, %v35
    %v37 = vld [vmem:[%s2] sm:$0xff]
    %v38 = vld [vmem:[%s2 + $0x8] sm:$0xff]
    %v39 = vld [vmem:[%s2 + $0x10] sm:$0xff]
    %v40 = vld [vmem:[%s2 + $0x18] sm:$0xff]
    %v41 = vld [vmem:[%s2 + $0x20] sm:$0xff]
    %v42 = vld [vmem:[%s2 + $0x28] sm:$0xff]
    %v43 = vld [vmem:[%s2 + $0x30] sm:$0xff]
    %v44 = vld [vmem:[%s2 + $0x38] sm:$0xff]
    %v45 = vld [vmem:[%s2 + $0x40] sm:$0xff]
    %v46 = vld [vmem:[%s2 + $0x48] sm:$0xff]
    %v47 = vld [vmem:[%s2 + $0x50] sm:$0xff]
    %v48 = vld [vmem:[%s2 + $0x58] sm:$0xff]
    %v49 = vld [vmem:[%s2 + $0x60] sm:$0xff]
    %v50 = vld [vmem:[%s2 + $0x68] sm:$0xff]
    %v51 = vld [vmem:[%s2 + $0x70] sm:$0xff]
    %v52 = vld [vmem:[%s2 + $0x78] sm:$0xff]
    %v53 = vld [vmem:[%s2 + $0x80] sm:$0xff]
    %v54 = vld [vmem:[%s2 + $0x88] sm:$0xff]
    %v55 = vld [vmem:[%s2 + $0x90] sm:$0xf]
    %v56 = vld [vmem:[%s2 + $0x94] sm:$0xff]
    %v57 = vld [vmem:[%s2 + $0x9c] sm:$0xff]
    %v58 = vld [vmem:[%s2 + $0xa4] sm:$0xff]
    %v59 = vld [vmem:[%s2 + $0xac] sm:$0xff]
    %v60 = vld [vmem:[%s2 + $0xb4] sm:$0xff]
    %v61 = vld [vmem:[%s2 + $0xbc] sm:$0xff]
    %v62 = vld [vmem:[%s2 + $0xc4] sm:$0xff]
    %v63 = vld [vmem:[%s2 + $0xcc] sm:$0xff]
    %v64 = vld [vmem:[%s2 + $0xd4] sm:$0xff]
    %v65 = vld [vmem:[%s2 + $0xdc] sm:$0xff]
    %v66 = vld [vmem:[%s2 + $0xe4] sm:$0xff]
    %v67 = vld [vmem:[%s2 + $0xec] sm:$0xff]
    %v68 = vld [vmem:[%s2 + $0xf4] sm:$0xff]
    %v69 = vld [vmem:[%s2 + $0xfc] sm:$0xff]
    %v70 = vld [vmem:[%s2 + $0x104] sm:$0xff]
    %v71 = vld [vmem:[%s2 + $0x10c] sm:$0xff]
    %v72 = vld [vmem:[%s2 + $0x114] sm:$0xff]
    %v73 = vld [vmem:[%s2 + $0x11c] sm:$0xff]
    %v74 = vld [vmem:[%s2 + $0x124] sm:$0xf]
    %v75 = vld [vmem:[%s2 + $0x128] sm:$0xff]
    %v76 = vld [vmem:[%s2 + $0x130] sm:$0xff]
    %v77 = vld [vmem:[%s2 + $0x138] sm:$0xff]
    %v78 = vld [vmem:[%s2 + $0x140] sm:$0xff]
    %v79 = vld [vmem:[%s2 + $0x148] sm:$0xff]
    %v80 = vld [vmem:[%s2 + $0x150] sm:$0xff]
    %v81 = vld [vmem:[%s2 + $0x158] sm:$0xff]
    %v82 = vld [vmem:[%s2 + $0x160] sm:$0xff]
    %v83 = vld [vmem:[%s2 + $0x168] sm:$0xff]
    %v84 = vld [vmem:[%s2 + $0x170] sm:$0xff]
    %v85 = vld [vmem:[%s2 + $0x178] sm:$0xff]
    %v86 = vld [vmem:[%s2 + $0x180] sm:$0xff]
    %v87 = vld [vmem:[%s2 + $0x188] sm:$0xff]
    %v88 = vld [vmem:[%s2 + $0x190] sm:$0xff]
    %v89 = vld [vmem:[%s2 + $0x198] sm:$0xff]
    %v90 = vld [vmem:[%s2 + $0x1a0] sm:$0xff]
    %v91 = vld [vmem:[%s2 + $0x1a8] sm:$0xff]
    %v92 = vld [vmem:[%s2 + $0x1b0] sm:$0xff]
    %v93 = vld [vmem:[%s2 + $0x1b8] sm:$0xf]
    %v94 = vld [vmem:[%s2 + $0x1bc] sm:$0xff]
    %v95 = vld [vmem:[%s2 + $0x1c4] sm:$0xff]
    %v96 = vld [vmem:[%s2 + $0x1cc] sm:$0xff]
    %v97 = vld [vmem:[%s2 + $0x1d4] sm:$0xff]
    %v98 = vld [vmem:[%s2 + $0x1dc] sm:$0xff]
    %v99 = vld [vmem:[%s2 + $0x1e4] sm:$0xff]
    %v100 = vld [vmem:[%s2 + $0x1ec] sm:$0xff]
    %v101 = vld [vmem:[%s2 + $0x1f4] sm:$0xff]
    %v102 = vld [vmem:[%s2 + $0x1fc] sm:$0xff]
    %v103 = vld [vmem:[%s2 + $0x204] sm:$0xff]
    %v104 = vld [vmem:[%s2 + $0x20c] sm:$0xff]
    %v105 = vld [vmem:[%s2 + $0x214] sm:$0xff]
    %v106 = vld [vmem:[%s2 + $0x21c] sm:$0xff]
    %v107 = vld [vmem:[%s2 + $0x224] sm:$0xff]
    %v108 = vld [vmem:[%s2 + $0x22c] sm:$0xff]
    %v109 = vld [vmem:[%s2 + $0x234] sm:$0xff]
    %v110 = vld [vmem:[%s2 + $0x23c] sm:$0xff]
    %v111 = vld [vmem:[%s2 + $0x244] sm:$0xff]
    %v112 = vld [vmem:[%s2 + $0x24c] sm:$0xf]
    %v113 = vld [vmem:[%s2 + $0x250] sm:$0xff]
    %v114 = vld [vmem:[%s2 + $0x258] sm:$0xff]
    %v115 = vld [vmem:[%s2 + $0x260] sm:$0xff]
    %v116 = vld [vmem:[%s2 + $0x268] sm:$0xff]
    %v117 = vld [vmem:[%s2 + $0x270] sm:$0xff]
    %v118 = vld [vmem:[%s2 + $0x278] sm:$0xff]
    %v119 = vld [vmem:[%s2 + $0x280] sm:$0xff]
    %v120 = vld [vmem:[%s2 + $0x288] sm:$0xff]
    %v121 = vld [vmem:[%s2 + $0x290] sm:$0xff]
    %v122 = vld [vmem:[%s2 + $0x298] sm:$0xff]
    %v123 = vld [vmem:[%s2 + $0x2a0] sm:$0xff]
    %v124 = vld [vmem:[%s2 + $0x2a8] sm:$0xff]
    %v125 = vld [vmem:[%s2 + $0x2b0] sm:$0xff]
    %v126 = vld [vmem:[%s2 + $0x2b8] sm:$0xff]
    %v127 = vld [vmem:[%s2 + $0x2c0] sm:$0xff]
    %v128 = vld [vmem:[%s2 + $0x2c8] sm:$0xff]
    %v129 = vld [vmem:[%s2 + $0x2d0] sm:$0xff]
    %v130 = vld [vmem:[%s2 + $0x2d8] sm:$0xff]
    %v131 = vld [vmem:[%s2 + $0x2e0] sm:$0xf]
    %v132 = vld [vmem:[%s2 + $0x2e4] sm:$0xff]
    %v133 = vld [vmem:[%s2 + $0x2ec] sm:$0xff]
    %v134 = vld [vmem:[%s2 + $0x2f4] sm:$0xff]
    %v135 = vld [vmem:[%s2 + $0x2fc] sm:$0xff]
    %v136 = vld [vmem:[%s2 + $0x304] sm:$0xff]
    %v137 = vld [vmem:[%s2 + $0x30c] sm:$0xff]
    %v138 = vld [vmem:[%s2 + $0x314] sm:$0xff]
    %v139 = vld [vmem:[%s2 + $0x31c] sm:$0xff]
    %v140 = vld [vmem:[%s2 + $0x324] sm:$0xff]
    %v141 = vld [vmem:[%s2 + $0x32c] sm:$0xff]
    %v142 = vld [vmem:[%s2 + $0x334] sm:$0xff]
    %v143 = vld [vmem:[%s2 + $0x33c] sm:$0xff]
    %v144 = vld [vmem:[%s2 + $0x344] sm:$0xff]
    %v145 = vld [vmem:[%s2 + $0x34c] sm:$0xff]
    %v146 = vld [vmem:[%s2 + $0x354] sm:$0xff]
    %v147 = vld [vmem:[%s2 + $0x35c] sm:$0xff]
    %v148 = vld [vmem:[%s2 + $0x364] sm:$0xff]
    %v149 = vld [vmem:[%s2 + $0x36c] sm:$0xff]
    %v150 = vld [vmem:[%s2 + $0x374] sm:$0xf]
    %v151 = vld [vmem:[%s2 + $0x378] sm:$0xff]
    %v152 = vld [vmem:[%s2 + $0x380] sm:$0xff]
    %v153 = vld [vmem:[%s2 + $0x388] sm:$0xff]
    %v154 = vld [vmem:[%s2 + $0x390] sm:$0xff]
    %v155 = vld [vmem:[%s2 + $0x398] sm:$0xff]
    %v156 = vld [vmem:[%s2 + $0x3a0] sm:$0xff]
    %v157 = vld [vmem:[%s2 + $0x3a8] sm:$0xff]
    %v158 = vld [vmem:[%s2 + $0x3b0] sm:$0xff]
    %v159 = vld [vmem:[%s2 + $0x3b8] sm:$0xff]
    %v160 = vld [vmem:[%s2 + $0x3c0] sm:$0xff]
    %v161 = vld [vmem:[%s2 + $0x3c8] sm:$0xff]
    %v162 = vld [vmem:[%s2 + $0x3d0] sm:$0xff]
    %v163 = vld [vmem:[%s2 + $0x3d8] sm:$0xff]
    %v164 = vld [vmem:[%s2 + $0x3e0] sm:$0xff]
    %v165 = vld [vmem:[%s2 + $0x3e8] sm:$0xff]
    %v166 = vld [vmem:[%s2 + $0x3f0] sm:$0xff]
    %v167 = vld [vmem:[%s2 + $0x3f8] sm:$0xff]
    %v168 = vld [vmem:[%s2 + $0x400] sm:$0xff]
    %v169 = vld [vmem:[%s2 + $0x408] sm:$0xf]
    %v170 = vld [vmem:[%s2 + $0x40c] sm:$0xff]
    %v171 = vld [vmem:[%s2 + $0x414] sm:$0xff]
    %v172 = vld [vmem:[%s2 + $0x41c] sm:$0xff]
    %v173 = vld [vmem:[%s2 + $0x424] sm:$0xff]
    %v174 = vld [vmem:[%s2 + $0x42c] sm:$0xff]
    %v175 = vld [vmem:[%s2 + $0x434] sm:$0xff]
    %v176 = vld [vmem:[%s2 + $0x43c] sm:$0xff]
    %v177 = vld [vmem:[%s2 + $0x444] sm:$0xff]
    %v178 = vld [vmem:[%s2 + $0x44c] sm:$0xff]
    %v179 = vld [vmem:[%s2 + $0x454] sm:$0xff]
    %v180 = vld [vmem:[%s2 + $0x45c] sm:$0xff]
    %v181 = vld [vmem:[%s2 + $0x464] sm:$0xff]
    %v182 = vld [vmem:[%s2 + $0x46c] sm:$0xff]
    %v183 = vld [vmem:[%s2 + $0x474] sm:$0xff]
    %v184 = vld [vmem:[%s2 + $0x47c] sm:$0xff]
    %v185 = vld [vmem:[%s2 + $0x484] sm:$0xff]
    %v186 = vld [vmem:[%s2 + $0x48c] sm:$0xff]
    %v187 = vld [vmem:[%s2 + $0x494] sm:$0xff]
    %v188 = vld [vmem:[%s2 + $0x49c] sm:$0xf]
    %v189 = vld [vmem:[%s2 + $0x4a0] sm:$0xff]
    %v190 = vld [vmem:[%s2 + $0x4a8] sm:$0xff]
    %v191 = vld [vmem:[%s2 + $0x4b0] sm:$0xff]
    %v192 = vld [vmem:[%s2 + $0x4b8] sm:$0xff]
    %v193 = vld [vmem:[%s2 + $0x4c0] sm:$0xff]
    %v194 = vld [vmem:[%s2 + $0x4c8] sm:$0xff]
    %v195 = vld [vmem:[%s2 + $0x4d0] sm:$0xff]
    %v196 = vld [vmem:[%s2 + $0x4d8] sm:$0xff]
    %v197 = vld [vmem:[%s2 + $0x4e0] sm:$0xff]
    %v198 = vld [vmem:[%s2 + $0x4e8] sm:$0xff]
    %v199 = vld [vmem:[%s2 + $0x4f0] sm:$0xff]
    %v200 = vld [vmem:[%s2 + $0x4f8] sm:$0xff]
    %v201 = vld [vmem:[%s2 + $0x500] sm:$0xff]
    %v202 = vld [vmem:[%s2 + $0x508] sm:$0xff]
    %v203 = vld [vmem:[%s2 + $0x510] sm:$0xff]
    %v204 = vld [vmem:[%s2 + $0x518] sm:$0xff]
    %v205 = vld [vmem:[%s2 + $0x520] sm:$0xff]
    %v206 = vld [vmem:[%s2 + $0x528] sm:$0xff]
    %v207 = vld [vmem:[%s2 + $0x530] sm:$0xf]
    %v208 = vld [vmem:[%s2 + $0x534] sm:$0xff]
    %v209 = vld [vmem:[%s2 + $0x53c] sm:$0xff]
    %v210 = vld [vmem:[%s2 + $0x544] sm:$0xff]
    %v211 = vld [vmem:[%s2 + $0x54c] sm:$0xff]
    %v212 = vld [vmem:[%s2 + $0x554] sm:$0xff]
    %v213 = vld [vmem:[%s2 + $0x55c] sm:$0xff]
    %v214 = vld [vmem:[%s2 + $0x564] sm:$0xff]
    %v215 = vld [vmem:[%s2 + $0x56c] sm:$0xff]
    %v216 = vld [vmem:[%s2 + $0x574] sm:$0xff]
    %v217 = vld [vmem:[%s2 + $0x57c] sm:$0xff]
    %v218 = vld [vmem:[%s2 + $0x584] sm:$0xff]
    %v219 = vld [vmem:[%s2 + $0x58c] sm:$0xff]
    %v220 = vld [vmem:[%s2 + $0x594] sm:$0xff]
    %v221 = vld [vmem:[%s2 + $0x59c] sm:$0xff]
    %v222 = vld [vmem:[%s2 + $0x5a4] sm:$0xff]
    %v223 = vld [vmem:[%s2 + $0x5ac] sm:$0xff]
    %v224 = vld [vmem:[%s2 + $0x5b4] sm:$0xff]
    %v225 = vld [vmem:[%s2 + $0x5bc] sm:$0xff]
    %v226 = vld [vmem:[%s2 + $0x5c4] sm:$0xf]
    %v227 = vld [vmem:[%s2 + $0x5c8] sm:$0xff]
    %v228 = vld [vmem:[%s2 + $0x5d0] sm:$0xff]
    %v229 = vld [vmem:[%s2 + $0x5d8] sm:$0xff]
    %v230 = vld [vmem:[%s2 + $0x5e0] sm:$0xff]
    %v231 = vld [vmem:[%s2 + $0x5e8] sm:$0xff]
    %v232 = vld [vmem:[%s2 + $0x5f0] sm:$0xff]
    %v233 = vld [vmem:[%s2 + $0x5f8] sm:$0xff]
    %v234 = vld [vmem:[%s2 + $0x600] sm:$0xff]
    %v235 = vld [vmem:[%s2 + $0x608] sm:$0xff]
    %v236 = vld [vmem:[%s2 + $0x610] sm:$0xff]
    %v237 = vld [vmem:[%s2 + $0x618] sm:$0xff]
    %v238 = vld [vmem:[%s2 + $0x620] sm:$0xff]
    %v239 = vld [vmem:[%s2 + $0x628] sm:$0xff]
    %v240 = vld [vmem:[%s2 + $0x630] sm:$0xff]
    %v241 = vld [vmem:[%s2 + $0x638] sm:$0xff]
    %v242 = vld [vmem:[%s2 + $0x640] sm:$0xff]
    %v243 = vld [vmem:[%s2 + $0x648] sm:$0xff]
    %v244 = vld [vmem:[%s2 + $0x650] sm:$0xff]
    %v245 = vld [vmem:[%s2 + $0x658] sm:$0xf]
    %v246 = vld [vmem:[%s2 + $0x65c] sm:$0xff]
    %v247 = vld [vmem:[%s2 + $0x664] sm:$0xff]
    %v248 = vld [vmem:[%s2 + $0x66c] sm:$0xff]
    %v249 = vld [vmem:[%s2 + $0x674] sm:$0xff]
    %v250 = vld [vmem:[%s2 + $0x67c] sm:$0xff]
    %v251 = vld [vmem:[%s2 + $0x684] sm:$0xff]
    %v252 = vld [vmem:[%s2 + $0x68c] sm:$0xff]
    %v253 = vld [vmem:[%s2 + $0x694] sm:$0xff]
    %v254 = vld [vmem:[%s2 + $0x69c] sm:$0xff]
    %v255 = vld [vmem:[%s2 + $0x6a4] sm:$0xff]
    %v256 = vld [vmem:[%s2 + $0x6ac] sm:$0xff]
    %v257 = vld [vmem:[%s2 + $0x6b4] sm:$0xff]
    %v258 = vld [vmem:[%s2 + $0x6bc] sm:$0xff]
    %v259 = vld [vmem:[%s2 + $0x6c4] sm:$0xff]
    %v260 = vld [vmem:[%s2 + $0x6cc] sm:$0xff]
    %v261 = vld [vmem:[%s2 + $0x6d4] sm:$0xff]
    %v262 = vld [vmem:[%s2 + $0x6dc] sm:$0xff]
    %v263 = vld [vmem:[%s2 + $0x6e4] sm:$0xff]
    %v264 = vld [vmem:[%s2 + $0x6ec] sm:$0xf]
    %v265 = vld [vmem:[%s2 + $0x6f0] sm:$0xff]
    %v266 = vld [vmem:[%s2 + $0x6f8] sm:$0xff]
    %v267 = vld [vmem:[%s2 + $0x700] sm:$0xff]
    %v268 = vld [vmem:[%s2 + $0x708] sm:$0xff]
    %v269 = vld [vmem:[%s2 + $0x710] sm:$0xff]
    %v270 = vld [vmem:[%s2 + $0x718] sm:$0xff]
    %v271 = vld [vmem:[%s2 + $0x720] sm:$0xff]
    %v272 = vld [vmem:[%s2 + $0x728] sm:$0xff]
    %v273 = vld [vmem:[%s2 + $0x730] sm:$0xff]
    %v274 = vld [vmem:[%s2 + $0x738] sm:$0xff]
    %v275 = vld [vmem:[%s2 + $0x740] sm:$0xff]
    %v276 = vld [vmem:[%s2 + $0x748] sm:$0xff]
    %v277 = vld [vmem:[%s2 + $0x750] sm:$0xff]
    %v278 = vld [vmem:[%s2 + $0x758] sm:$0xff]
    %v279 = vld [vmem:[%s2 + $0x760] sm:$0xff]
    %v280 = vld [vmem:[%s2 + $0x768] sm:$0xff]
    %v281 = vld [vmem:[%s2 + $0x770] sm:$0xff]
    %v282 = vld [vmem:[%s2 + $0x778] sm:$0xff]
    %v283 = vld [vmem:[%s2 + $0x780] sm:$0xf]
    %v284 = vld [vmem:[%s2 + $0x784] sm:$0xff]
    %v285 = vld [vmem:[%s2 + $0x78c] sm:$0xff]
    %v286 = vld [vmem:[%s2 + $0x794] sm:$0xff]
    %v287 = vld [vmem:[%s2 + $0x79c] sm:$0xff]
    %v288 = vld [vmem:[%s2 + $0x7a4] sm:$0xff]
    %v289 = vld [vmem:[%s2 + $0x7ac] sm:$0xff]
    %v290 = vld [vmem:[%s2 + $0x7b4] sm:$0xff]
    %v291 = vld [vmem:[%s2 + $0x7bc] sm:$0xff]
    %v292 = vld [vmem:[%s2 + $0x7c4] sm:$0xff]
    %v293 = vld [vmem:[%s2 + $0x7cc] sm:$0xff]
    %v294 = vld [vmem:[%s2 + $0x7d4] sm:$0xff]
    %v295 = vld [vmem:[%s2 + $0x7dc] sm:$0xff]
    %v296 = vld [vmem:[%s2 + $0x7e4] sm:$0xff]
    %v297 = vld [vmem:[%s2 + $0x7ec] sm:$0xff]
    %v298 = vld [vmem:[%s2 + $0x7f4] sm:$0xff]
    %v299 = vld [vmem:[%s2 + $0x7fc] sm:$0xff]
    %v300 = vld [vmem:[%s2 + $0x804] sm:$0xff]
    %v301 = vld [vmem:[%s2 + $0x80c] sm:$0xff]
    %v302 = vld [vmem:[%s2 + $0x814] sm:$0xf]
    %v303 = vld [vmem:[%s2 + $0x818] sm:$0xff]
    %v304 = vld [vmem:[%s2 + $0x820] sm:$0xff]
    %v305 = vld [vmem:[%s2 + $0x828] sm:$0xff]
    %v306 = vld [vmem:[%s2 + $0x830] sm:$0xff]
    %v307 = vld [vmem:[%s2 + $0x838] sm:$0xff]
    %v308 = vld [vmem:[%s2 + $0x840] sm:$0xff]
    %v309 = vld [vmem:[%s2 + $0x848] sm:$0xff]
    %v310 = vld [vmem:[%s2 + $0x850] sm:$0xff]
    %v311 = vld [vmem:[%s2 + $0x858] sm:$0xff]
    %v312 = vld [vmem:[%s2 + $0x860] sm:$0xff]
    %v313 = vld [vmem:[%s2 + $0x868] sm:$0xff]
    %v314 = vld [vmem:[%s2 + $0x870] sm:$0xff]
    %v315 = vld [vmem:[%s2 + $0x878] sm:$0xff]
    %v316 = vld [vmem:[%s2 + $0x880] sm:$0xff]
    %v317 = vld [vmem:[%s2 + $0x888] sm:$0xff]
    %v318 = vld [vmem:[%s2 + $0x890] sm:$0xff]
    %v319 = vld [vmem:[%s2 + $0x898] sm:$0xff]
    %v320 = vld [vmem:[%s2 + $0x8a0] sm:$0xff]
    %v321 = vld [vmem:[%s2 + $0x8a8] sm:$0xf]
    %v322 = vld [vmem:[%s2 + $0x8ac] sm:$0xff]
    %v323 = vld [vmem:[%s2 + $0x8b4] sm:$0xff]
    %v324 = vld [vmem:[%s2 + $0x8bc] sm:$0xff]
    %v325 = vld [vmem:[%s2 + $0x8c4] sm:$0xff]
    %v326 = vld [vmem:[%s2 + $0x8cc] sm:$0xff]
    %v327 = vld [vmem:[%s2 + $0x8d4] sm:$0xff]
    %v328 = vld [vmem:[%s2 + $0x8dc] sm:$0xff]
    %v329 = vld [vmem:[%s2 + $0x8e4] sm:$0xff]
    %v330 = vld [vmem:[%s2 + $0x8ec] sm:$0xff]
    %v331 = vld [vmem:[%s2 + $0x8f4] sm:$0xff]
    %v332 = vld [vmem:[%s2 + $0x8fc] sm:$0xff]
    %v333 = vld [vmem:[%s2 + $0x904] sm:$0xff]
    %v334 = vld [vmem:[%s2 + $0x90c] sm:$0xff]
    %v335 = vld [vmem:[%s2 + $0x914] sm:$0xff]
    %v336 = vld [vmem:[%s2 + $0x91c] sm:$0xff]
    %v337 = vld [vmem:[%s2 + $0x924] sm:$0xff]
    %v338 = vld [vmem:[%s2 + $0x92c] sm:$0xff]
    %v339 = vld [vmem:[%s2 + $0x934] sm:$0xff]
    %v340 = vld [vmem:[%s2 + $0x93c] sm:$0xf]
    %v341 = vld [vmem:[%s3] sm:$0xff]
    %v342 = vld [vmem:[%s3 + $0x8] sm:$0xff]
    %v343 = vld [vmem:[%s3 + $0x10] sm:$0xff]
    %v344 = vld [vmem:[%s3 + $0x18] sm:$0xff]
    %v345 = vld [vmem:[%s3 + $0x20] sm:$0x1f]
    %v351 = vperm.slane %v341, 0
    %v352 = vperm.slane %v341, 1
    %v353 = vperm.slane %v341, 2
    %v354 = vperm.slane %v341, 3
    %v355 = vperm.slane %v341, 4
    %v356 = vperm.slane %v341, 5
    %v357 = vperm.slane %v341, 6
    %v358 = vperm.slane %v341, 7
    %v359 = vperm.slane %v342, 0
    %v360 = vperm.slane %v342, 1
    %v361 = vperm.slane %v342, 2
    %v362 = vperm.slane %v342, 3
    %v363 = vperm.slane %v342, 4
    %v364 = vperm.slane %v342, 5
    %v365 = vperm.slane %v342, 6
    %v366 = vperm.slane %v342, 7
    %v367 = vperm.slane %v343, 0
    %v368 = vperm.slane %v343, 1
    %v369 = vperm.slane %v343, 2
    %v370 = vperm.slane %v343, 3
    %v371 = vperm.slane %v343, 4
    %v372 = vperm.slane %v343, 5
    %v373 = vperm.slane %v343, 6
    %v374 = vperm.slane %v343, 7
    %v375 = vperm.slane %v344, 0
    %v376 = vperm.slane %v344, 1
    %v377 = vperm.slane %v344, 2
    %v378 = vperm.slane %v344, 3
    %v379 = vperm.slane %v344, 4
    %v380 = vperm.slane %v344, 5
    %v381 = vperm.slane %v344, 6
    %v382 = vperm.slane %v344, 7
    %v383 = vperm.slane %v345, 0
    %v384 = vperm.slane %v345, 1
    %v385 = vperm.slane %v345, 2
    %v386 = vperm.slane %v345, 3
    %v387 = vperm.slane %v345, 4
    %v729 = vunpack.c.l.b16 %v37
    %v730 = vunpack.c.h.b16 %v37
    %v731 = vunpack.c.l.b16 %v38
    %v732 = vunpack.c.h.b16 %v38
    %v733 = vunpack.c.l.b16 %v39
    %v734 = vunpack.c.h.b16 %v39
    %v735 = vunpack.c.l.b16 %v40
    %v736 = vunpack.c.h.b16 %v40
    %v737 = vunpack.c.l.b16 %v41
    %v738 = vunpack.c.h.b16 %v41
    %v739 = vunpack.c.l.b16 %v42
    %v740 = vunpack.c.h.b16 %v42
    %v741 = vunpack.c.l.b16 %v43
    %v742 = vunpack.c.h.b16 %v43
    %v743 = vunpack.c.l.b16 %v44
    %v744 = vunpack.c.h.b16 %v44
    %v745 = vunpack.c.l.b16 %v45
    %v746 = vunpack.c.h.b16 %v45
    %v747 = vunpack.c.l.b16 %v46
    %v748 = vunpack.c.h.b16 %v46
    %v749 = vunpack.c.l.b16 %v47
    %v750 = vunpack.c.h.b16 %v47
    %v751 = vunpack.c.l.b16 %v48
    %v752 = vunpack.c.h.b16 %v48
    %v753 = vunpack.c.l.b16 %v49
    %v754 = vunpack.c.h.b16 %v49
    %v755 = vunpack.c.l.b16 %v50
    %v756 = vunpack.c.h.b16 %v50
    %v757 = vunpack.c.l.b16 %v51
    %v758 = vunpack.c.h.b16 %v51
    %v759 = vunpack.c.l.b16 %v52
    %v760 = vunpack.c.h.b16 %v52
    %v761 = vunpack.c.l.b16 %v53
    %v762 = vunpack.c.h.b16 %v53
    %v763 = vunpack.c.l.b16 %v54
    %v764 = vunpack.c.h.b16 %v54
    %v765 = vunpack.c.l.b16 %v55
    %v766 = vunpack.c.l.b16 %v56
    %v767 = vunpack.c.h.b16 %v56
    %v768 = vunpack.c.l.b16 %v57
    %v769 = vunpack.c.h.b16 %v57
    %v770 = vunpack.c.l.b16 %v58
    %v771 = vunpack.c.h.b16 %v58
    %v772 = vunpack.c.l.b16 %v59
    %v773 = vunpack.c.h.b16 %v59
    %v774 = vunpack.c.l.b16 %v60
    %v775 = vunpack.c.h.b16 %v60
    %v776 = vunpack.c.l.b16 %v61
    %v777 = vunpack.c.h.b16 %v61
    %v778 = vunpack.c.l.b16 %v62
    %v779 = vunpack.c.h.b16 %v62
    %v780 = vunpack.c.l.b16 %v63
    %v781 = vunpack.c.h.b16 %v63
    %v782 = vunpack.c.l.b16 %v64
    %v783 = vunpack.c.h.b16 %v64
    %v784 = vunpack.c.l.b16 %v65
    %v785 = vunpack.c.h.b16 %v65
    %v786 = vunpack.c.l.b16 %v66
    %v787 = vunpack.c.h.b16 %v66
    %v788 = vunpack.c.l.b16 %v67
    %v789 = vunpack.c.h.b16 %v67
    %v790 = vunpack.c.l.b16 %v68
    %v791 = vunpack.c.h.b16 %v68
    %v792 = vunpack.c.l.b16 %v69
    %v793 = vunpack.c.h.b16 %v69
    %v794 = vunpack.c.l.b16 %v70
    %v795 = vunpack.c.h.b16 %v70
    %v796 = vunpack.c.l.b16 %v71
    %v797 = vunpack.c.h.b16 %v71
    %v798 = vunpack.c.l.b16 %v72
    %v799 = vunpack.c.h.b16 %v72
    %v800 = vunpack.c.l.b16 %v73
    %v801 = vunpack.c.h.b16 %v73
    %v802 = vunpack.c.l.b16 %v74
    %v803 = vunpack.c.l.b16 %v75
    %v804 = vunpack.c.h.b16 %v75
    %v805 = vunpack.c.l.b16 %v76
    %v806 = vunpack.c.h.b16 %v76
    %v807 = vunpack.c.l.b16 %v77
    %v808 = vunpack.c.h.b16 %v77
    %v809 = vunpack.c.l.b16 %v78
    %v810 = vunpack.c.h.b16 %v78
    %v811 = vunpack.c.l.b16 %v79
    %v812 = vunpack.c.h.b16 %v79
    %v813 = vunpack.c.l.b16 %v80
    %v814 = vunpack.c.h.b16 %v80
    %v815 = vunpack.c.l.b16 %v81
    %v816 = vunpack.c.h.b16 %v81
    %v817 = vunpack.c.l.b16 %v82
    %v818 = vunpack.c.h.b16 %v82
    %v819 = vunpack.c.l.b16 %v83
    %v820 = vunpack.c.h.b16 %v83
    %v821 = vunpack.c.l.b16 %v84
    %v822 = vunpack.c.h.b16 %v84
    %v823 = vunpack.c.l.b16 %v85
    %v824 = vunpack.c.h.b16 %v85
    %v825 = vunpack.c.l.b16 %v86
    %v826 = vunpack.c.h.b16 %v86
    %v827 = vunpack.c.l.b16 %v87
    %v828 = vunpack.c.h.b16 %v87
    %v829 = vunpack.c.l.b16 %v88
    %v830 = vunpack.c.h.b16 %v88
    %v831 = vunpack.c.l.b16 %v89
    %v832 = vunpack.c.h.b16 %v89
    %v833 = vunpack.c.l.b16 %v90
    %v834 = vunpack.c.h.b16 %v90
    %v835 = vunpack.c.l.b16 %v91
    %v836 = vunpack.c.h.b16 %v91
    %v837 = vunpack.c.l.b16 %v92
    %v838 = vunpack.c.h.b16 %v92
    %v839 = vunpack.c.l.b16 %v93
    %v840 = vunpack.c.l.b16 %v94
    %v841 = vunpack.c.h.b16 %v94
    %v842 = vunpack.c.l.b16 %v95
    %v843 = vunpack.c.h.b16 %v95
    %v844 = vunpack.c.l.b16 %v96
    %v845 = vunpack.c.h.b16 %v96
    %v846 = vunpack.c.l.b16 %v97
    %v847 = vunpack.c.h.b16 %v97
    %v848 = vunpack.c.l.b16 %v98
    %v849 = vunpack.c.h.b16 %v98
    %v850 = vunpack.c.l.b16 %v99
    %v851 = vunpack.c.h.b16 %v99
    %v852 = vunpack.c.l.b16 %v100
    %v853 = vunpack.c.h.b16 %v100
    %v854 = vunpack.c.l.b16 %v101
    %v855 = vunpack.c.h.b16 %v101
    %v856 = vunpack.c.l.b16 %v102
    %v857 = vunpack.c.h.b16 %v102
    %v858 = vunpack.c.l.b16 %v103
    %v859 = vunpack.c.h.b16 %v103
    %v860 = vunpack.c.l.b16 %v104
    %v861 = vunpack.c.h.b16 %v104
    %v862 = vunpack.c.l.b16 %v105
    %v863 = vunpack.c.h.b16 %v105
    %v864 = vunpack.c.l.b16 %v106
    %v865 = vunpack.c.h.b16 %v106
    %v866 = vunpack.c.l.b16 %v107
    %v867 = vunpack.c.h.b16 %v107
    %v868 = vunpack.c.l.b16 %v108
    %v869 = vunpack.c.h.b16 %v108
    %v870 = vunpack.c.l.b16 %v109
    %v871 = vunpack.c.h.b16 %v109
    %v872 = vunpack.c.l.b16 %v110
    %v873 = vunpack.c.h.b16 %v110
    %v874 = vunpack.c.l.b16 %v111
    %v875 = vunpack.c.h.b16 %v111
    %v876 = vunpack.c.l.b16 %v112
    %v877 = vunpack.c.l.b16 %v113
    %v878 = vunpack.c.h.b16 %v113
    %v879 = vunpack.c.l.b16 %v114
    %v880 = vunpack.c.h.b16 %v114
    %v881 = vunpack.c.l.b16 %v115
    %v882 = vunpack.c.h.b16 %v115
    %v883 = vunpack.c.l.b16 %v116
    %v884 = vunpack.c.h.b16 %v116
    %v885 = vunpack.c.l.b16 %v117
    %v886 = vunpack.c.h.b16 %v117
    %v887 = vunpack.c.l.b16 %v118
    %v888 = vunpack.c.h.b16 %v118
    %v889 = vunpack.c.l.b16 %v119
    %v890 = vunpack.c.h.b16 %v119
    %v891 = vunpack.c.l.b16 %v120
    %v892 = vunpack.c.h.b16 %v120
    %v893 = vunpack.c.l.b16 %v121
    %v894 = vunpack.c.h.b16 %v121
    %v895 = vunpack.c.l.b16 %v122
    %v896 = vunpack.c.h.b16 %v122
    %v897 = vunpack.c.l.b16 %v123
    %v898 = vunpack.c.h.b16 %v123
    %v899 = vunpack.c.l.b16 %v124
    %v900 = vunpack.c.h.b16 %v124
    %v901 = vunpack.c.l.b16 %v125
    %v902 = vunpack.c.h.b16 %v125
    %v903 = vunpack.c.l.b16 %v126
    %v904 = vunpack.c.h.b16 %v126
    %v905 = vunpack.c.l.b16 %v127
    %v906 = vunpack.c.h.b16 %v127
    %v907 = vunpack.c.l.b16 %v128
    %v908 = vunpack.c.h.b16 %v128
    %v909 = vunpack.c.l.b16 %v129
    %v910 = vunpack.c.h.b16 %v129
    %v911 = vunpack.c.l.b16 %v130
    %v912 = vunpack.c.h.b16 %v130
    %v913 = vunpack.c.l.b16 %v131
    %v914 = vunpack.c.l.b16 %v132
    %v915 = vunpack.c.h.b16 %v132
    %v916 = vunpack.c.l.b16 %v133
    %v917 = vunpack.c.h.b16 %v133
    %v918 = vunpack.c.l.b16 %v134
    %v919 = vunpack.c.h.b16 %v134
    %v920 = vunpack.c.l.b16 %v135
    %v921 = vunpack.c.h.b16 %v135
    %v922 = vunpack.c.l.b16 %v136
    %v923 = vunpack.c.h.b16 %v136
    %v924 = vunpack.c.l.b16 %v137
    %v925 = vunpack.c.h.b16 %v137
    %v926 = vunpack.c.l.b16 %v138
    %v927 = vunpack.c.h.b16 %v138
    %v928 = vunpack.c.l.b16 %v139
    %v929 = vunpack.c.h.b16 %v139
    %v930 = vunpack.c.l.b16 %v140
    %v931 = vunpack.c.h.b16 %v140
    %v932 = vunpack.c.l.b16 %v141
    %v933 = vunpack.c.h.b16 %v141
    %v934 = vunpack.c.l.b16 %v142
    %v935 = vunpack.c.h.b16 %v142
    %v936 = vunpack.c.l.b16 %v143
    %v937 = vunpack.c.h.b16 %v143
    %v938 = vunpack.c.l.b16 %v144
    %v939 = vunpack.c.h.b16 %v144
    %v940 = vunpack.c.l.b16 %v145
    %v941 = vunpack.c.h.b16 %v145
    %v942 = vunpack.c.l.b16 %v146
    %v943 = vunpack.c.h.b16 %v146
    %v944 = vunpack.c.l.b16 %v147
    %v945 = vunpack.c.h.b16 %v147
    %v946 = vunpack.c.l.b16 %v148
    %v947 = vunpack.c.h.b16 %v148
    %v948 = vunpack.c.l.b16 %v149
    %v949 = vunpack.c.h.b16 %v149
    %v950 = vunpack.c.l.b16 %v150
    %v951 = vunpack.c.l.b16 %v151
    %v952 = vunpack.c.h.b16 %v151
    %v953 = vunpack.c.l.b16 %v152
    %v954 = vunpack.c.h.b16 %v152
    %v955 = vunpack.c.l.b16 %v153
    %v956 = vunpack.c.h.b16 %v153
    %v957 = vunpack.c.l.b16 %v154
    %v958 = vunpack.c.h.b16 %v154
    %v959 = vunpack.c.l.b16 %v155
    %v960 = vunpack.c.h.b16 %v155
    %v961 = vunpack.c.l.b16 %v156
    %v962 = vunpack.c.h.b16 %v156
    %v963 = vunpack.c.l.b16 %v157
    %v964 = vunpack.c.h.b16 %v157
    %v965 = vunpack.c.l.b16 %v158
    %v966 = vunpack.c.h.b16 %v158
    %v967 = vunpack.c.l.b16 %v159
    %v968 = vunpack.c.h.b16 %v159
    %v969 = vunpack.c.l.b16 %v160
    %v970 = vunpack.c.h.b16 %v160
    %v971 = vunpack.c.l.b16 %v161
    %v972 = vunpack.c.h.b16 %v161
    %v973 = vunpack.c.l.b16 %v162
    %v974 = vunpack.c.h.b16 %v162
    %v975 = vunpack.c.l.b16 %v163
    %v976 = vunpack.c.h.b16 %v163
    %v977 = vunpack.c.l.b16 %v164
    %v978 = vunpack.c.h.b16 %v164
    %v979 = vunpack.c.l.b16 %v165
    %v980 = vunpack.c.h.b16 %v165
    %v981 = vunpack.c.l.b16 %v166
    %v982 = vunpack.c.h.b16 %v166
    %v983 = vunpack.c.l.b16 %v167
    %v984 = vunpack.c.h.b16 %v167
    %v985 = vunpack.c.l.b16 %v168
    %v986 = vunpack.c.h.b16 %v168
    %v987 = vunpack.c.l.b16 %v169
    %v988 = vunpack.c.l.b16 %v170
    %v989 = vunpack.c.h.b16 %v170
    %v990 = vunpack.c.l.b16 %v171
    %v991 = vunpack.c.h.b16 %v171
    %v992 = vunpack.c.l.b16 %v172
    %v993 = vunpack.c.h.b16 %v172
    %v994 = vunpack.c.l.b16 %v173
    %v995 = vunpack.c.h.b16 %v173
    %v996 = vunpack.c.l.b16 %v174
    %v997 = vunpack.c.h.b16 %v174
    %v998 = vunpack.c.l.b16 %v175
    %v999 = vunpack.c.h.b16 %v175
    %v1000 = vunpack.c.l.b16 %v176
    %v1001 = vunpack.c.h.b16 %v176
    %v1002 = vunpack.c.l.b16 %v177
    %v1003 = vunpack.c.h.b16 %v177
    %v1004 = vunpack.c.l.b16 %v178
    %v1005 = vunpack.c.h.b16 %v178
    %v1006 = vunpack.c.l.b16 %v179
    %v1007 = vunpack.c.h.b16 %v179
    %v1008 = vunpack.c.l.b16 %v180
    %v1009 = vunpack.c.h.b16 %v180
    %v1010 = vunpack.c.l.b16 %v181
    %v1011 = vunpack.c.h.b16 %v181
    %v1012 = vunpack.c.l.b16 %v182
    %v1013 = vunpack.c.h.b16 %v182
    %v1014 = vunpack.c.l.b16 %v183
    %v1015 = vunpack.c.h.b16 %v183
    %v1016 = vunpack.c.l.b16 %v184
    %v1017 = vunpack.c.h.b16 %v184
    %v1018 = vunpack.c.l.b16 %v185
    %v1019 = vunpack.c.h.b16 %v185
    %v1020 = vunpack.c.l.b16 %v186
    %v1021 = vunpack.c.h.b16 %v186
    %v1022 = vunpack.c.l.b16 %v187
    %v1023 = vunpack.c.h.b16 %v187
    %v1024 = vunpack.c.l.b16 %v188
    %v1025 = vunpack.c.l.b16 %v189
    %v1026 = vunpack.c.h.b16 %v189
    %v1027 = vunpack.c.l.b16 %v190
    %v1028 = vunpack.c.h.b16 %v190
    %v1029 = vunpack.c.l.b16 %v191
    %v1030 = vunpack.c.h.b16 %v191
    %v1031 = vunpack.c.l.b16 %v192
    %v1032 = vunpack.c.h.b16 %v192
    %v1033 = vunpack.c.l.b16 %v193
    %v1034 = vunpack.c.h.b16 %v193
    %v1035 = vunpack.c.l.b16 %v194
    %v1036 = vunpack.c.h.b16 %v194
    %v1037 = vunpack.c.l.b16 %v195
    %v1038 = vunpack.c.h.b16 %v195
    %v1039 = vunpack.c.l.b16 %v196
    %v1040 = vunpack.c.h.b16 %v196
    %v1041 = vunpack.c.l.b16 %v197
    %v1042 = vunpack.c.h.b16 %v197
    %v1043 = vunpack.c.l.b16 %v198
    %v1044 = vunpack.c.h.b16 %v198
    %v1045 = vunpack.c.l.b16 %v199
    %v1046 = vunpack.c.h.b16 %v199
    %v1047 = vunpack.c.l.b16 %v200
    %v1048 = vunpack.c.h.b16 %v200
    %v1049 = vunpack.c.l.b16 %v201
    %v1050 = vunpack.c.h.b16 %v201
    %v1051 = vunpack.c.l.b16 %v202
    %v1052 = vunpack.c.h.b16 %v202
    %v1053 = vunpack.c.l.b16 %v203
    %v1054 = vunpack.c.h.b16 %v203
    %v1055 = vunpack.c.l.b16 %v204
    %v1056 = vunpack.c.h.b16 %v204
    %v1057 = vunpack.c.l.b16 %v205
    %v1058 = vunpack.c.h.b16 %v205
    %v1059 = vunpack.c.l.b16 %v206
    %v1060 = vunpack.c.h.b16 %v206
    %v1061 = vunpack.c.l.b16 %v207
    %v1062 = vunpack.c.l.b16 %v208
    %v1063 = vunpack.c.h.b16 %v208
    %v1064 = vunpack.c.l.b16 %v209
    %v1065 = vunpack.c.h.b16 %v209
    %v1066 = vunpack.c.l.b16 %v210
    %v1067 = vunpack.c.h.b16 %v210
    %v1068 = vunpack.c.l.b16 %v211
    %v1069 = vunpack.c.h.b16 %v211
    %v1070 = vunpack.c.l.b16 %v212
    %v1071 = vunpack.c.h.b16 %v212
    %v1072 = vunpack.c.l.b16 %v213
    %v1073 = vunpack.c.h.b16 %v213
    %v1074 = vunpack.c.l.b16 %v214
    %v1075 = vunpack.c.h.b16 %v214
    %v1076 = vunpack.c.l.b16 %v215
    %v1077 = vunpack.c.h.b16 %v215
    %v1078 = vunpack.c.l.b16 %v216
    %v1079 = vunpack.c.h.b16 %v216
    %v1080 = vunpack.c.l.b16 %v217
    %v1081 = vunpack.c.h.b16 %v217
    %v1082 = vunpack.c.l.b16 %v218
    %v1083 = vunpack.c.h.b16 %v218
    %v1084 = vunpack.c.l.b16 %v219
    %v1085 = vunpack.c.h.b16 %v219
    %v1086 = vunpack.c.l.b16 %v220
    %v1087 = vunpack.c.h.b16 %v220
    %v1088 = vunpack.c.l.b16 %v221
    %v1089 = vunpack.c.h.b16 %v221
    %v1090 = vunpack.c.l.b16 %v222
    %v1091 = vunpack.c.h.b16 %v222
    %v1092 = vunpack.c.l.b16 %v223
    %v1093 = vunpack.c.h.b16 %v223
    %v1094 = vunpack.c.l.b16 %v224
    %v1095 = vunpack.c.h.b16 %v224
    %v1096 = vunpack.c.l.b16 %v225
    %v1097 = vunpack.c.h.b16 %v225
    %v1098 = vunpack.c.l.b16 %v226
    %v1099 = vunpack.c.l.b16 %v227
    %v1100 = vunpack.c.h.b16 %v227
    %v1101 = vunpack.c.l.b16 %v228
    %v1102 = vunpack.c.h.b16 %v228
    %v1103 = vunpack.c.l.b16 %v229
    %v1104 = vunpack.c.h.b16 %v229
    %v1105 = vunpack.c.l.b16 %v230
    %v1106 = vunpack.c.h.b16 %v230
    %v1107 = vunpack.c.l.b16 %v231
    %v1108 = vunpack.c.h.b16 %v231
    %v1109 = vunpack.c.l.b16 %v232
    %v1110 = vunpack.c.h.b16 %v232
    %v1111 = vunpack.c.l.b16 %v233
    %v1112 = vunpack.c.h.b16 %v233
    %v1113 = vunpack.c.l.b16 %v234
    %v1114 = vunpack.c.h.b16 %v234
    %v1115 = vunpack.c.l.b16 %v235
    %v1116 = vunpack.c.h.b16 %v235
    %v1117 = vunpack.c.l.b16 %v236
    %v1118 = vunpack.c.h.b16 %v236
    %v1119 = vunpack.c.l.b16 %v237
    %v1120 = vunpack.c.h.b16 %v237
    %v1121 = vunpack.c.l.b16 %v238
    %v1122 = vunpack.c.h.b16 %v238
    %v1123 = vunpack.c.l.b16 %v239
    %v1124 = vunpack.c.h.b16 %v239
    %v1125 = vunpack.c.l.b16 %v240
    %v1126 = vunpack.c.h.b16 %v240
    %v1127 = vunpack.c.l.b16 %v241
    %v1128 = vunpack.c.h.b16 %v241
    %v1129 = vunpack.c.l.b16 %v242
    %v1130 = vunpack.c.h.b16 %v242
    %v1131 = vunpack.c.l.b16 %v243
    %v1132 = vunpack.c.h.b16 %v243
    %v1133 = vunpack.c.l.b16 %v244
    %v1134 = vunpack.c.h.b16 %v244
    %v1135 = vunpack.c.l.b16 %v245
    %v1136 = vunpack.c.l.b16 %v246
    %v1137 = vunpack.c.h.b16 %v246
    %v1138 = vunpack.c.l.b16 %v247
    %v1139 = vunpack.c.h.b16 %v247
    %v1140 = vunpack.c.l.b16 %v248
    %v1141 = vunpack.c.h.b16 %v248
    %v1142 = vunpack.c.l.b16 %v249
    %v1143 = vunpack.c.h.b16 %v249
    %v1144 = vunpack.c.l.b16 %v250
    %v1145 = vunpack.c.h.b16 %v250
    %v1146 = vunpack.c.l.b16 %v251
    %v1147 = vunpack.c.h.b16 %v251
    %v1148 = vunpack.c.l.b16 %v252
    %v1149 = vunpack.c.h.b16 %v252
    %v1150 = vunpack.c.l.b16 %v253
    %v1151 = vunpack.c.h.b16 %v253
    %v1152 = vunpack.c.l.b16 %v254
    %v1153 = vunpack.c.h.b16 %v254
    %v1154 = vunpack.c.l.b16 %v255
    %v1155 = vunpack.c.h.b16 %v255
    %v1156 = vunpack.c.l.b16 %v256
    %v1157 = vunpack.c.h.b16 %v256
    %v1158 = vunpack.c.l.b16 %v257
    %v1159 = vunpack.c.h.b16 %v257
    %v1160 = vunpack.c.l.b16 %v258
    %v1161 = vunpack.c.h.b16 %v258
    %v1162 = vunpack.c.l.b16 %v259
    %v1163 = vunpack.c.h.b16 %v259
    %v1164 = vunpack.c.l.b16 %v260
    %v1165 = vunpack.c.h.b16 %v260
    %v1166 = vunpack.c.l.b16 %v261
    %v1167 = vunpack.c.h.b16 %v261
    %v1168 = vunpack.c.l.b16 %v262
    %v1169 = vunpack.c.h.b16 %v262
    %v1170 = vunpack.c.l.b16 %v263
    %v1171 = vunpack.c.h.b16 %v263
    %v1172 = vunpack.c.l.b16 %v264
    %v1173 = vunpack.c.l.b16 %v265
    %v1174 = vunpack.c.h.b16 %v265
    %v1175 = vunpack.c.l.b16 %v266
    %v1176 = vunpack.c.h.b16 %v266
    %v1177 = vunpack.c.l.b16 %v267
    %v1178 = vunpack.c.h.b16 %v267
    %v1179 = vunpack.c.l.b16 %v268
    %v1180 = vunpack.c.h.b16 %v268
    %v1181 = vunpack.c.l.b16 %v269
    %v1182 = vunpack.c.h.b16 %v269
    %v1183 = vunpack.c.l.b16 %v270
    %v1184 = vunpack.c.h.b16 %v270
    %v1185 = vunpack.c.l.b16 %v271
    %v1186 = vunpack.c.h.b16 %v271
    %v1187 = vunpack.c.l.b16 %v272
    %v1188 = vunpack.c.h.b16 %v272
    %v1189 = vunpack.c.l.b16 %v273
    %v1190 = vunpack.c.h.b16 %v273
    %v1191 = vunpack.c.l.b16 %v274
    %v1192 = vunpack.c.h.b16 %v274
    %v1193 = vunpack.c.l.b16 %v275
    %v1194 = vunpack.c.h.b16 %v275
    %v1195 = vunpack.c.l.b16 %v276
    %v1196 = vunpack.c.h.b16 %v276
    %v1197 = vunpack.c.l.b16 %v277
    %v1198 = vunpack.c.h.b16 %v277
    %v1199 = vunpack.c.l.b16 %v278
    %v1200 = vunpack.c.h.b16 %v278
    %v1201 = vunpack.c.l.b16 %v279
    %v1202 = vunpack.c.h.b16 %v279
    %v1203 = vunpack.c.l.b16 %v280
    %v1204 = vunpack.c.h.b16 %v280
    %v1205 = vunpack.c.l.b16 %v281
    %v1206 = vunpack.c.h.b16 %v281
    %v1207 = vunpack.c.l.b16 %v282
    %v1208 = vunpack.c.h.b16 %v282
    %v1209 = vunpack.c.l.b16 %v283
    %v1210 = vunpack.c.l.b16 %v284
    %v1211 = vunpack.c.h.b16 %v284
    %v1212 = vunpack.c.l.b16 %v285
    %v1213 = vunpack.c.h.b16 %v285
    %v1214 = vunpack.c.l.b16 %v286
    %v1215 = vunpack.c.h.b16 %v286
    %v1216 = vunpack.c.l.b16 %v287
    %v1217 = vunpack.c.h.b16 %v287
    %v1218 = vunpack.c.l.b16 %v288
    %v1219 = vunpack.c.h.b16 %v288
    %v1220 = vunpack.c.l.b16 %v289
    %v1221 = vunpack.c.h.b16 %v289
    %v1222 = vunpack.c.l.b16 %v290
    %v1223 = vunpack.c.h.b16 %v290
    %v1224 = vunpack.c.l.b16 %v291
    %v1225 = vunpack.c.h.b16 %v291
    %v1226 = vunpack.c.l.b16 %v292
    %v1227 = vunpack.c.h.b16 %v292
    %v1228 = vunpack.c.l.b16 %v293
    %v1229 = vunpack.c.h.b16 %v293
    %v1230 = vunpack.c.l.b16 %v294
    %v1231 = vunpack.c.h.b16 %v294
    %v1232 = vunpack.c.l.b16 %v295
    %v1233 = vunpack.c.h.b16 %v295
    %v1234 = vunpack.c.l.b16 %v296
    %v1235 = vunpack.c.h.b16 %v296
    %v1236 = vunpack.c.l.b16 %v297
    %v1237 = vunpack.c.h.b16 %v297
    %v1238 = vunpack.c.l.b16 %v298
    %v1239 = vunpack.c.h.b16 %v298
    %v1240 = vunpack.c.l.b16 %v299
    %v1241 = vunpack.c.h.b16 %v299
    %v1242 = vunpack.c.l.b16 %v300
    %v1243 = vunpack.c.h.b16 %v300
    %v1244 = vunpack.c.l.b16 %v301
    %v1245 = vunpack.c.h.b16 %v301
    %v1246 = vunpack.c.l.b16 %v302
    %v1247 = vunpack.c.l.b16 %v303
    %v1248 = vunpack.c.h.b16 %v303
    %v1249 = vunpack.c.l.b16 %v304
    %v1250 = vunpack.c.h.b16 %v304
    %v1251 = vunpack.c.l.b16 %v305
    %v1252 = vunpack.c.h.b16 %v305
    %v1253 = vunpack.c.l.b16 %v306
    %v1254 = vunpack.c.h.b16 %v306
    %v1255 = vunpack.c.l.b16 %v307
    %v1256 = vunpack.c.h.b16 %v307
    %v1257 = vunpack.c.l.b16 %v308
    %v1258 = vunpack.c.h.b16 %v308
    %v1259 = vunpack.c.l.b16 %v309
    %v1260 = vunpack.c.h.b16 %v309
    %v1261 = vunpack.c.l.b16 %v310
    %v1262 = vunpack.c.h.b16 %v310
    %v1263 = vunpack.c.l.b16 %v311
    %v1264 = vunpack.c.h.b16 %v311
    %v1265 = vunpack.c.l.b16 %v312
    %v1266 = vunpack.c.h.b16 %v312
    %v1267 = vunpack.c.l.b16 %v313
    %v1268 = vunpack.c.h.b16 %v313
    %v1269 = vunpack.c.l.b16 %v314
    %v1270 = vunpack.c.h.b16 %v314
    %v1271 = vunpack.c.l.b16 %v315
    %v1272 = vunpack.c.h.b16 %v315
    %v1273 = vunpack.c.l.b16 %v316
    %v1274 = vunpack.c.h.b16 %v316
    %v1275 = vunpack.c.l.b16 %v317
    %v1276 = vunpack.c.h.b16 %v317
    %v1277 = vunpack.c.l.b16 %v318
    %v1278 = vunpack.c.h.b16 %v318
    %v1279 = vunpack.c.l.b16 %v319
    %v1280 = vunpack.c.h.b16 %v319
    %v1281 = vunpack.c.l.b16 %v320
    %v1282 = vunpack.c.h.b16 %v320
    %v1283 = vunpack.c.l.b16 %v321
    %v1284 = vunpack.c.l.b16 %v322
    %v1285 = vunpack.c.h.b16 %v322
    %v1286 = vunpack.c.l.b16 %v323
    %v1287 = vunpack.c.h.b16 %v323
    %v1288 = vunpack.c.l.b16 %v324
    %v1289 = vunpack.c.h.b16 %v324
    %v1290 = vunpack.c.l.b16 %v325
    %v1291 = vunpack.c.h.b16 %v325
    %v1292 = vunpack.c.l.b16 %v326
    %v1293 = vunpack.c.h.b16 %v326
    %v1294 = vunpack.c.l.b16 %v327
    %v1295 = vunpack.c.h.b16 %v327
    %v1296 = vunpack.c.l.b16 %v328
    %v1297 = vunpack.c.h.b16 %v328
    %v1298 = vunpack.c.l.b16 %v329
    %v1299 = vunpack.c.h.b16 %v329
    %v1300 = vunpack.c.l.b16 %v330
    %v1301 = vunpack.c.h.b16 %v330
    %v1302 = vunpack.c.l.b16 %v331
    %v1303 = vunpack.c.h.b16 %v331
    %v1304 = vunpack.c.l.b16 %v332
    %v1305 = vunpack.c.h.b16 %v332
    %v1306 = vunpack.c.l.b16 %v333
    %v1307 = vunpack.c.h.b16 %v333
    %v1308 = vunpack.c.l.b16 %v334
    %v1309 = vunpack.c.h.b16 %v334
    %v1310 = vunpack.c.l.b16 %v335
    %v1311 = vunpack.c.h.b16 %v335
    %v1312 = vunpack.c.l.b16 %v336
    %v1313 = vunpack.c.h.b16 %v336
    %v1314 = vunpack.c.l.b16 %v337
    %v1315 = vunpack.c.h.b16 %v337
    %v1316 = vunpack.c.l.b16 %v338
    %v1317 = vunpack.c.h.b16 %v338
    %v1318 = vunpack.c.l.b16 %v339
    %v1319 = vunpack.c.h.b16 %v339
    %v1320 = vunpack.c.l.b16 %v340
    %v1321 = vpack.c.b16 %v766, %v729
    %v1322 = vpack.c.b16 %v767, %v730
    %v1323 = vpack.c.b16 %v768, %v731
    %v1324 = vpack.c.b16 %v769, %v732
    %v1325 = vpack.c.b16 %v770, %v733
    %v1326 = vpack.c.b16 %v771, %v734
    %v1327 = vpack.c.b16 %v772, %v735
    %v1328 = vpack.c.b16 %v773, %v736
    %v1329 = vpack.c.b16 %v774, %v737
    %v1330 = vpack.c.b16 %v775, %v738
    %v1331 = vpack.c.b16 %v776, %v739
    %v1332 = vpack.c.b16 %v777, %v740
    %v1333 = vpack.c.b16 %v778, %v741
    %v1334 = vpack.c.b16 %v779, %v742
    %v1335 = vpack.c.b16 %v780, %v743
    %v1336 = vpack.c.b16 %v781, %v744
    %v1337 = vpack.c.b16 %v782, %v745
    %v1338 = vpack.c.b16 %v783, %v746
    %v1339 = vpack.c.b16 %v784, %v747
    %v1340 = vpack.c.b16 %v785, %v748
    %v1341 = vpack.c.b16 %v786, %v749
    %v1342 = vpack.c.b16 %v787, %v750
    %v1343 = vpack.c.b16 %v788, %v751
    %v1344 = vpack.c.b16 %v789, %v752
    %v1345 = vpack.c.b16 %v790, %v753
    %v1346 = vpack.c.b16 %v791, %v754
    %v1347 = vpack.c.b16 %v792, %v755
    %v1348 = vpack.c.b16 %v793, %v756
    %v1349 = vpack.c.b16 %v794, %v757
    %v1350 = vpack.c.b16 %v795, %v758
    %v1351 = vpack.c.b16 %v796, %v759
    %v1352 = vpack.c.b16 %v797, %v760
    %v1353 = vpack.c.b16 %v798, %v761
    %v1354 = vpack.c.b16 %v799, %v762
    %v1355 = vpack.c.b16 %v800, %v763
    %v1356 = vpack.c.b16 %v801, %v764
    %v1357 = vpack.c.b16 %v802, %v765
    %v1358 = vpack.c.b16 %v840, %v803
    %v1359 = vpack.c.b16 %v841, %v804
    %v1360 = vpack.c.b16 %v842, %v805
    %v1361 = vpack.c.b16 %v843, %v806
    %v1362 = vpack.c.b16 %v844, %v807
    %v1363 = vpack.c.b16 %v845, %v808
    %v1364 = vpack.c.b16 %v846, %v809
    %v1365 = vpack.c.b16 %v847, %v810
    %v1366 = vpack.c.b16 %v848, %v811
    %v1367 = vpack.c.b16 %v849, %v812
    %v1368 = vpack.c.b16 %v850, %v813
    %v1369 = vpack.c.b16 %v851, %v814
    %v1370 = vpack.c.b16 %v852, %v815
    %v1371 = vpack.c.b16 %v853, %v816
    %v1372 = vpack.c.b16 %v854, %v817
    %v1373 = vpack.c.b16 %v855, %v818
    %v1374 = vpack.c.b16 %v856, %v819
    %v1375 = vpack.c.b16 %v857, %v820
    %v1376 = vpack.c.b16 %v858, %v821
    %v1377 = vpack.c.b16 %v859, %v822
    %v1378 = vpack.c.b16 %v860, %v823
    %v1379 = vpack.c.b16 %v861, %v824
    %v1380 = vpack.c.b16 %v862, %v825
    %v1381 = vpack.c.b16 %v863, %v826
    %v1382 = vpack.c.b16 %v864, %v827
    %v1383 = vpack.c.b16 %v865, %v828
    %v1384 = vpack.c.b16 %v866, %v829
    %v1385 = vpack.c.b16 %v867, %v830
    %v1386 = vpack.c.b16 %v868, %v831
    %v1387 = vpack.c.b16 %v869, %v832
    %v1388 = vpack.c.b16 %v870, %v833
    %v1389 = vpack.c.b16 %v871, %v834
    %v1390 = vpack.c.b16 %v872, %v835
    %v1391 = vpack.c.b16 %v873, %v836
    %v1392 = vpack.c.b16 %v874, %v837
    %v1393 = vpack.c.b16 %v875, %v838
    %v1394 = vpack.c.b16 %v876, %v839
    %v1395 = vpack.c.b16 %v914, %v877
    %v1396 = vpack.c.b16 %v915, %v878
    %v1397 = vpack.c.b16 %v916, %v879
    %v1398 = vpack.c.b16 %v917, %v880
    %v1399 = vpack.c.b16 %v918, %v881
    %v1400 = vpack.c.b16 %v919, %v882
    %v1401 = vpack.c.b16 %v920, %v883
    %v1402 = vpack.c.b16 %v921, %v884
    %v1403 = vpack.c.b16 %v922, %v885
    %v1404 = vpack.c.b16 %v923, %v886
    %v1405 = vpack.c.b16 %v924, %v887
    %v1406 = vpack.c.b16 %v925, %v888
    %v1407 = vpack.c.b16 %v926, %v889
    %v1408 = vpack.c.b16 %v927, %v890
    %v1409 = vpack.c.b16 %v928, %v891
    %v1410 = vpack.c.b16 %v929, %v892
    %v1411 = vpack.c.b16 %v930, %v893
    %v1412 = vpack.c.b16 %v931, %v894
    %v1413 = vpack.c.b16 %v932, %v895
    %v1414 = vpack.c.b16 %v933, %v896
    %v1415 = vpack.c.b16 %v934, %v897
    %v1416 = vpack.c.b16 %v935, %v898
    %v1417 = vpack.c.b16 %v936, %v899
    %v1418 = vpack.c.b16 %v937, %v900
    %v1419 = vpack.c.b16 %v938, %v901
    %v1420 = vpack.c.b16 %v939, %v902
    %v1421 = vpack.c.b16 %v940, %v903
    %v1422 = vpack.c.b16 %v941, %v904
    %v1423 = vpack.c.b16 %v942, %v905
    %v1424 = vpack.c.b16 %v943, %v906
    %v1425 = vpack.c.b16 %v944, %v907
    %v1426 = vpack.c.b16 %v945, %v908
    %v1427 = vpack.c.b16 %v946, %v909
    %v1428 = vpack.c.b16 %v947, %v910
    %v1429 = vpack.c.b16 %v948, %v911
    %v1430 = vpack.c.b16 %v949, %v912
    %v1431 = vpack.c.b16 %v950, %v913
    %v1432 = vpack.c.b16 %v988, %v951
    %v1433 = vpack.c.b16 %v989, %v952
    %v1434 = vpack.c.b16 %v990, %v953
    %v1435 = vpack.c.b16 %v991, %v954
    %v1436 = vpack.c.b16 %v992, %v955
    %v1437 = vpack.c.b16 %v993, %v956
    %v1438 = vpack.c.b16 %v994, %v957
    %v1439 = vpack.c.b16 %v995, %v958
    %v1440 = vpack.c.b16 %v996, %v959
    %v1441 = vpack.c.b16 %v997, %v960
    %v1442 = vpack.c.b16 %v998, %v961
    %v1443 = vpack.c.b16 %v999, %v962
    %v1444 = vpack.c.b16 %v1000, %v963
    %v1445 = vpack.c.b16 %v1001, %v964
    %v1446 = vpack.c.b16 %v1002, %v965
    %v1447 = vpack.c.b16 %v1003, %v966
    %v1448 = vpack.c.b16 %v1004, %v967
    %v1449 = vpack.c.b16 %v1005, %v968
    %v1450 = vpack.c.b16 %v1006, %v969
    %v1451 = vpack.c.b16 %v1007, %v970
    %v1452 = vpack.c.b16 %v1008, %v971
    %v1453 = vpack.c.b16 %v1009, %v972
    %v1454 = vpack.c.b16 %v1010, %v973
    %v1455 = vpack.c.b16 %v1011, %v974
    %v1456 = vpack.c.b16 %v1012, %v975
    %v1457 = vpack.c.b16 %v1013, %v976
    %v1458 = vpack.c.b16 %v1014, %v977
    %v1459 = vpack.c.b16 %v1015, %v978
    %v1460 = vpack.c.b16 %v1016, %v979
    %v1461 = vpack.c.b16 %v1017, %v980
    %v1462 = vpack.c.b16 %v1018, %v981
    %v1463 = vpack.c.b16 %v1019, %v982
    %v1464 = vpack.c.b16 %v1020, %v983
    %v1465 = vpack.c.b16 %v1021, %v984
    %v1466 = vpack.c.b16 %v1022, %v985
    %v1467 = vpack.c.b16 %v1023, %v986
    %v1468 = vpack.c.b16 %v1024, %v987
    %v1469 = vpack.c.b16 %v1062, %v1025
    %v1470 = vpack.c.b16 %v1063, %v1026
    %v1471 = vpack.c.b16 %v1064, %v1027
    %v1472 = vpack.c.b16 %v1065, %v1028
    %v1473 = vpack.c.b16 %v1066, %v1029
    %v1474 = vpack.c.b16 %v1067, %v1030
    %v1475 = vpack.c.b16 %v1068, %v1031
    %v1476 = vpack.c.b16 %v1069, %v1032
    %v1477 = vpack.c.b16 %v1070, %v1033
    %v1478 = vpack.c.b16 %v1071, %v1034
    %v1479 = vpack.c.b16 %v1072, %v1035
    %v1480 = vpack.c.b16 %v1073, %v1036
    %v1481 = vpack.c.b16 %v1074, %v1037
    %v1482 = vpack.c.b16 %v1075, %v1038
    %v1483 = vpack.c.b16 %v1076, %v1039
    %v1484 = vpack.c.b16 %v1077, %v1040
    %v1485 = vpack.c.b16 %v1078, %v1041
    %v1486 = vpack.c.b16 %v1079, %v1042
    %v1487 = vpack.c.b16 %v1080, %v1043
    %v1488 = vpack.c.b16 %v1081, %v1044
    %v1489 = vpack.c.b16 %v1082, %v1045
    %v1490 = vpack.c.b16 %v1083, %v1046
    %v1491 = vpack.c.b16 %v1084, %v1047
    %v1492 = vpack.c.b16 %v1085, %v1048
    %v1493 = vpack.c.b16 %v1086, %v1049
    %v1494 = vpack.c.b16 %v1087, %v1050
    %v1495 = vpack.c.b16 %v1088, %v1051
    %v1496 = vpack.c.b16 %v1089, %v1052
    %v1497 = vpack.c.b16 %v1090, %v1053
    %v1498 = vpack.c.b16 %v1091, %v1054
    %v1499 = vpack.c.b16 %v1092, %v1055
    %v1500 = vpack.c.b16 %v1093, %v1056
    %v1501 = vpack.c.b16 %v1094, %v1057
    %v1502 = vpack.c.b16 %v1095, %v1058
    %v1503 = vpack.c.b16 %v1096, %v1059
    %v1504 = vpack.c.b16 %v1097, %v1060
    %v1505 = vpack.c.b16 %v1098, %v1061
    %v1506 = vpack.c.b16 %v1136, %v1099
    %v1507 = vpack.c.b16 %v1137, %v1100
    %v1508 = vpack.c.b16 %v1138, %v1101
    %v1509 = vpack.c.b16 %v1139, %v1102
    %v1510 = vpack.c.b16 %v1140, %v1103
    %v1511 = vpack.c.b16 %v1141, %v1104
    %v1512 = vpack.c.b16 %v1142, %v1105
    %v1513 = vpack.c.b16 %v1143, %v1106
    %v1514 = vpack.c.b16 %v1144, %v1107
    %v1515 = vpack.c.b16 %v1145, %v1108
    %v1516 = vpack.c.b16 %v1146, %v1109
    %v1517 = vpack.c.b16 %v1147, %v1110
    %v1518 = vpack.c.b16 %v1148, %v1111
    %v1519 = vpack.c.b16 %v1149, %v1112
    %v1520 = vpack.c.b16 %v1150, %v1113
    %v1521 = vpack.c.b16 %v1151, %v1114
    %v1522 = vpack.c.b16 %v1152, %v1115
    %v1523 = vpack.c.b16 %v1153, %v1116
    %v1524 = vpack.c.b16 %v1154, %v1117
    %v1525 = vpack.c.b16 %v1155, %v1118
    %v1526 = vpack.c.b16 %v1156, %v1119
    %v1527 = vpack.c.b16 %v1157, %v1120
    %v1528 = vpack.c.b16 %v1158, %v1121
    %v1529 = vpack.c.b16 %v1159, %v1122
    %v1530 = vpack.c.b16 %v1160, %v1123
    %v1531 = vpack.c.b16 %v1161, %v1124
    %v1532 = vpack.c.b16 %v1162, %v1125
    %v1533 = vpack.c.b16 %v1163, %v1126
    %v1534 = vpack.c.b16 %v1164, %v1127
    %v1535 = vpack.c.b16 %v1165, %v1128
    %v1536 = vpack.c.b16 %v1166, %v1129
    %v1537 = vpack.c.b16 %v1167, %v1130
    %v1538 = vpack.c.b16 %v1168, %v1131
    %v1539 = vpack.c.b16 %v1169, %v1132
    %v1540 = vpack.c.b16 %v1170, %v1133
    %v1541 = vpack.c.b16 %v1171, %v1134
    %v1542 = vpack.c.b16 %v1172, %v1135
    %v1543 = vpack.c.b16 %v1210, %v1173
    %v1544 = vpack.c.b16 %v1211, %v1174
    %v1545 = vpack.c.b16 %v1212, %v1175
    %v1546 = vpack.c.b16 %v1213, %v1176
    %v1547 = vpack.c.b16 %v1214, %v1177
    %v1548 = vpack.c.b16 %v1215, %v1178
    %v1549 = vpack.c.b16 %v1216, %v1179
    %v1550 = vpack.c.b16 %v1217, %v1180
    %v1551 = vpack.c.b16 %v1218, %v1181
    %v1552 = vpack.c.b16 %v1219, %v1182
    %v1553 = vpack.c.b16 %v1220, %v1183
    %v1554 = vpack.c.b16 %v1221, %v1184
    %v1555 = vpack.c.b16 %v1222, %v1185
    %v1556 = vpack.c.b16 %v1223, %v1186
    %v1557 = vpack.c.b16 %v1224, %v1187
    %v1558 = vpack.c.b16 %v1225, %v1188
    %v1559 = vpack.c.b16 %v1226, %v1189
    %v1560 = vpack.c.b16 %v1227, %v1190
    %v1561 = vpack.c.b16 %v1228, %v1191
    %v1562 = vpack.c.b16 %v1229, %v1192
    %v1563 = vpack.c.b16 %v1230, %v1193
    %v1564 = vpack.c.b16 %v1231, %v1194
    %v1565 = vpack.c.b16 %v1232, %v1195
    %v1566 = vpack.c.b16 %v1233, %v1196
    %v1567 = vpack.c.b16 %v1234, %v1197
    %v1568 = vpack.c.b16 %v1235, %v1198
    %v1569 = vpack.c.b16 %v1236, %v1199
    %v1570 = vpack.c.b16 %v1237, %v1200
    %v1571 = vpack.c.b16 %v1238, %v1201
    %v1572 = vpack.c.b16 %v1239, %v1202
    %v1573 = vpack.c.b16 %v1240, %v1203
    %v1574 = vpack.c.b16 %v1241, %v1204
    %v1575 = vpack.c.b16 %v1242, %v1205
    %v1576 = vpack.c.b16 %v1243, %v1206
    %v1577 = vpack.c.b16 %v1244, %v1207
    %v1578 = vpack.c.b16 %v1245, %v1208
    %v1579 = vpack.c.b16 %v1246, %v1209
    %v1580 = vpack.c.b16 %v1284, %v1247
    %v1581 = vpack.c.b16 %v1285, %v1248
    %v1582 = vpack.c.b16 %v1286, %v1249
    %v1583 = vpack.c.b16 %v1287, %v1250
    %v1584 = vpack.c.b16 %v1288, %v1251
    %v1585 = vpack.c.b16 %v1289, %v1252
    %v1586 = vpack.c.b16 %v1290, %v1253
    %v1587 = vpack.c.b16 %v1291, %v1254
    %v1588 = vpack.c.b16 %v1292, %v1255
    %v1589 = vpack.c.b16 %v1293, %v1256
    %v1590 = vpack.c.b16 %v1294, %v1257
    %v1591 = vpack.c.b16 %v1295, %v1258
    %v1592 = vpack.c.b16 %v1296, %v1259
    %v1593 = vpack.c.b16 %v1297, %v1260
    %v1594 = vpack.c.b16 %v1298, %v1261
    %v1595 = vpack.c.b16 %v1299, %v1262
    %v1596 = vpack.c.b16 %v1300, %v1263
    %v1597 = vpack.c.b16 %v1301, %v1264
    %v1598 = vpack.c.b16 %v1302, %v1265
    %v1599 = vpack.c.b16 %v1303, %v1266
    %v1600 = vpack.c.b16 %v1304, %v1267
    %v1601 = vpack.c.b16 %v1305, %v1268
    %v1602 = vpack.c.b16 %v1306, %v1269
    %v1603 = vpack.c.b16 %v1307, %v1270
    %v1604 = vpack.c.b16 %v1308, %v1271
    %v1605 = vpack.c.b16 %v1309, %v1272
    %v1606 = vpack.c.b16 %v1310, %v1273
    %v1607 = vpack.c.b16 %v1311, %v1274
    %v1608 = vpack.c.b16 %v1312, %v1275
    %v1609 = vpack.c.b16 %v1313, %v1276
    %v1610 = vpack.c.b16 %v1314, %v1277
    %v1611 = vpack.c.b16 %v1315, %v1278
    %v1612 = vpack.c.b16 %v1316, %v1279
    %v1613 = vpack.c.b16 %v1317, %v1280
    %v1614 = vpack.c.b16 %v1318, %v1281
    %v1615 = vpack.c.b16 %v1319, %v1282
    %v1616 = vpack.c.b16 %v1320, %v1283
    %1913 = vmatpush.bf16.msra.mxu0 %v1580
    %1914 = vmatpush.bf16.msra.mxu0 %v1543
    %1915 = vmatpush.bf16.msra.mxu0 %v1506
    %1916 = vmatpush.bf16.msra.mxu0 %v1469
    %1917 = vmatpush.bf16.msra.mxu0 %v1432
    %1918 = vmatpush.bf16.msra.mxu0 %v1395
    %1919 = vmatpush.bf16.msra.mxu0 %v1358
    %1920 = vmatpush.bf16.msra.mxu0 %v1321
    %1921 = vmatmul.bf16.gmra.mxu0 %v36
    %v1922 = vpop.f32.mrf.mxu0
    %v1923 = vadd.f32 %v351, %v1922
    %v1924 = vpop.f32.mrf.mxu0
    %1925 = vdwg.mxu0
    %1926 = vmatpush.bf16.msra.mxu0 %v1581
    %1927 = vmatpush.bf16.msra.mxu0 %v1544
    %1928 = vmatpush.bf16.msra.mxu0 %v1507
    %1929 = vmatpush.bf16.msra.mxu0 %v1470
    %1930 = vmatpush.bf16.msra.mxu0 %v1433
    %1931 = vmatpush.bf16.msra.mxu0 %v1396
    %1932 = vmatpush.bf16.msra.mxu0 %v1359
    %1933 = vmatpush.bf16.msra.mxu0 %v1322
    %1934 = vmatmul.bf16.gmra.mxu0 %v36
    %v1935 = vpop.f32.mrf.mxu0
    %v1936 = vadd.f32 %v352, %v1935
    %v1937 = vpop.f32.mrf.mxu0
    %1938 = vdwg.mxu0
    %1939 = vmatpush.bf16.msra.mxu0 %v1582
    %1940 = vmatpush.bf16.msra.mxu0 %v1545
    %1941 = vmatpush.bf16.msra.mxu0 %v1508
    %1942 = vmatpush.bf16.msra.mxu0 %v1471
    %1943 = vmatpush.bf16.msra.mxu0 %v1434
    %1944 = vmatpush.bf16.msra.mxu0 %v1397
    %1945 = vmatpush.bf16.msra.mxu0 %v1360
    %1946 = vmatpush.bf16.msra.mxu0 %v1323
    %1947 = vmatmul.bf16.gmra.mxu0 %v36
    %v1948 = vpop.f32.mrf.mxu0
    %v1949 = vadd.f32 %v353, %v1948
    %v1950 = vpop.f32.mrf.mxu0
    %1951 = vdwg.mxu0
    %1952 = vmatpush.bf16.msra.mxu0 %v1583
    %1953 = vmatpush.bf16.msra.mxu0 %v1546
    %1954 = vmatpush.bf16.msra.mxu0 %v1509
    %1955 = vmatpush.bf16.msra.mxu0 %v1472
    %1956 = vmatpush.bf16.msra.mxu0 %v1435
    %1957 = vmatpush.bf16.msra.mxu0 %v1398
    %1958 = vmatpush.bf16.msra.mxu0 %v1361
    %1959 = vmatpush.bf16.msra.mxu0 %v1324
    %1960 = vmatmul.bf16.gmra.mxu0 %v36
    %v1961 = vpop.f32.mrf.mxu0
    %v1962 = vadd.f32 %v354, %v1961
    %v1963 = vpop.f32.mrf.mxu0
    %1964 = vdwg.mxu0
    %1965 = vmatpush.bf16.msra.mxu0 %v1584
    %1966 = vmatpush.bf16.msra.mxu0 %v1547
    %1967 = vmatpush.bf16.msra.mxu0 %v1510
    %1968 = vmatpush.bf16.msra.mxu0 %v1473
    %1969 = vmatpush.bf16.msra.mxu0 %v1436
    %1970 = vmatpush.bf16.msra.mxu0 %v1399
    %1971 = vmatpush.bf16.msra.mxu0 %v1362
    %1972 = vmatpush.bf16.msra.mxu0 %v1325
    %1973 = vmatmul.bf16.gmra.mxu0 %v36
    %v1974 = vpop.f32.mrf.mxu0
    %v1975 = vadd.f32 %v355, %v1974
    %v1976 = vpop.f32.mrf.mxu0
    %1977 = vdwg.mxu0
    %1978 = vmatpush.bf16.msra.mxu0 %v1585
    %1979 = vmatpush.bf16.msra.mxu0 %v1548
    %1980 = vmatpush.bf16.msra.mxu0 %v1511
    %1981 = vmatpush.bf16.msra.mxu0 %v1474
    %1982 = vmatpush.bf16.msra.mxu0 %v1437
    %1983 = vmatpush.bf16.msra.mxu0 %v1400
    %1984 = vmatpush.bf16.msra.mxu0 %v1363
    %1985 = vmatpush.bf16.msra.mxu0 %v1326
    %1986 = vmatmul.bf16.gmra.mxu0 %v36
    %v1987 = vpop.f32.mrf.mxu0
    %v1988 = vadd.f32 %v356, %v1987
    %v1989 = vpop.f32.mrf.mxu0
    %1990 = vdwg.mxu0
    %1991 = vmatpush.bf16.msra.mxu0 %v1586
    %1992 = vmatpush.bf16.msra.mxu0 %v1549
    %1993 = vmatpush.bf16.msra.mxu0 %v1512
    %1994 = vmatpush.bf16.msra.mxu0 %v1475
    %1995 = vmatpush.bf16.msra.mxu0 %v1438
    %1996 = vmatpush.bf16.msra.mxu0 %v1401
    %1997 = vmatpush.bf16.msra.mxu0 %v1364
    %1998 = vmatpush.bf16.msra.mxu0 %v1327
    %1999 = vmatmul.bf16.gmra.mxu0 %v36
    %v2000 = vpop.f32.mrf.mxu0
    %v2001 = vadd.f32 %v357, %v2000
    %v2002 = vpop.f32.mrf.mxu0
    %2003 = vdwg.mxu0
    %2004 = vmatpush.bf16.msra.mxu0 %v1587
    %2005 = vmatpush.bf16.msra.mxu0 %v1550
    %2006 = vmatpush.bf16.msra.mxu0 %v1513
    %2007 = vmatpush.bf16.msra.mxu0 %v1476
    %2008 = vmatpush.bf16.msra.mxu0 %v1439
    %2009 = vmatpush.bf16.msra.mxu0 %v1402
    %2010 = vmatpush.bf16.msra.mxu0 %v1365
    %2011 = vmatpush.bf16.msra.mxu0 %v1328
    %2012 = vmatmul.bf16.gmra.mxu0 %v36
    %v2013 = vpop.f32.mrf.mxu0
    %v2014 = vadd.f32 %v358, %v2013
    %v2015 = vpop.f32.mrf.mxu0
    %2016 = vdwg.mxu0
    %2017 = vmatpush.bf16.msra.mxu0 %v1588
    %2018 = vmatpush.bf16.msra.mxu0 %v1551
    %2019 = vmatpush.bf16.msra.mxu0 %v1514
    %2020 = vmatpush.bf16.msra.mxu0 %v1477
    %2021 = vmatpush.bf16.msra.mxu0 %v1440
    %2022 = vmatpush.bf16.msra.mxu0 %v1403
    %2023 = vmatpush.bf16.msra.mxu0 %v1366
    %2024 = vmatpush.bf16.msra.mxu0 %v1329
    %2025 = vmatmul.bf16.gmra.mxu0 %v36
    %v2026 = vpop.f32.mrf.mxu0
    %v2027 = vadd.f32 %v359, %v2026
    %v2028 = vpop.f32.mrf.mxu0
    %2029 = vdwg.mxu0
    %2030 = vmatpush.bf16.msra.mxu0 %v1589
    %2031 = vmatpush.bf16.msra.mxu0 %v1552
    %2032 = vmatpush.bf16.msra.mxu0 %v1515
    %2033 = vmatpush.bf16.msra.mxu0 %v1478
    %2034 = vmatpush.bf16.msra.mxu0 %v1441
    %2035 = vmatpush.bf16.msra.mxu0 %v1404
    %2036 = vmatpush.bf16.msra.mxu0 %v1367
    %2037 = vmatpush.bf16.msra.mxu0 %v1330
    %2038 = vmatmul.bf16.gmra.mxu0 %v36
    %v2039 = vpop.f32.mrf.mxu0
    %v2040 = vadd.f32 %v360, %v2039
    %v2041 = vpop.f32.mrf.mxu0
    %2042 = vdwg.mxu0
    %2043 = vmatpush.bf16.msra.mxu0 %v1590
    %2044 = vmatpush.bf16.msra.mxu0 %v1553
    %2045 = vmatpush.bf16.msra.mxu0 %v1516
    %2046 = vmatpush.bf16.msra.mxu0 %v1479
    %2047 = vmatpush.bf16.msra.mxu0 %v1442
    %2048 = vmatpush.bf16.msra.mxu0 %v1405
    %2049 = vmatpush.bf16.msra.mxu0 %v1368
    %2050 = vmatpush.bf16.msra.mxu0 %v1331
    %2051 = vmatmul.bf16.gmra.mxu0 %v36
    %v2052 = vpop.f32.mrf.mxu0
    %v2053 = vadd.f32 %v361, %v2052
    %v2054 = vpop.f32.mrf.mxu0
    %2055 = vdwg.mxu0
    %2056 = vmatpush.bf16.msra.mxu0 %v1591
    %2057 = vmatpush.bf16.msra.mxu0 %v1554
    %2058 = vmatpush.bf16.msra.mxu0 %v1517
    %2059 = vmatpush.bf16.msra.mxu0 %v1480
    %2060 = vmatpush.bf16.msra.mxu0 %v1443
    %2061 = vmatpush.bf16.msra.mxu0 %v1406
    %2062 = vmatpush.bf16.msra.mxu0 %v1369
    %2063 = vmatpush.bf16.msra.mxu0 %v1332
    %2064 = vmatmul.bf16.gmra.mxu0 %v36
    %v2065 = vpop.f32.mrf.mxu0
    %v2066 = vadd.f32 %v362, %v2065
    %v2067 = vpop.f32.mrf.mxu0
    %2068 = vdwg.mxu0
    %2069 = vmatpush.bf16.msra.mxu0 %v1592
    %2070 = vmatpush.bf16.msra.mxu0 %v1555
    %2071 = vmatpush.bf16.msra.mxu0 %v1518
    %2072 = vmatpush.bf16.msra.mxu0 %v1481
    %2073 = vmatpush.bf16.msra.mxu0 %v1444
    %2074 = vmatpush.bf16.msra.mxu0 %v1407
    %2075 = vmatpush.bf16.msra.mxu0 %v1370
    %2076 = vmatpush.bf16.msra.mxu0 %v1333
    %2077 = vmatmul.bf16.gmra.mxu0 %v36
    %v2078 = vpop.f32.mrf.mxu0
    %v2079 = vadd.f32 %v363, %v2078
    %v2080 = vpop.f32.mrf.mxu0
    %2081 = vdwg.mxu0
    %2082 = vmatpush.bf16.msra.mxu0 %v1593
    %2083 = vmatpush.bf16.msra.mxu0 %v1556
    %2084 = vmatpush.bf16.msra.mxu0 %v1519
    %2085 = vmatpush.bf16.msra.mxu0 %v1482
    %2086 = vmatpush.bf16.msra.mxu0 %v1445
    %2087 = vmatpush.bf16.msra.mxu0 %v1408
    %2088 = vmatpush.bf16.msra.mxu0 %v1371
    %2089 = vmatpush.bf16.msra.mxu0 %v1334
    %2090 = vmatmul.bf16.gmra.mxu0 %v36
    %v2091 = vpop.f32.mrf.mxu0
    %v2092 = vadd.f32 %v364, %v2091
    %v2093 = vpop.f32.mrf.mxu0
    %2094 = vdwg.mxu0
    %2095 = vmatpush.bf16.msra.mxu0 %v1594
    %2096 = vmatpush.bf16.msra.mxu0 %v1557
    %2097 = vmatpush.bf16.msra.mxu0 %v1520
    %2098 = vmatpush.bf16.msra.mxu0 %v1483
    %2099 = vmatpush.bf16.msra.mxu0 %v1446
    %2100 = vmatpush.bf16.msra.mxu0 %v1409
    %2101 = vmatpush.bf16.msra.mxu0 %v1372
    %2102 = vmatpush.bf16.msra.mxu0 %v1335
    %2103 = vmatmul.bf16.gmra.mxu0 %v36
    %v2104 = vpop.f32.mrf.mxu0
    %v2105 = vadd.f32 %v365, %v2104
    %v2106 = vpop.f32.mrf.mxu0
    %2107 = vdwg.mxu0
    %2108 = vmatpush.bf16.msra.mxu0 %v1595
    %2109 = vmatpush.bf16.msra.mxu0 %v1558
    %2110 = vmatpush.bf16.msra.mxu0 %v1521
    %2111 = vmatpush.bf16.msra.mxu0 %v1484
    %2112 = vmatpush.bf16.msra.mxu0 %v1447
    %2113 = vmatpush.bf16.msra.mxu0 %v1410
    %2114 = vmatpush.bf16.msra.mxu0 %v1373
    %2115 = vmatpush.bf16.msra.mxu0 %v1336
    %2116 = vmatmul.bf16.gmra.mxu0 %v36
    %v2117 = vpop.f32.mrf.mxu0
    %v2118 = vadd.f32 %v366, %v2117
    %v2119 = vpop.f32.mrf.mxu0
    %2120 = vdwg.mxu0
    %2121 = vmatpush.bf16.msra.mxu0 %v1596
    %2122 = vmatpush.bf16.msra.mxu0 %v1559
    %2123 = vmatpush.bf16.msra.mxu0 %v1522
    %2124 = vmatpush.bf16.msra.mxu0 %v1485
    %2125 = vmatpush.bf16.msra.mxu0 %v1448
    %2126 = vmatpush.bf16.msra.mxu0 %v1411
    %2127 = vmatpush.bf16.msra.mxu0 %v1374
    %2128 = vmatpush.bf16.msra.mxu0 %v1337
    %2129 = vmatmul.bf16.gmra.mxu0 %v36
    %v2130 = vpop.f32.mrf.mxu0
    %v2131 = vadd.f32 %v367, %v2130
    %v2132 = vpop.f32.mrf.mxu0
    %2133 = vdwg.mxu0
    %2134 = vmatpush.bf16.msra.mxu0 %v1597
    %2135 = vmatpush.bf16.msra.mxu0 %v1560
    %2136 = vmatpush.bf16.msra.mxu0 %v1523
    %2137 = vmatpush.bf16.msra.mxu0 %v1486
    %2138 = vmatpush.bf16.msra.mxu0 %v1449
    %2139 = vmatpush.bf16.msra.mxu0 %v1412
    %2140 = vmatpush.bf16.msra.mxu0 %v1375
    %2141 = vmatpush.bf16.msra.mxu0 %v1338
    %2142 = vmatmul.bf16.gmra.mxu0 %v36
    %v2143 = vpop.f32.mrf.mxu0
    %v2144 = vadd.f32 %v368, %v2143
    %v2145 = vpop.f32.mrf.mxu0
    %2146 = vdwg.mxu0
    %2147 = vmatpush.bf16.msra.mxu0 %v1598
    %2148 = vmatpush.bf16.msra.mxu0 %v1561
    %2149 = vmatpush.bf16.msra.mxu0 %v1524
    %2150 = vmatpush.bf16.msra.mxu0 %v1487
    %2151 = vmatpush.bf16.msra.mxu0 %v1450
    %2152 = vmatpush.bf16.msra.mxu0 %v1413
    %2153 = vmatpush.bf16.msra.mxu0 %v1376
    %2154 = vmatpush.bf16.msra.mxu0 %v1339
    %2155 = vmatmul.bf16.gmra.mxu0 %v36
    %v2156 = vpop.f32.mrf.mxu0
    %v2157 = vadd.f32 %v369, %v2156
    %v2158 = vpop.f32.mrf.mxu0
    %2159 = vdwg.mxu0
    %2160 = vmatpush.bf16.msra.mxu0 %v1599
    %2161 = vmatpush.bf16.msra.mxu0 %v1562
    %2162 = vmatpush.bf16.msra.mxu0 %v1525
    %2163 = vmatpush.bf16.msra.mxu0 %v1488
    %2164 = vmatpush.bf16.msra.mxu0 %v1451
    %2165 = vmatpush.bf16.msra.mxu0 %v1414
    %2166 = vmatpush.bf16.msra.mxu0 %v1377
    %2167 = vmatpush.bf16.msra.mxu0 %v1340
    %2168 = vmatmul.bf16.gmra.mxu0 %v36
    %v2169 = vpop.f32.mrf.mxu0
    %v2170 = vadd.f32 %v370, %v2169
    %v2171 = vpop.f32.mrf.mxu0
    %2172 = vdwg.mxu0
    %2173 = vmatpush.bf16.msra.mxu0 %v1600
    %2174 = vmatpush.bf16.msra.mxu0 %v1563
    %2175 = vmatpush.bf16.msra.mxu0 %v1526
    %2176 = vmatpush.bf16.msra.mxu0 %v1489
    %2177 = vmatpush.bf16.msra.mxu0 %v1452
    %2178 = vmatpush.bf16.msra.mxu0 %v1415
    %2179 = vmatpush.bf16.msra.mxu0 %v1378
    %2180 = vmatpush.bf16.msra.mxu0 %v1341
    %2181 = vmatmul.bf16.gmra.mxu0 %v36
    %v2182 = vpop.f32.mrf.mxu0
    %v2183 = vadd.f32 %v371, %v2182
    %v2184 = vpop.f32.mrf.mxu0
    %2185 = vdwg.mxu0
    %2186 = vmatpush.bf16.msra.mxu0 %v1601
    %2187 = vmatpush.bf16.msra.mxu0 %v1564
    %2188 = vmatpush.bf16.msra.mxu0 %v1527
    %2189 = vmatpush.bf16.msra.mxu0 %v1490
    %2190 = vmatpush.bf16.msra.mxu0 %v1453
    %2191 = vmatpush.bf16.msra.mxu0 %v1416
    %2192 = vmatpush.bf16.msra.mxu0 %v1379
    %2193 = vmatpush.bf16.msra.mxu0 %v1342
    %2194 = vmatmul.bf16.gmra.mxu0 %v36
    %v2195 = vpop.f32.mrf.mxu0
    %v2196 = vadd.f32 %v372, %v2195
    %v2197 = vpop.f32.mrf.mxu0
    %2198 = vdwg.mxu0
    %2199 = vmatpush.bf16.msra.mxu0 %v1602
    %2200 = vmatpush.bf16.msra.mxu0 %v1565
    %2201 = vmatpush.bf16.msra.mxu0 %v1528
    %2202 = vmatpush.bf16.msra.mxu0 %v1491
    %2203 = vmatpush.bf16.msra.mxu0 %v1454
    %2204 = vmatpush.bf16.msra.mxu0 %v1417
    %2205 = vmatpush.bf16.msra.mxu0 %v1380
    %2206 = vmatpush.bf16.msra.mxu0 %v1343
    %2207 = vmatmul.bf16.gmra.mxu0 %v36
    %v2208 = vpop.f32.mrf.mxu0
    %v2209 = vadd.f32 %v373, %v2208
    %v2210 = vpop.f32.mrf.mxu0
    %2211 = vdwg.mxu0
    %2212 = vmatpush.bf16.msra.mxu0 %v1603
    %2213 = vmatpush.bf16.msra.mxu0 %v1566
    %2214 = vmatpush.bf16.msra.mxu0 %v1529
    %2215 = vmatpush.bf16.msra.mxu0 %v1492
    %2216 = vmatpush.bf16.msra.mxu0 %v1455
    %2217 = vmatpush.bf16.msra.mxu0 %v1418
    %2218 = vmatpush.bf16.msra.mxu0 %v1381
    %2219 = vmatpush.bf16.msra.mxu0 %v1344
    %2220 = vmatmul.bf16.gmra.mxu0 %v36
    %v2221 = vpop.f32.mrf.mxu0
    %v2222 = vadd.f32 %v374, %v2221
    %v2223 = vpop.f32.mrf.mxu0
    %2224 = vdwg.mxu0
    %2225 = vmatpush.bf16.msra.mxu0 %v1604
    %2226 = vmatpush.bf16.msra.mxu0 %v1567
    %2227 = vmatpush.bf16.msra.mxu0 %v1530
    %2228 = vmatpush.bf16.msra.mxu0 %v1493
    %2229 = vmatpush.bf16.msra.mxu0 %v1456
    %2230 = vmatpush.bf16.msra.mxu0 %v1419
    %2231 = vmatpush.bf16.msra.mxu0 %v1382
    %2232 = vmatpush.bf16.msra.mxu0 %v1345
    %2233 = vmatmul.bf16.gmra.mxu0 %v36
    %v2234 = vpop.f32.mrf.mxu0
    %v2235 = vadd.f32 %v375, %v2234
    %v2236 = vpop.f32.mrf.mxu0
    %2237 = vdwg.mxu0
    %2238 = vmatpush.bf16.msra.mxu0 %v1605
    %2239 = vmatpush.bf16.msra.mxu0 %v1568
    %2240 = vmatpush.bf16.msra.mxu0 %v1531
    %2241 = vmatpush.bf16.msra.mxu0 %v1494
    %2242 = vmatpush.bf16.msra.mxu0 %v1457
    %2243 = vmatpush.bf16.msra.mxu0 %v1420
    %2244 = vmatpush.bf16.msra.mxu0 %v1383
    %2245 = vmatpush.bf16.msra.mxu0 %v1346
    %2246 = vmatmul.bf16.gmra.mxu0 %v36
    %v2247 = vpop.f32.mrf.mxu0
    %v2248 = vadd.f32 %v376, %v2247
    %v2249 = vpop.f32.mrf.mxu0
    %2250 = vdwg.mxu0
    %2251 = vmatpush.bf16.msra.mxu0 %v1606
    %2252 = vmatpush.bf16.msra.mxu0 %v1569
    %2253 = vmatpush.bf16.msra.mxu0 %v1532
    %2254 = vmatpush.bf16.msra.mxu0 %v1495
    %2255 = vmatpush.bf16.msra.mxu0 %v1458
    %2256 = vmatpush.bf16.msra.mxu0 %v1421
    %2257 = vmatpush.bf16.msra.mxu0 %v1384
    %2258 = vmatpush.bf16.msra.mxu0 %v1347
    %2259 = vmatmul.bf16.gmra.mxu0 %v36
    %v2260 = vpop.f32.mrf.mxu0
    %v2261 = vadd.f32 %v377, %v2260
    %v2262 = vpop.f32.mrf.mxu0
    %2263 = vdwg.mxu0
    %2264 = vmatpush.bf16.msra.mxu0 %v1607
    %2265 = vmatpush.bf16.msra.mxu0 %v1570
    %2266 = vmatpush.bf16.msra.mxu0 %v1533
    %2267 = vmatpush.bf16.msra.mxu0 %v1496
    %2268 = vmatpush.bf16.msra.mxu0 %v1459
    %2269 = vmatpush.bf16.msra.mxu0 %v1422
    %2270 = vmatpush.bf16.msra.mxu0 %v1385
    %2271 = vmatpush.bf16.msra.mxu0 %v1348
    %2272 = vmatmul.bf16.gmra.mxu0 %v36
    %v2273 = vpop.f32.mrf.mxu0
    %v2274 = vadd.f32 %v378, %v2273
    %v2275 = vpop.f32.mrf.mxu0
    %2276 = vdwg.mxu0
    %2277 = vmatpush.bf16.msra.mxu0 %v1608
    %2278 = vmatpush.bf16.msra.mxu0 %v1571
    %2279 = vmatpush.bf16.msra.mxu0 %v1534
    %2280 = vmatpush.bf16.msra.mxu0 %v1497
    %2281 = vmatpush.bf16.msra.mxu0 %v1460
    %2282 = vmatpush.bf16.msra.mxu0 %v1423
    %2283 = vmatpush.bf16.msra.mxu0 %v1386
    %2284 = vmatpush.bf16.msra.mxu0 %v1349
    %2285 = vmatmul.bf16.gmra.mxu0 %v36
    %v2286 = vpop.f32.mrf.mxu0
    %v2287 = vadd.f32 %v379, %v2286
    %v2288 = vpop.f32.mrf.mxu0
    %2289 = vdwg.mxu0
    %2290 = vmatpush.bf16.msra.mxu0 %v1609
    %2291 = vmatpush.bf16.msra.mxu0 %v1572
    %2292 = vmatpush.bf16.msra.mxu0 %v1535
    %2293 = vmatpush.bf16.msra.mxu0 %v1498
    %2294 = vmatpush.bf16.msra.mxu0 %v1461
    %2295 = vmatpush.bf16.msra.mxu0 %v1424
    %2296 = vmatpush.bf16.msra.mxu0 %v1387
    %2297 = vmatpush.bf16.msra.mxu0 %v1350
    %2298 = vmatmul.bf16.gmra.mxu0 %v36
    %v2299 = vpop.f32.mrf.mxu0
    %v2300 = vadd.f32 %v380, %v2299
    %v2301 = vpop.f32.mrf.mxu0
    %2302 = vdwg.mxu0
    %2303 = vmatpush.bf16.msra.mxu0 %v1610
    %2304 = vmatpush.bf16.msra.mxu0 %v1573
    %2305 = vmatpush.bf16.msra.mxu0 %v1536
    %2306 = vmatpush.bf16.msra.mxu0 %v1499
    %2307 = vmatpush.bf16.msra.mxu0 %v1462
    %2308 = vmatpush.bf16.msra.mxu0 %v1425
    %2309 = vmatpush.bf16.msra.mxu0 %v1388
    %2310 = vmatpush.bf16.msra.mxu0 %v1351
    %2311 = vmatmul.bf16.gmra.mxu0 %v36
    %v2312 = vpop.f32.mrf.mxu0
    %v2313 = vadd.f32 %v381, %v2312
    %v2314 = vpop.f32.mrf.mxu0
    %2315 = vdwg.mxu0
    %2316 = vmatpush.bf16.msra.mxu0 %v1611
    %2317 = vmatpush.bf16.msra.mxu0 %v1574
    %2318 = vmatpush.bf16.msra.mxu0 %v1537
    %2319 = vmatpush.bf16.msra.mxu0 %v1500
    %2320 = vmatpush.bf16.msra.mxu0 %v1463
    %2321 = vmatpush.bf16.msra.mxu0 %v1426
    %2322 = vmatpush.bf16.msra.mxu0 %v1389
    %2323 = vmatpush.bf16.msra.mxu0 %v1352
    %2324 = vmatmul.bf16.gmra.mxu0 %v36
    %v2325 = vpop.f32.mrf.mxu0
    %v2326 = vadd.f32 %v382, %v2325
    %v2327 = vpop.f32.mrf.mxu0
    %2328 = vdwg.mxu0
    %2329 = vmatpush.bf16.msra.mxu0 %v1612
    %2330 = vmatpush.bf16.msra.mxu0 %v1575
    %2331 = vmatpush.bf16.msra.mxu0 %v1538
    %2332 = vmatpush.bf16.msra.mxu0 %v1501
    %2333 = vmatpush.bf16.msra.mxu0 %v1464
    %2334 = vmatpush.bf16.msra.mxu0 %v1427
    %2335 = vmatpush.bf16.msra.mxu0 %v1390
    %2336 = vmatpush.bf16.msra.mxu0 %v1353
    %2337 = vmatmul.bf16.gmra.mxu0 %v36
    %v2338 = vpop.f32.mrf.mxu0
    %v2339 = vadd.f32 %v383, %v2338
    %v2340 = vpop.f32.mrf.mxu0
    %2341 = vdwg.mxu0
    %2342 = vmatpush.bf16.msra.mxu0 %v1613
    %2343 = vmatpush.bf16.msra.mxu0 %v1576
    %2344 = vmatpush.bf16.msra.mxu0 %v1539
    %2345 = vmatpush.bf16.msra.mxu0 %v1502
    %2346 = vmatpush.bf16.msra.mxu0 %v1465
    %2347 = vmatpush.bf16.msra.mxu0 %v1428
    %2348 = vmatpush.bf16.msra.mxu0 %v1391
    %2349 = vmatpush.bf16.msra.mxu0 %v1354
    %2350 = vmatmul.bf16.gmra.mxu0 %v36
    %v2351 = vpop.f32.mrf.mxu0
    %v2352 = vadd.f32 %v384, %v2351
    %v2353 = vpop.f32.mrf.mxu0
    %2354 = vdwg.mxu0
    %2355 = vmatpush.bf16.msra.mxu0 %v1614
    %2356 = vmatpush.bf16.msra.mxu0 %v1577
    %2357 = vmatpush.bf16.msra.mxu0 %v1540
    %2358 = vmatpush.bf16.msra.mxu0 %v1503
    %2359 = vmatpush.bf16.msra.mxu0 %v1466
    %2360 = vmatpush.bf16.msra.mxu0 %v1429
    %2361 = vmatpush.bf16.msra.mxu0 %v1392
    %2362 = vmatpush.bf16.msra.mxu0 %v1355
    %2363 = vmatmul.bf16.gmra.mxu0 %v36
    %v2364 = vpop.f32.mrf.mxu0
    %v2365 = vadd.f32 %v385, %v2364
    %v2366 = vpop.f32.mrf.mxu0
    %2367 = vdwg.mxu0
    %2368 = vmatpush.bf16.msra.mxu0 %v1615
    %2369 = vmatpush.bf16.msra.mxu0 %v1578
    %2370 = vmatpush.bf16.msra.mxu0 %v1541
    %2371 = vmatpush.bf16.msra.mxu0 %v1504
    %2372 = vmatpush.bf16.msra.mxu0 %v1467
    %2373 = vmatpush.bf16.msra.mxu0 %v1430
    %2374 = vmatpush.bf16.msra.mxu0 %v1393
    %2375 = vmatpush.bf16.msra.mxu0 %v1356
    %2376 = vmatmul.bf16.gmra.mxu0 %v36
    %v2377 = vpop.f32.mrf.mxu0
    %v2378 = vadd.f32 %v386, %v2377
    %v2379 = vpop.f32.mrf.mxu0
    %2380 = vdwg.mxu0
    %2381 = vmatpush.bf16.msra.mxu0 %v1616
    %2382 = vmatpush.bf16.msra.mxu0 %v1579
    %2383 = vmatpush.bf16.msra.mxu0 %v1542
    %2384 = vmatpush.bf16.msra.mxu0 %v1505
    %2385 = vmatpush.bf16.msra.mxu0 %v1468
    %2386 = vmatpush.bf16.msra.mxu0 %v1431
    %2387 = vmatpush.bf16.msra.mxu0 %v1394
    %2388 = vmatpush.bf16.msra.mxu0 %v1357
    %2389 = vmatmul.bf16.gmra.mxu0 %v36
    %v2390 = vpop.f32.mrf.mxu0
    %v2391 = vadd.f32 %v387, %v2390
    %v2392 = vpop.f32.mrf.mxu0
    %2393 = vdwg.mxu0
    %vm2394 = vcmask 1041408
    %v2395 = vsel %vm2394, %v1923, -inf
    %v2396 = vsel %vm2394, %v1936, -inf
    %v2397 = vsel %vm2394, %v1949, -inf
    %v2398 = vsel %vm2394, %v1962, -inf
    %v2399 = vsel %vm2394, %v1975, -inf
    %v2400 = vmax.f32 %v2395, %v2399
    %v2401 = vsel %vm2394, %v1988, -inf
    %v2402 = vmax.f32 %v2396, %v2401
    %v2403 = vsel %vm2394, %v2001, -inf
    %v2404 = vmax.f32 %v2397, %v2403
    %v2405 = vsel %vm2394, %v2014, -inf
    %v2406 = vmax.f32 %v2398, %v2405
    %v2407 = vsel %vm2394, %v2027, -inf
    %v2408 = vmax.f32 %v2400, %v2407
    %v2409 = vsel %vm2394, %v2040, -inf
    %v2410 = vmax.f32 %v2402, %v2409
    %v2411 = vsel %vm2394, %v2053, -inf
    %v2412 = vmax.f32 %v2404, %v2411
    %v2413 = vsel %vm2394, %v2066, -inf
    %v2414 = vmax.f32 %v2406, %v2413
    %v2415 = vsel %vm2394, %v2079, -inf
    %v2416 = vmax.f32 %v2408, %v2415
    %v2417 = vsel %vm2394, %v2092, -inf
    %v2418 = vmax.f32 %v2410, %v2417
    %v2419 = vsel %vm2394, %v2105, -inf
    %v2420 = vmax.f32 %v2412, %v2419
    %v2421 = vsel %vm2394, %v2118, -inf
    %v2422 = vmax.f32 %v2414, %v2421
    %v2423 = vsel %vm2394, %v2131, -inf
    %v2424 = vmax.f32 %v2416, %v2423
    %v2425 = vsel %vm2394, %v2144, -inf
    %v2426 = vmax.f32 %v2418, %v2425
    %v2427 = vsel %vm2394, %v2157, -inf
    %v2428 = vmax.f32 %v2420, %v2427
    %v2429 = vsel %vm2394, %v2170, -inf
    %v2430 = vmax.f32 %v2422, %v2429
    %v2431 = vsel %vm2394, %v2183, -inf
    %v2432 = vmax.f32 %v2424, %v2431
    %v2433 = vsel %vm2394, %v2196, -inf
    %v2434 = vmax.f32 %v2426, %v2433
    %v2435 = vsel %vm2394, %v2209, -inf
    %v2436 = vmax.f32 %v2428, %v2435
    %v2437 = vsel %vm2394, %v2222, -inf
    %v2438 = vmax.f32 %v2430, %v2437
    %v2439 = vsel %vm2394, %v2235, -inf
    %v2440 = vmax.f32 %v2432, %v2439
    %v2441 = vsel %vm2394, %v2248, -inf
    %v2442 = vmax.f32 %v2434, %v2441
    %v2443 = vsel %vm2394, %v2261, -inf
    %v2444 = vmax.f32 %v2436, %v2443
    %v2445 = vsel %vm2394, %v2274, -inf
    %v2446 = vmax.f32 %v2438, %v2445
    %v2447 = vsel %vm2394, %v2287, -inf
    %v2448 = vmax.f32 %v2440, %v2447
    %v2449 = vsel %vm2394, %v2300, -inf
    %v2450 = vmax.f32 %v2442, %v2449
    %v2451 = vsel %vm2394, %v2313, -inf
    %v2452 = vmax.f32 %v2444, %v2451
    %v2453 = vsel %vm2394, %v2326, -inf
    %v2454 = vmax.f32 %v2446, %v2453
    %v2455 = vsel %vm2394, %v2339, -inf
    %v2456 = vmax.f32 %v2448, %v2455
    %v2457 = vsel %vm2394, %v2352, -inf
    %v2458 = vmax.f32 %v2450, %v2457
    %v2459 = vsel %vm2394, %v2365, -inf
    %v2460 = vmax.f32 %v2452, %v2459
    %v2461 = vsel %vm2394, %v2378, -inf
    %v2462 = vmax.f32 %v2454, %v2461
    %v2463 = vsel %vm2394, %v2391, -inf
    %v2464 = vmax.f32 %v2456, %v2463
    %v2465 = vmax.f32 %v2464, %v2458
    %v2466 = vmax.f32 %v2460, %v2462
    %v2467 = vmax.f32 %v2465, %v2466
    %2468 = vmax.xlane.f32.xlu0 %v2467
    %v2469 = vpop.xlane.xlu0 %2468
    %v2470 = vsub.f32 %v1923, %v2469
    %v2471 = vsub.f32 %v1936, %v2469
    %v2472 = vsub.f32 %v1949, %v2469
    %v2473 = vsub.f32 %v1962, %v2469
    %v2474 = vsub.f32 %v1975, %v2469
    %v2475 = vsub.f32 %v1988, %v2469
    %v2476 = vsub.f32 %v2001, %v2469
    %v2477 = vsub.f32 %v2014, %v2469
    %v2478 = vsub.f32 %v2027, %v2469
    %v2479 = vsub.f32 %v2040, %v2469
    %v2480 = vsub.f32 %v2053, %v2469
    %v2481 = vsub.f32 %v2066, %v2469
    %v2482 = vsub.f32 %v2079, %v2469
    %v2483 = vsub.f32 %v2092, %v2469
    %v2484 = vsub.f32 %v2105, %v2469
    %v2485 = vsub.f32 %v2118, %v2469
    %v2486 = vsub.f32 %v2131, %v2469
    %v2487 = vsub.f32 %v2144, %v2469
    %v2488 = vsub.f32 %v2157, %v2469
    %v2489 = vsub.f32 %v2170, %v2469
    %v2490 = vsub.f32 %v2183, %v2469
    %v2491 = vsub.f32 %v2196, %v2469
    %v2492 = vsub.f32 %v2209, %v2469
    %v2493 = vsub.f32 %v2222, %v2469
    %v2494 = vsub.f32 %v2235, %v2469
    %v2495 = vsub.f32 %v2248, %v2469
    %v2496 = vsub.f32 %v2261, %v2469
    %v2497 = vsub.f32 %v2274, %v2469
    %v2498 = vsub.f32 %v2287, %v2469
    %v2499 = vsub.f32 %v2300, %v2469
    %v2500 = vsub.f32 %v2313, %v2469
    %v2501 = vsub.f32 %v2326, %v2469
    %v2502 = vsub.f32 %v2339, %v2469
    %v2503 = vsub.f32 %v2352, %v2469
    %v2504 = vsub.f32 %v2365, %v2469
    %v2505 = vsub.f32 %v2378, %v2469
    %v2506 = vsub.f32 %v2391, %v2469
    %v2507 = vmul.f32 %v2470, 1.442695
    %v2508 = vpow.pop %v2507
    %v2509 = vmul.f32 %v2471, 1.442695
    %v2510 = vpow.pop %v2509
    %v2511 = vmul.f32 %v2472, 1.442695
    %v2512 = vpow.pop %v2511
    %v2513 = vmul.f32 %v2473, 1.442695
    %v2514 = vpow.pop %v2513
    %v2515 = vmul.f32 %v2474, 1.442695
    %v2516 = vpow.pop %v2515
    %v2517 = vmul.f32 %v2475, 1.442695
    %v2518 = vpow.pop %v2517
    %v2519 = vmul.f32 %v2476, 1.442695
    %v2520 = vpow.pop %v2519
    %v2521 = vmul.f32 %v2477, 1.442695
    %v2522 = vpow.pop %v2521
    %v2523 = vmul.f32 %v2478, 1.442695
    %v2524 = vpow.pop %v2523
    %v2525 = vmul.f32 %v2479, 1.442695
    %v2526 = vpow.pop %v2525
    %v2527 = vmul.f32 %v2480, 1.442695
    %v2528 = vpow.pop %v2527
    %v2529 = vmul.f32 %v2481, 1.442695
    %v2530 = vpow.pop %v2529
    %v2531 = vmul.f32 %v2482, 1.442695
    %v2532 = vpow.pop %v2531
    %v2533 = vmul.f32 %v2483, 1.442695
    %v2534 = vpow.pop %v2533
    %v2535 = vmul.f32 %v2484, 1.442695
    %v2536 = vpow.pop %v2535
    %v2537 = vmul.f32 %v2485, 1.442695
    %v2538 = vpow.pop %v2537
    %v2539 = vmul.f32 %v2486, 1.442695
    %v2540 = vpow.pop %v2539
    %v2541 = vmul.f32 %v2487, 1.442695
    %v2542 = vpow.pop %v2541
    %v2543 = vmul.f32 %v2488, 1.442695
    %v2544 = vpow.pop %v2543
    %v2545 = vmul.f32 %v2489, 1.442695
    %v2546 = vpow.pop %v2545
    %v2547 = vmul.f32 %v2490, 1.442695
    %v2548 = vpow.pop %v2547
    %v2549 = vmul.f32 %v2491, 1.442695
    %v2550 = vpow.pop %v2549
    %v2551 = vmul.f32 %v2492, 1.442695
    %v2552 = vpow.pop %v2551
    %v2553 = vmul.f32 %v2493, 1.442695
    %v2554 = vpow.pop %v2553
    %v2555 = vmul.f32 %v2494, 1.442695
    %v2556 = vpow.pop %v2555
    %v2557 = vmul.f32 %v2495, 1.442695
    %v2558 = vpow.pop %v2557
    %v2559 = vmul.f32 %v2496, 1.442695
    %v2560 = vpow.pop %v2559
    %v2561 = vmul.f32 %v2497, 1.442695
    %v2562 = vpow.pop %v2561
    %v2563 = vmul.f32 %v2498, 1.442695
    %v2564 = vpow.pop %v2563
    %v2565 = vmul.f32 %v2499, 1.442695
    %v2566 = vpow.pop %v2565
    %v2567 = vmul.f32 %v2500, 1.442695
    %v2568 = vpow.pop %v2567
    %v2569 = vmul.f32 %v2501, 1.442695
    %v2570 = vpow.pop %v2569
    %v2571 = vmul.f32 %v2502, 1.442695
    %v2572 = vpow.pop %v2571
    %v2573 = vmul.f32 %v2503, 1.442695
    %v2574 = vpow.pop %v2573
    %v2575 = vmul.f32 %v2504, 1.442695
    %v2576 = vpow.pop %v2575
    %v2577 = vmul.f32 %v2505, 1.442695
    %v2578 = vpow.pop %v2577
    %v2579 = vmul.f32 %v2506, 1.442695
    %v2580 = vpow.pop %v2579
    %v2581 = vsel %vm2394, %v2508, 0.0
    %v2582 = vsel %vm2394, %v2510, 0.0
    %v2583 = vadd.f32 %v2581, %v2582
    %v2584 = vsel %vm2394, %v2512, 0.0
    %v2585 = vadd.f32 %v2583, %v2584
    %v2586 = vsel %vm2394, %v2514, 0.0
    %v2587 = vadd.f32 %v2585, %v2586
    %v2588 = vsel %vm2394, %v2516, 0.0
    %v2589 = vadd.f32 %v2587, %v2588
    %v2590 = vsel %vm2394, %v2518, 0.0
    %v2591 = vadd.f32 %v2589, %v2590
    %v2592 = vsel %vm2394, %v2520, 0.0
    %v2593 = vadd.f32 %v2591, %v2592
    %v2594 = vsel %vm2394, %v2522, 0.0
    %v2595 = vadd.f32 %v2593, %v2594
    %v2596 = vsel %vm2394, %v2524, 0.0
    %v2597 = vadd.f32 %v2595, %v2596
    %v2598 = vsel %vm2394, %v2526, 0.0
    %v2599 = vadd.f32 %v2597, %v2598
    %v2600 = vsel %vm2394, %v2528, 0.0
    %v2601 = vadd.f32 %v2599, %v2600
    %v2602 = vsel %vm2394, %v2530, 0.0
    %v2603 = vadd.f32 %v2601, %v2602
    %v2604 = vsel %vm2394, %v2532, 0.0
    %v2605 = vadd.f32 %v2603, %v2604
    %v2606 = vsel %vm2394, %v2534, 0.0
    %v2607 = vadd.f32 %v2605, %v2606
    %v2608 = vsel %vm2394, %v2536, 0.0
    %v2609 = vadd.f32 %v2607, %v2608
    %v2610 = vsel %vm2394, %v2538, 0.0
    %v2611 = vadd.f32 %v2609, %v2610
    %v2612 = vsel %vm2394, %v2540, 0.0
    %v2613 = vadd.f32 %v2611, %v2612
    %v2614 = vsel %vm2394, %v2542, 0.0
    %v2615 = vadd.f32 %v2613, %v2614
    %v2616 = vsel %vm2394, %v2544, 0.0
    %v2617 = vadd.f32 %v2615, %v2616
    %v2618 = vsel %vm2394, %v2546, 0.0
    %v2619 = vadd.f32 %v2617, %v2618
    %v2620 = vsel %vm2394, %v2548, 0.0
    %v2621 = vadd.f32 %v2619, %v2620
    %v2622 = vsel %vm2394, %v2550, 0.0
    %v2623 = vadd.f32 %v2621, %v2622
    %v2624 = vsel %vm2394, %v2552, 0.0
    %v2625 = vadd.f32 %v2623, %v2624
    %v2626 = vsel %vm2394, %v2554, 0.0
    %v2627 = vadd.f32 %v2625, %v2626
    %v2628 = vsel %vm2394, %v2556, 0.0
    %v2629 = vadd.f32 %v2627, %v2628
    %v2630 = vsel %vm2394, %v2558, 0.0
    %v2631 = vadd.f32 %v2629, %v2630
    %v2632 = vsel %vm2394, %v2560, 0.0
    %v2633 = vadd.f32 %v2631, %v2632
    %v2634 = vsel %vm2394, %v2562, 0.0
    %v2635 = vadd.f32 %v2633, %v2634
    %v2636 = vsel %vm2394, %v2564, 0.0
    %v2637 = vadd.f32 %v2635, %v2636
    %v2638 = vsel %vm2394, %v2566, 0.0
    %v2639 = vadd.f32 %v2637, %v2638
    %v2640 = vsel %vm2394, %v2568, 0.0
    %v2641 = vadd.f32 %v2639, %v2640
    %v2642 = vsel %vm2394, %v2570, 0.0
    %v2643 = vadd.f32 %v2641, %v2642
    %v2644 = vsel %vm2394, %v2572, 0.0
    %v2645 = vadd.f32 %v2643, %v2644
    %v2646 = vsel %vm2394, %v2574, 0.0
    %v2647 = vadd.f32 %v2645, %v2646
    %v2648 = vsel %vm2394, %v2576, 0.0
    %v2649 = vadd.f32 %v2647, %v2648
    %v2650 = vsel %vm2394, %v2578, 0.0
    %v2651 = vadd.f32 %v2649, %v2650
    %v2652 = vsel %vm2394, %v2580, 0.0
    %v2653 = vadd.f32 %v2651, %v2652
    %2654 = vadd.xlane.f32.xlu0 %v2653
    %v2655 = vpop.xlane.xlu0 %2654
    %v2656 = vlog2.pop %v2655
    %v2657 = vmul.f32 %v2656, 0.6931472
    %v2658 = vsub.f32 %v2470, %v2657
    %v2659 = vsub.f32 %v2471, %v2657
    %v2660 = vsub.f32 %v2472, %v2657
    %v2661 = vsub.f32 %v2473, %v2657
    %v2662 = vsub.f32 %v2474, %v2657
    %v2663 = vsub.f32 %v2475, %v2657
    %v2664 = vsub.f32 %v2476, %v2657
    %v2665 = vsub.f32 %v2477, %v2657
    %v2666 = vsub.f32 %v2478, %v2657
    %v2667 = vsub.f32 %v2479, %v2657
    %v2668 = vsub.f32 %v2480, %v2657
    %v2669 = vsub.f32 %v2481, %v2657
    %v2670 = vsub.f32 %v2482, %v2657
    %v2671 = vsub.f32 %v2483, %v2657
    %v2672 = vsub.f32 %v2484, %v2657
    %v2673 = vsub.f32 %v2485, %v2657
    %v2674 = vsub.f32 %v2486, %v2657
    %v2675 = vsub.f32 %v2487, %v2657
    %v2676 = vsub.f32 %v2488, %v2657
    %v2677 = vsub.f32 %v2489, %v2657
    %v2678 = vsub.f32 %v2490, %v2657
    %v2679 = vsub.f32 %v2491, %v2657
    %v2680 = vsub.f32 %v2492, %v2657
    %v2681 = vsub.f32 %v2493, %v2657
    %v2682 = vsub.f32 %v2494, %v2657
    %v2683 = vsub.f32 %v2495, %v2657
    %v2684 = vsub.f32 %v2496, %v2657
    %v2685 = vsub.f32 %v2497, %v2657
    %v2686 = vsub.f32 %v2498, %v2657
    %v2687 = vsub.f32 %v2499, %v2657
    %v2688 = vsub.f32 %v2500, %v2657
    %v2689 = vsub.f32 %v2501, %v2657
    %v2690 = vsub.f32 %v2502, %v2657
    %v2691 = vsub.f32 %v2503, %v2657
    %v2692 = vsub.f32 %v2504, %v2657
    %v2693 = vsub.f32 %v2505, %v2657
    %v2694 = vsub.f32 %v2506, %v2657
    %v2731 = vrot.slane %v2659, 6
    %v2732 = vrot.slane %v2660, 4
    %v2733 = vrot.slane %v2661, 2
    %v2734 = vrot.slane %v2663, 6
    %v2735 = vrot.slane %v2664, 4
    %v2736 = vrot.slane %v2665, 2
    %v2737 = vrot.slane %v2667, 6
    %v2738 = vrot.slane %v2668, 4
    %v2739 = vrot.slane %v2669, 2
    %v2740 = vrot.slane %v2671, 6
    %v2741 = vrot.slane %v2672, 4
    %v2742 = vrot.slane %v2673, 2
    %v2743 = vrot.slane %v2675, 6
    %v2744 = vrot.slane %v2676, 4
    %v2745 = vrot.slane %v2677, 2
    %v2746 = vrot.slane %v2679, 6
    %v2747 = vrot.slane %v2680, 4
    %v2748 = vrot.slane %v2681, 2
    %v2749 = vrot.slane %v2683, 6
    %v2750 = vrot.slane %v2684, 4
    %v2751 = vrot.slane %v2685, 2
    %v2752 = vrot.slane %v2687, 6
    %v2753 = vrot.slane %v2688, 4
    %v2754 = vrot.slane %v2689, 2
    %v2755 = vrot.slane %v2691, 6
    %v2756 = vrot.slane %v2692, 4
    %v2757 = vrot.slane %v2693, 2
    %v2758 = vsel %vm2394, %v2658, %v2731
    %vm2759 = vcmask 1045508
    %v2760 = vsel %vm2759, %v2732, %v2733
    %vm2761 = vcmask 1043456
    %v2762 = vsel %vm2761, %v2758, %v2760
    %v2763 = vsel %vm2394, %v2662, %v2734
    %v2764 = vsel %vm2759, %v2735, %v2736
    %v2765 = vsel %vm2761, %v2763, %v2764
    %v2766 = vsel %vm2394, %v2666, %v2737
    %v2767 = vsel %vm2759, %v2738, %v2739
    %v2768 = vsel %vm2761, %v2766, %v2767
    %v2769 = vsel %vm2394, %v2670, %v2740
    %v2770 = vsel %vm2759, %v2741, %v2742
    %v2771 = vsel %vm2761, %v2769, %v2770
    %v2772 = vsel %vm2394, %v2674, %v2743
    %v2773 = vsel %vm2759, %v2744, %v2745
    %v2774 = vsel %vm2761, %v2772, %v2773
    %v2775 = vsel %vm2394, %v2678, %v2746
    %v2776 = vsel %vm2759, %v2747, %v2748
    %v2777 = vsel %vm2761, %v2775, %v2776
    %v2778 = vsel %vm2394, %v2682, %v2749
    %v2779 = vsel %vm2759, %v2750, %v2751
    %v2780 = vsel %vm2761, %v2778, %v2779
    %v2781 = vsel %vm2394, %v2686, %v2752
    %v2782 = vsel %vm2759, %v2753, %v2754
    %v2783 = vsel %vm2761, %v2781, %v2782
    %v2784 = vsel %vm2394, %v2690, %v2755
    %v2785 = vsel %vm2759, %v2756, %v2757
    %v2786 = vsel %vm2761, %v2784, %v2785
    %2796 = vst [vmem:[#allocation3] sm:$0xff] %v2762
    %2797 = vst [vmem:[#allocation3 + $0x8] sm:$0xff] %v2765
    %2798 = vst [vmem:[#allocation3 + $0x10] sm:$0xff] %v2768
    %2799 = vst [vmem:[#allocation3 + $0x18] sm:$0xff] %v2771
    %2800 = vst [vmem:[#allocation3 + $0x20] sm:$0xff] %v2774
    %2801 = vst [vmem:[#allocation3 + $0x28] sm:$0xff] %v2777
    %2802 = vst [vmem:[#allocation3 + $0x30] sm:$0xff] %v2780
    %2803 = vst [vmem:[#allocation3 + $0x38] sm:$0xff] %v2783
    %2804 = vst [vmem:[#allocation3 + $0x40] sm:$0xff] %v2786
    %2805 = vst [vmem:[#allocation3 + $0x48] sm:$0x3] %v2694
    %v2806 = vld [vmem:[%s1] sm:$0x3]
    %v2807 = vpack.c.bf16 %v2806, %v2806
    %v2808 = vld [vmem:[%s4] sm:$0xff]
    %v2809 = vld [vmem:[%s4 + $0x8] sm:$0xff]
    %v2810 = vld [vmem:[%s4 + $0x10] sm:$0xff]
    %v2811 = vld [vmem:[%s4 + $0x18] sm:$0xff]
    %v2812 = vld [vmem:[%s4 + $0x20] sm:$0xff]
    %v2813 = vld [vmem:[%s4 + $0x28] sm:$0xff]
    %v2814 = vld [vmem:[%s4 + $0x30] sm:$0xff]
    %v2815 = vld [vmem:[%s4 + $0x38] sm:$0xff]
    %v2816 = vld [vmem:[%s5] sm:$0x3]
    %v2818 = vperm.slane %v2816, 0
    %v2819 = vperm.slane %v2816, 1
    %v2830 = vunpack.c.l.b16 %v2808
    %v2831 = vunpack.c.h.b16 %v2808
    %v2832 = vunpack.c.l.b16 %v2809
    %v2833 = vunpack.c.h.b16 %v2809
    %v2834 = vunpack.c.l.b16 %v2810
    %v2835 = vunpack.c.h.b16 %v2810
    %v2836 = vunpack.c.l.b16 %v2811
    %v2837 = vunpack.c.h.b16 %v2811
    %v2838 = vunpack.c.l.b16 %v2812
    %v2839 = vunpack.c.h.b16 %v2812
    %v2840 = vunpack.c.l.b16 %v2813
    %v2841 = vunpack.c.h.b16 %v2813
    %v2842 = vunpack.c.l.b16 %v2814
    %v2843 = vunpack.c.h.b16 %v2814
    %v2844 = vunpack.c.l.b16 %v2815
    %v2845 = vunpack.c.h.b16 %v2815
    %v2846 = vpack.c.b16 %v2832, %v2830
    %v2847 = vpack.c.b16 %v2833, %v2831
    %v2848 = vpack.c.b16 %v2836, %v2834
    %v2849 = vpack.c.b16 %v2837, %v2835
    %v2850 = vpack.c.b16 %v2840, %v2838
    %v2851 = vpack.c.b16 %v2841, %v2839
    %v2852 = vpack.c.b16 %v2844, %v2842
    %v2853 = vpack.c.b16 %v2845, %v2843
    %vm2862 = vcmask 523264
    %v2864 = vsel %vm2862, %v2807, 0
    %2866 = vmatpush.bf16.msra.mxu0 0
    %2867 = vmatpush.bf16.msra.mxu0 0
    %2868 = vmatpush.bf16.msra.mxu0 0
    %2869 = vmatpush.bf16.msra.mxu0 0
    %2870 = vmatpush.bf16.msra.mxu0 %v2852
    %2871 = vmatpush.bf16.msra.mxu0 %v2850
    %2872 = vmatpush.bf16.msra.mxu0 %v2848
    %2873 = vmatpush.bf16.msra.mxu0 %v2846
    %2874 = vmatmul.bf16.gmra.mxu0 %v2864
    %v2875 = vpop.f32.mrf.mxu0
    %v2876 = vadd.f32 %v2818, %v2875
    %v2877 = vpop.f32.mrf.mxu0
    %2878 = vdwg.mxu0
    %2879 = vmatpush.bf16.msra.mxu0 0
    %2880 = vmatpush.bf16.msra.mxu0 0
    %2881 = vmatpush.bf16.msra.mxu0 0
    %2882 = vmatpush.bf16.msra.mxu0 0
    %2883 = vmatpush.bf16.msra.mxu0 %v2853
    %2884 = vmatpush.bf16.msra.mxu0 %v2851
    %2885 = vmatpush.bf16.msra.mxu0 %v2849
    %2886 = vmatpush.bf16.msra.mxu0 %v2847
    %2887 = vmatmul.bf16.gmra.mxu0 %v2864
    %v2888 = vpop.f32.mrf.mxu0
    %v2889 = vadd.f32 %v2819, %v2888
    %v2890 = vpop.f32.mrf.mxu0
    %2891 = vdwg.mxu0
    %v2892 = vmax.f32 %v2876, 0.0
    %v2893 = vmax.f32 %v2889, 0.0
    %v2894 = vpack.c.bf16 %v2892, %v2892
    %v2895 = vpack.c.bf16 %v2893, %v2893
    %v2896 = vld [vmem:[%s6] sm:$0xf]
    %v2897 = vld [vmem:[%s6 + $0x4] sm:$0xf]
    %v2898 = vld [vmem:[%s6 + $0x8] sm:$0xf]
    %v2899 = vld [vmem:[%s6 + $0xc] sm:$0xf]
    %v2900 = vld [vmem:[%s6 + $0x10] sm:$0xf]
    %v2901 = vld [vmem:[%s6 + $0x14] sm:$0xf]
    %v2902 = vld [vmem:[%s6 + $0x18] sm:$0xf]
    %v2903 = vld [vmem:[%s6 + $0x1c] sm:$0xf]
    %v2904 = vld [vmem:[%s6 + $0x20] sm:$0xf]
    %v2905 = vld [vmem:[%s6 + $0x24] sm:$0xf]
    %v2906 = vld [vmem:[%s6 + $0x28] sm:$0xf]
    %v2907 = vld [vmem:[%s6 + $0x2c] sm:$0xf]
    %v2908 = vld [vmem:[%s6 + $0x30] sm:$0xf]
    %v2909 = vld [vmem:[%s6 + $0x34] sm:$0xf]
    %v2910 = vld [vmem:[%s6 + $0x38] sm:$0xf]
    %v2911 = vld [vmem:[%s6 + $0x3c] sm:$0xf]
    %v2912 = vld [vmem:[%s6 + $0x40] sm:$0xf]
    %v2913 = vld [vmem:[%s6 + $0x44] sm:$0xf]
    %v2914 = vld [vmem:[%s6 + $0x48] sm:$0xf]
    %v2915 = vld [vmem:[%s6 + $0x4c] sm:$0xf]
    %v2916 = vld [vmem:[%s6 + $0x50] sm:$0xf]
    %v2917 = vld [vmem:[%s6 + $0x54] sm:$0xf]
    %v2918 = vld [vmem:[%s6 + $0x58] sm:$0xf]
    %v2919 = vld [vmem:[%s6 + $0x5c] sm:$0xf]
    %v2920 = vld [vmem:[%s6 + $0x60] sm:$0xf]
    %v2921 = vld [vmem:[%s6 + $0x64] sm:$0xf]
    %v2922 = vld [vmem:[%s6 + $0x68] sm:$0xf]
    %v2923 = vld [vmem:[%s6 + $0x6c] sm:$0xf]
    %v2924 = vld [vmem:[%s6 + $0x70] sm:$0xf]
    %v2925 = vld [vmem:[%s6 + $0x74] sm:$0xf]
    %v2926 = vld [vmem:[%s6 + $0x78] sm:$0xf]
    %v2927 = vld [vmem:[%s6 + $0x7c] sm:$0xf]
    %v2928 = vld [vmem:[#allocation2] sm:$0x1]
    %v2930 = vperm.slane %v2928, 0
    %v2964 = vunpack.c.l.b16 %v2896
    %v2965 = vunpack.c.l.b16 %v2897
    %v2966 = vunpack.c.l.b16 %v2898
    %v2967 = vunpack.c.l.b16 %v2899
    %v2968 = vunpack.c.l.b16 %v2900
    %v2969 = vunpack.c.l.b16 %v2901
    %v2970 = vunpack.c.l.b16 %v2902
    %v2971 = vunpack.c.l.b16 %v2903
    %v2972 = vunpack.c.l.b16 %v2904
    %v2973 = vunpack.c.l.b16 %v2905
    %v2974 = vunpack.c.l.b16 %v2906
    %v2975 = vunpack.c.l.b16 %v2907
    %v2976 = vunpack.c.l.b16 %v2908
    %v2977 = vunpack.c.l.b16 %v2909
    %v2978 = vunpack.c.l.b16 %v2910
    %v2979 = vunpack.c.l.b16 %v2911
    %v2980 = vunpack.c.l.b16 %v2912
    %v2981 = vunpack.c.l.b16 %v2913
    %v2982 = vunpack.c.l.b16 %v2914
    %v2983 = vunpack.c.l.b16 %v2915
    %v2984 = vunpack.c.l.b16 %v2916
    %v2985 = vunpack.c.l.b16 %v2917
    %v2986 = vunpack.c.l.b16 %v2918
    %v2987 = vunpack.c.l.b16 %v2919
    %v2988 = vunpack.c.l.b16 %v2920
    %v2989 = vunpack.c.l.b16 %v2921
    %v2990 = vunpack.c.l.b16 %v2922
    %v2991 = vunpack.c.l.b16 %v2923
    %v2992 = vunpack.c.l.b16 %v2924
    %v2993 = vunpack.c.l.b16 %v2925
    %v2994 = vunpack.c.l.b16 %v2926
    %v2995 = vunpack.c.l.b16 %v2927
    %v2996 = vpack.c.b16 %v2965, %v2964
    %v2997 = vpack.c.b16 %v2967, %v2966
    %v2998 = vpack.c.b16 %v2969, %v2968
    %v2999 = vpack.c.b16 %v2971, %v2970
    %v3000 = vpack.c.b16 %v2973, %v2972
    %v3001 = vpack.c.b16 %v2975, %v2974
    %v3002 = vpack.c.b16 %v2977, %v2976
    %v3003 = vpack.c.b16 %v2979, %v2978
    %v3004 = vpack.c.b16 %v2981, %v2980
    %v3005 = vpack.c.b16 %v2983, %v2982
    %v3006 = vpack.c.b16 %v2985, %v2984
    %v3007 = vpack.c.b16 %v2987, %v2986
    %v3008 = vpack.c.b16 %v2989, %v2988
    %v3009 = vpack.c.b16 %v2991, %v2990
    %v3010 = vpack.c.b16 %v2993, %v2992
    %v3011 = vpack.c.b16 %v2995, %v2994
    %3028 = vmatpush.bf16.msra.mxu0 %v3003
    %3029 = vmatpush.bf16.msra.mxu0 %v3002
    %3030 = vmatpush.bf16.msra.mxu0 %v3001
    %3031 = vmatpush.bf16.msra.mxu0 %v3000
    %3032 = vmatpush.bf16.msra.mxu0 %v2999
    %3033 = vmatpush.bf16.msra.mxu0 %v2998
    %3034 = vmatpush.bf16.msra.mxu0 %v2997
    %3035 = vmatpush.bf16.msra.mxu0 %v2996
    %3036 = vmatmul.bf16.gmra.mxu0 %v2894
    %v3037 = vpop.f32.mrf.mxu0
    %v3038 = vadd.f32 %v2930, %v3037
    %v3039 = vpop.f32.mrf.mxu0
    %3040 = vdwg.mxu0
    %3041 = vmatpush.bf16.msra.mxu0 %v3011
    %3042 = vmatpush.bf16.msra.mxu0 %v3010
    %3043 = vmatpush.bf16.msra.mxu0 %v3009
    %3044 = vmatpush.bf16.msra.mxu0 %v3008
    %3045 = vmatpush.bf16.msra.mxu0 %v3007
    %3046 = vmatpush.bf16.msra.mxu0 %v3006
    %3047 = vmatpush.bf16.msra.mxu0 %v3005
    %3048 = vmatpush.bf16.msra.mxu0 %v3004
    %3049 = vmatmul.bf16.gmra.mxu0 %v2895
    %v3050 = vpop.f32.mrf.mxu0
    %v3051 = vadd.f32 %v3038, %v3050
    %v3052 = vpop.f32.mrf.mxu0
    %3053 = vdwg.mxu0
    %v3054 = vtanh.pop %v3051
    %vm3055 = vcmask 1024
    %3056 = vst.msk [vmem:[%s9] sm:$0x3] %vm3055, %v3054
    // Predicated region
    $region34: #{forward.3} parent=1 // pred_check
      _
    $region35: #{forward.3} parent=1 // pred_check_branch
      %3058 = sbr.rel (0) target = $region37
    $region36: #{forward.3} parent=1 // pred_region
      %3060 = vsyncadd [#allocation4], 0
      %s3062 = sshll.u32 [#allocation3], 4
      %s3063 = int_to_ptr.vmem [resolvable:$true] %s3062
      %s3064 = sshll.u32 %s8, 4
      %s3065 = int_to_ptr.hbm [resolvable:$true] %s3064
      %3067 = dma.vmem_to_hbm [thread:$0]  %s3063, 1184, %s3065, [#allocation4]
    $region37: #{forward.3} parent=1 // pred_fallthru
      _
    // Predicated region
    $region38: #{forward.3} parent=1 // pred_check
      _
    $region39: #{forward.3} parent=1 // pred_check_branch
      %3069 = sbr.rel (0) target = $region41
    $region40: #{forward.3} parent=1 // pred_region
      _
    $region41: #{forward.3} parent=1 // pred_fallthru
      _
    // Predicated region
    $region42: #{forward.3} parent=1 // pred_check
      _
    $region43: #{forward.3} parent=1 // pred_check_branch
      %3071 = sbr.rel (0) target = $region45
    $region44: #{forward.3} parent=1 // pred_region
      %3073 = dma.done [#allocation4], 1184
    $region45: #{forward.3} parent=1 // pred_fallthru
      _
    // Predicated region
    $region46: #{forward.3} parent=1 // pred_check
      _
    $region47: #{forward.3} parent=1 // pred_check_branch
      %3075 = sbr.rel (0) target = $region49
    $region48: #{forward.3} parent=1 // pred_region
      _
    $region49: #{forward.3} parent=1 // pred_fallthru
      _
    %3076 = vsyncpa [#allocation4], 1

// kernel: forward.2
$region0: #{forward.2}
  #allocation0 [shape = 'u32[]', space=smem, size = 0x4, offset = 0x4, fixed_abs, tag = 'smem constant byte address 0x4 - core index']
  #allocation1 [shape = 'u32[72,128]{1,0:T(1,128)}', space=vmem, size = 0x9000, scoped, tag = 'internal scratch']
  #allocation2 [shape = 'bf16[2,10,16,128]{3,2,1,0:T(8,128)(2,1)}', space=vmem, size = 0x14000, scoped, tag = 'scratch operand']
  #allocation3 [shape = 'f32[128,128]{1,0:T(8,128)}', space=vmem, size = 0x10000, scoped, tag = 'scratch operand']
  %s0 = inlined_call_operand.vmem [shape: bf16[2,10,16,128], index: 0, kind: input, shape index: {}]
  %s1 = inlined_call_operand.hbm [shape: bf16[5,9,128,128], index: 1, kind: input, shape index: {}]
  %s2 = inlined_call_operand.hbm [shape: f32[5,1,128], index: 2, kind: input, shape index: {}]
  %s3 = inlined_call_operand.hbm [shape: f32[5,1,128], index: 3, kind: input, shape index: {}]
  %s4 = inlined_call_operand.vmem [shape: bf16[128,8], index: 4, kind: input, shape index: {}]
  %s5 = inlined_call_operand.hbm [shape: f32[1,8], index: 5, kind: input, shape index: {}]
  %s6 = inlined_call_operand.hbm [shape: f32[1,8], index: 6, kind: input, shape index: {}]
  %s7 = inlined_call_operand.vmem [shape: f32[128,8], index: 7, kind: output, shape index: {}]
  %s8 = sld [smem:[#allocation0]]
  $region93: #{forward.2} parent=0
    _
  %s10 = ssub.s32 1, %s8
  %s11 = scalar_select 0, %s10, %s8
  $region1: #{forward.2} parent=0
    #allocation4 [shape = 'u8[589824]{0}', space=vmem, size = 0x90000, scoped, tag = 'input window, operand 1']
    #allocation5 [shape = 's32[2]{0}', space=sflag, size = 0x8, scoped, tag = 'scoped memory for forward.2']
    #allocation6 [shape = 'u8[1024]{0}', space=vmem, size = 0x400, scoped, tag = 'input window, operand 2']
    #allocation7 [shape = 's32[2]{0}', space=sflag, size = 0x8, scoped, tag = 'scoped memory for forward.2']
    #allocation8 [shape = 'u8[1024]{0}', space=vmem, size = 0x400, scoped, tag = 'input window, operand 3']
    #allocation9 [shape = 'u8[512]{0}', space=vmem, size = 0x400, scoped, tag = 'input window, operand 5, single buffered']
    #allocation10 [shape = 's32[1]{0}', space=sflag, size = 0x4, scoped, tag = 'scoped memory for forward.2']
    #allocation11 [shape = 'u8[512]{0}', space=vmem, size = 0x400, scoped, tag = 'input window, operand 6, single buffered']
    %12 = vsyncpa [#allocation5], 0
    %s13 = scalar_lea.sflag [#allocation5], 1
    %14 = vsyncpa %s13, 0
    %15 = vsyncpa [#allocation7], 0
    %s16 = scalar_lea.sflag [#allocation7], 1
    %17 = vsyncpa %s16, 0
    %18 = vsyncpa [#allocation10], 0
    loop: start=0, step=1, limit=7
    $region2: #{forward.2} parent=1 // loop_pre_header
      _
    $region3: #{forward.2} parent=1 // loop_header
      %s20 = sphi 0, %s24
      %p21 = scmp.ge.s32.totalorder %s20, 7
      %s28 = sphi 0, %s28
      %s30 = sphi 0, %s28
      %s31 = sphi 0, %s30
      %s45 = sphi 0, %s31
      %s51 = sphi 0, %s53
      %s54 = sphi 0, %s51
      %s55 = sphi 0, %s54
      %s71 = sphi 0, %s55
      %s77 = sphi 0, %s79
      %s80 = sphi 0, %s77
      %s81 = sphi 0, %s80
      %s97 = sphi 0, %s81
      %s103 = sphi 0, %s105
      %s106 = sphi 0, %s103
      %s107 = sphi 0, %s106
      %s123 = sphi 0, %s107
      %s127 = sphi 0, %s127
      %s129 = sphi 0, %s127
      %s130 = sphi 0, %s129
      %s144 = sphi 0, %s130
      %s148 = sphi 0, %s148
      %s150 = sphi 0, %s148
      %s151 = sphi 0, %s150
      %s165 = sphi 0, %s151
      %s169 = sphi 0, %s169
      %s171 = sphi 0, %s169
      %s172 = sphi 0, %s171
      %s186 = sphi 0, %s172
      %s190 = sphi 0, %s190
      %s192 = sphi 0, %s190
      %s193 = sphi 0, %s192
      %s207 = sphi 0, %s193
    $region4: #{forward.2} parent=1 // loop_header_branch
      %23 = sbr.rel (%p21) target = $region8
    $region5: #{forward.2} parent=1 // loop_body
      %s25 = ssub.s32 %s20, 1
      %s26 = ssub.s32 %s20, 2
      %s27 = sadd.s32 %s20, 1
      %s29 = sadd.s32 %s28, 1
      %p32 = scmp.eq.s32.totalorder %s20, 4
      %p33 = scmp.ne.s32.totalorder %s28, %s30
      %p34 = scmp.eq.s32.totalorder %s20, 0
      %p35 = por %p33, %p34
      %p36 = scmp.ne.s32.totalorder %s28, %s30
      %p37 = scmp.eq.s32.totalorder %s25, 4
      %p38 = por %p36, %p37
      %p39 = scmp.ne.s32.totalorder %s30, %s31
      %p40 = scmp.eq.s32.totalorder %s25, 0
      %p41 = por %p39, %p40
      %p42 = scmp.ne.s32.totalorder %s30, %s31
      %p43 = scmp.eq.s32.totalorder %s26, 4
      %p44 = por %p42, %p43
      %p46 = scmp.ne.s32.totalorder %s31, %s45
      %p47 = scmp.eq.s32.totalorder %s26, 0
      %p48 = por %p46, %p47
      %s49 = ssub.s32 %s20, %s27
      %p50 = scmp.eq.s32.totalorder %s49, 0
      %s52 = sadd.s32 %s51, 1
      %s53 = scalar_select %p50, %s51, %s52
      %p56 = pneg %p50
      %p57 = scmp.eq.s32.totalorder %s20, 4
      %p58 = por %p56, %p57
      %p59 = scmp.ne.s32.totalorder %s51, %s54
      %p60 = scmp.eq.s32.totalorder %s20, 0
      %p61 = por %p59, %p60
      %p62 = scmp.ne.s32.totalorder %s51, %s54
      %p63 = scmp.eq.s32.totalorder %s25, 4
      %p64 = por %p62, %p63
      %p65 = scmp.ne.s32.totalorder %s54, %s55
      %p66 = scmp.eq.s32.totalorder %s25, 0
      %p67 = por %p65, %p66
      %p68 = scmp.ne.s32.totalorder %s54, %s55
      %p69 = scmp.eq.s32.totalorder %s26, 4
      %p70 = por %p68, %p69
      %p72 = scmp.ne.s32.totalorder %s55, %s71
      %p73 = scmp.eq.s32.totalorder %s26, 0
      %p74 = por %p72, %p73
      %s75 = ssub.s32 %s20, %s27
      %p76 = scmp.eq.s32.totalorder %s75, 0
      %s78 = sadd.s32 %s77, 1
      %s79 = scalar_select %p76, %s77, %s78
      %p82 = pneg %p76
      %p83 = scmp.eq.s32.totalorder %s20, 4
      %p84 = por %p82, %p83
      %p85 = scmp.ne.s32.totalorder %s77, %s80
      %p86 = scmp.eq.s32.totalorder %s20, 0
      %p87 = por %p85, %p86
      %p88 = scmp.ne.s32.totalorder %s77, %s80
      %p89 = scmp.eq.s32.totalorder %s25, 4
      %p90 = por %p88, %p89
      %p91 = scmp.ne.s32.totalorder %s80, %s81
      %p92 = scmp.eq.s32.totalorder %s25, 0
      %p93 = por %p91, %p92
      %p94 = scmp.ne.s32.totalorder %s80, %s81
      %p95 = scmp.eq.s32.totalorder %s26, 4
      %p96 = por %p94, %p95
      %p98 = scmp.ne.s32.totalorder %s81, %s97
      %p99 = scmp.eq.s32.totalorder %s26, 0
      %p100 = por %p98, %p99
      %s101 = ssub.s32 %s20, %s27
      %p102 = scmp.eq.s32.totalorder %s101, 0
      %s104 = sadd.s32 %s103, 1
      %s105 = scalar_select %p102, %s103, %s104
      %p108 = pneg %p102
      %p109 = scmp.eq.s32.totalorder %s20, 4
      %p110 = por %p108, %p109
      %p111 = scmp.ne.s32.totalorder %s103, %s106
      %p112 = scmp.eq.s32.totalorder %s20, 0
      %p113 = por %p111, %p112
      %p114 = scmp.ne.s32.totalorder %s103, %s106
      %p115 = scmp.eq.s32.totalorder %s25, 4
      %p116 = por %p114, %p115
      %p117 = scmp.ne.s32.totalorder %s106, %s107
      %p118 = scmp.eq.s32.totalorder %s25, 0
      %p119 = por %p117, %p118
      %p120 = scmp.ne.s32.totalorder %s106, %s107
      %p121 = scmp.eq.s32.totalorder %s26, 4
      %p122 = por %p120, %p121
      %p124 = scmp.ne.s32.totalorder %s107, %s123
      %p125 = scmp.eq.s32.totalorder %s26, 0
      %p126 = por %p124, %p125
      %s128 = sadd.s32 %s127, 1
      %p131 = scmp.eq.s32.totalorder %s20, 4
      %p132 = scmp.ne.s32.totalorder %s127, %s129
      %p133 = scmp.eq.s32.totalorder %s20, 0
      %p134 = por %p132, %p133
      %p135 = scmp.ne.s32.totalorder %s127, %s129
      %p136 = scmp.eq.s32.totalorder %s25, 4
      %p137 = por %p135, %p136
      %p138 = scmp.ne.s32.totalorder %s129, %s130
      %p139 = scmp.eq.s32.totalorder %s25, 0
      %p140 = por %p138, %p139
      %p141 = scmp.ne.s32.totalorder %s129, %s130
      %p142 = scmp.eq.s32.totalorder %s26, 4
      %p143 = por %p141, %p142
      %p145 = scmp.ne.s32.totalorder %s130, %s144
      %p146 = scmp.eq.s32.totalorder %s26, 0
      %p147 = por %p145, %p146
      %s149 = sadd.s32 %s148, 1
      %p152 = scmp.eq.s32.totalorder %s20, 4
      %p153 = scmp.ne.s32.totalorder %s148, %s150
      %p154 = scmp.eq.s32.totalorder %s20, 0
      %p155 = por %p153, %p154
      %p156 = scmp.ne.s32.totalorder %s148, %s150
      %p157 = scmp.eq.s32.totalorder %s25, 4
      %p158 = por %p156, %p157
      %p159 = scmp.ne.s32.totalorder %s150, %s151
      %p160 = scmp.eq.s32.totalorder %s25, 0
      %p161 = por %p159, %p160
      %p162 = scmp.ne.s32.totalorder %s150, %s151
      %p163 = scmp.eq.s32.totalorder %s26, 4
      %p164 = por %p162, %p163
      %p166 = scmp.ne.s32.totalorder %s151, %s165
      %p167 = scmp.eq.s32.totalorder %s26, 0
      %p168 = por %p166, %p167
      %s170 = sadd.s32 %s169, 1
      %p173 = scmp.eq.s32.totalorder %s20, 4
      %p174 = scmp.ne.s32.totalorder %s169, %s171
      %p175 = scmp.eq.s32.totalorder %s20, 0
      %p176 = por %p174, %p175
      %p177 = scmp.ne.s32.totalorder %s169, %s171
      %p178 = scmp.eq.s32.totalorder %s25, 4
      %p179 = por %p177, %p178
      %p180 = scmp.ne.s32.totalorder %s171, %s172
      %p181 = scmp.eq.s32.totalorder %s25, 0
      %p182 = por %p180, %p181
      %p183 = scmp.ne.s32.totalorder %s171, %s172
      %p184 = scmp.eq.s32.totalorder %s26, 4
      %p185 = por %p183, %p184
      %p187 = scmp.ne.s32.totalorder %s172, %s186
      %p188 = scmp.eq.s32.totalorder %s26, 0
      %p189 = por %p187, %p188
      %s191 = sadd.s32 %s190, 1
      %p194 = scmp.eq.s32.totalorder %s20, 4
      %p195 = scmp.ne.s32.totalorder %s190, %s192
      %p196 = scmp.eq.s32.totalorder %s20, 0
      %p197 = por %p195, %p196
      %p198 = scmp.ne.s32.totalorder %s190, %s192
      %p199 = scmp.eq.s32.totalorder %s25, 4
      %p200 = por %p198, %p199
      %p201 = scmp.ne.s32.totalorder %s192, %s193
      %p202 = scmp.eq.s32.totalorder %s25, 0
      %p203 = por %p201, %p202
      %p204 = scmp.ne.s32.totalorder %s192, %s193
      %p205 = scmp.eq.s32.totalorder %s26, 4
      %p206 = por %p204, %p205
      %p208 = scmp.ne.s32.totalorder %s193, %s207
      %p209 = scmp.eq.s32.totalorder %s26, 0
      %p210 = por %p208, %p209
      %p211 = scmp.le.s32.totalorder 1, %s20
      %p212 = scmp.lt.s32.totalorder %s20, 6
      %p213 = pnand %p211, %p212
      %p214 = pneg %p213
      // Predicated region
      $region9: #{forward.2} parent=5 // pred_check
        _
      $region10: #{forward.2} parent=5 // pred_check_branch
        %216 = sbr.rel (%p213) target = $region12
      $region11: #{forward.2} parent=5 // pred_region
        %s217 = ssub.s32 %s20, 1
        // Predicated region
        $region13: #{forward.2} parent=11 // pred_check
          %p218 = pneg %p41
        $region14: #{forward.2} parent=11 // pred_check_branch
          %220 = sbr.rel (%p218) target = $region16
        $region15: #{forward.2} parent=11 // pred_region
          _
        $region16: #{forward.2} parent=11 // pred_fallthru
          _
        // Predicated region
        $region17: #{forward.2} parent=11 // pred_check
          %p221 = pneg %p140
        $region18: #{forward.2} parent=11 // pred_check_branch
          %223 = sbr.rel (%p221) target = $region20
        $region19: #{forward.2} parent=11 // pred_region
          _
        $region20: #{forward.2} parent=11 // pred_fallthru
          _
        // Predicated region
        $region21: #{forward.2} parent=11 // pred_check
          %p224 = pneg %p161
        $region22: #{forward.2} parent=11 // pred_check_branch
          %226 = sbr.rel (%p224) target = $region24
        $region23: #{forward.2} parent=11 // pred_region
          %228 = vsyncadd [#allocation10], 0
          %s230 = sshll.u32 %s5, 4
          %s231 = int_to_ptr.hbm [resolvable:$true] %s230
          %s232 = sshll.u32 [#allocation9], 4
          %s233 = int_to_ptr.vmem [resolvable:$true] %s232
          %235 = dma.hbm_to_vmem [thread:$0]  %s231, 16, %s233, [#allocation10]
        $region24: #{forward.2} parent=11 // pred_fallthru
          _
        // Predicated region
        $region25: #{forward.2} parent=11 // pred_check
          %p236 = pneg %p182
        $region26: #{forward.2} parent=11 // pred_check_branch
          %238 = sbr.rel (%p236) target = $region28
        $region27: #{forward.2} parent=11 // pred_region
          %240 = vsyncadd [#allocation10], 0
          %s242 = sshll.u32 %s6, 4
          %s243 = int_to_ptr.hbm [resolvable:$true] %s242
          %s244 = sshll.u32 [#allocation11], 4
          %s245 = int_to_ptr.vmem [resolvable:$true] %s244
          %247 = dma.hbm_to_vmem [thread:$0]  %s243, 16, %s245, [#allocation10]
        $region28: #{forward.2} parent=11 // pred_fallthru
          _
      $region12: #{forward.2} parent=5 // pred_fallthru
        _
      %p248 = scmp.lt.s32.totalorder %s20, 5
      // Predicated region
      $region29: #{forward.2} parent=5 // pred_check
        %p249 = pneg %p248
      $region30: #{forward.2} parent=5 // pred_check_branch
        %251 = sbr.rel (%p249) target = $region32
      $region31: #{forward.2} parent=5 // pred_region
        // Predicated region
        $region33: #{forward.2} parent=31 // pred_check
          %p252 = pneg %p61
        $region34: #{forward.2} parent=31 // pred_check_branch
          %254 = sbr.rel (%p252) target = $region36
        $region35: #{forward.2} parent=31 // pred_region
          %s255 = sand.u32 %s51, 1
          %s256 = scalar_lea.sflag [#allocation5], %s255
          %s257 = sand.u32 %s51, 1
          %s258 = smul.addr %s257, 576
          %s259 = scalar_lea.vmem [#allocation4], %s258
          %261 = vsyncadd %s256, 0
          %s262 = smul.addr %s20, 144
          %s263 = smul.addr %s262, 4
          %s264 = scalar_lea.hbm %s1, %s263
          %s265 = sshll.u32 %s264, 4
          %s266 = int_to_ptr.hbm [resolvable:$true] %s265
          %s267 = sshll.u32 %s259, 4
          %s268 = int_to_ptr.vmem [resolvable:$true] %s267
          %273 = dma.hbm_to_vmem [thread:$0]  %s266, 9216, %s268, %s256, 64, 64, 4
        $region36: #{forward.2} parent=31 // pred_fallthru
          _
        // Predicated region
        $region37: #{forward.2} parent=31 // pred_check
          %p274 = pneg %p87
        $region38: #{forward.2} parent=31 // pred_check_branch
          %276 = sbr.rel (%p274) target = $region40
        $region39: #{forward.2} parent=31 // pred_region
          %s277 = sand.u32 %s20, 1
          %s278 = scalar_lea.sflag [#allocation7], %s277
          %s279 = sand.u32 %s77, 1
          %s280 = scalar_lea.vmem [#allocation6], %s279
          %282 = vsyncadd %s278, 0
          %s283 = scalar_lea.hbm %s2, %s20
          %s285 = sshll.u32 %s283, 4
          %s286 = int_to_ptr.hbm [resolvable:$true] %s285
          %s287 = sshll.u32 %s280, 4
          %s288 = int_to_ptr.vmem [resolvable:$true] %s287
          %290 = dma.hbm_to_vmem [thread:$0]  %s286, 16, %s288, %s278
        $region40: #{forward.2} parent=31 // pred_fallthru
          _
        // Predicated region
        $region41: #{forward.2} parent=31 // pred_check
          %p291 = pneg %p113
        $region42: #{forward.2} parent=31 // pred_check_branch
          %293 = sbr.rel (%p291) target = $region44
        $region43: #{forward.2} parent=31 // pred_region
          %s294 = sand.u32 %s20, 1
          %s295 = scalar_lea.sflag [#allocation7], %s294
          %s296 = sand.u32 %s103, 1
          %s297 = scalar_lea.vmem [#allocation8], %s296
          %299 = vsyncadd %s295, 0
          %s300 = scalar_lea.hbm %s3, %s20
          %s302 = sshll.u32 %s300, 4
          %s303 = int_to_ptr.hbm [resolvable:$true] %s302
          %s304 = sshll.u32 %s297, 4
          %s305 = int_to_ptr.vmem [resolvable:$true] %s304
          %307 = dma.hbm_to_vmem [thread:$0]  %s303, 16, %s305, %s295
        $region44: #{forward.2} parent=31 // pred_fallthru
          _
      $region32: #{forward.2} parent=5 // pred_fallthru
        _
      %p308 = scmp.le.s32.totalorder 1, %s20
      %p309 = scmp.lt.s32.totalorder %s20, 6
      %p310 = pnand %p308, %p309
      %p311 = pneg %p310
      // Predicated region
      $region45: #{forward.2} parent=5 // pred_check
        _
      $region46: #{forward.2} parent=5 // pred_check_branch
        %313 = sbr.rel (%p310) target = $region48
      $region47: #{forward.2} parent=5 // pred_region
        %s314 = ssub.s32 %s20, 1
        %s315 = sand.u32 %s54, 1
        %s316 = scalar_lea.sflag [#allocation5], %s315
        %s317 = sand.u32 %s54, 1
        %s318 = smul.addr %s317, 576
        %s319 = scalar_lea.vmem [#allocation4], %s318
        // Predicated region
        $region49: #{forward.2} parent=47 // pred_check
          %p320 = pneg %p67
        $region50: #{forward.2} parent=47 // pred_check_branch
          %322 = sbr.rel (%p320) target = $region52
        $region51: #{forward.2} parent=47 // pred_region
          %324 = dma.done %s316, 9216
        $region52: #{forward.2} parent=47 // pred_fallthru
          _
        %s325 = sand.u32 %s25, 1
        %s326 = scalar_lea.sflag [#allocation7], %s325
        %s327 = sand.u32 %s80, 1
        %s328 = scalar_lea.vmem [#allocation6], %s327
        // Predicated region
        $region53: #{forward.2} parent=47 // pred_check
          %p329 = pneg %p93
        $region54: #{forward.2} parent=47 // pred_check_branch
          %331 = sbr.rel (%p329) target = $region56
        $region55: #{forward.2} parent=47 // pred_region
          %333 = dma.done %s326, 16
        $region56: #{forward.2} parent=47 // pred_fallthru
          _
        %s334 = sand.u32 %s25, 1
        %s335 = scalar_lea.sflag [#allocation7], %s334
        %s336 = sand.u32 %s106, 1
        %s337 = scalar_lea.vmem [#allocation8], %s336
        // Predicated region
        $region57: #{forward.2} parent=47 // pred_check
          %p338 = pneg %p119
        $region58: #{forward.2} parent=47 // pred_check_branch
          %340 = sbr.rel (%p338) target = $region60
        $region59: #{forward.2} parent=47 // pred_region
          %342 = dma.done %s335, 16
        $region60: #{forward.2} parent=47 // pred_fallthru
          _
        // Predicated region
        $region61: #{forward.2} parent=47 // pred_check
          %p343 = pneg %p161
        $region62: #{forward.2} parent=47 // pred_check_branch
          %345 = sbr.rel (%p343) target = $region64
        $region63: #{forward.2} parent=47 // pred_region
          %347 = dma.done [#allocation10], 16
        $region64: #{forward.2} parent=47 // pred_fallthru
          _
        // Predicated region
        $region65: #{forward.2} parent=47 // pred_check
          %p348 = pneg %p182
        $region66: #{forward.2} parent=47 // pred_check_branch
          %350 = sbr.rel (%p348) target = $region68
        $region67: #{forward.2} parent=47 // pred_region
          %352 = dma.done [#allocation10], 16
        $region68: #{forward.2} parent=47 // pred_fallthru
          _
        %p353 = pneg %p41
        %p354 = pneg %p38
        %s355 = sand.u32 %s54, 1
        %s356 = scalar_lea.sflag [#allocation5], %s355
        %s357 = sand.u32 %s54, 1
        %s358 = smul.addr %s357, 576
        %s359 = scalar_lea.vmem [#allocation4], %s358
        %p360 = pneg %p67
        %p361 = pneg %p64
        %s362 = sand.u32 %s25, 1
        %s363 = scalar_lea.sflag [#allocation7], %s362
        %s364 = sand.u32 %s80, 1
        %s365 = scalar_lea.vmem [#allocation6], %s364
        %p366 = pneg %p93
        %p367 = pneg %p90
        %s368 = sand.u32 %s25, 1
        %s369 = scalar_lea.sflag [#allocation7], %s368
        %s370 = sand.u32 %s106, 1
        %s371 = scalar_lea.vmem [#allocation8], %s370
        %p372 = pneg %p119
        %p373 = pneg %p116
        %p374 = pneg %p140
        %p375 = pneg %p137
        %p376 = pneg %p161
        %p377 = pneg %p158
        %p378 = pneg %p182
        %p379 = pneg %p179
        %p380 = pneg %p203
        %p381 = pneg %p200
        %p382 = scmp.eq.s32.totalorder %s25, 0
        // Predicated region
        $region69: #{forward.2} parent=47 // pred_check
          %p383 = pneg %p382
        $region70: #{forward.2} parent=47 // pred_check_branch
          %385 = sbr.rel (%p383) target = $region72
        $region71: #{forward.2} parent=47 // pred_region
          %v386 = vld [vmem:[%s0] sm:$0xf]
          %v387 = vld [vmem:[%s0 + $0x4] sm:$0xf]
          %v388 = vld [vmem:[%s0 + $0x8] sm:$0xf]
          %v389 = vld [vmem:[%s0 + $0xc] sm:$0xf]
          %v390 = vld [vmem:[%s0 + $0x10] sm:$0xf]
          %v391 = vld [vmem:[%s0 + $0x14] sm:$0xf]
          %v392 = vld [vmem:[%s0 + $0x18] sm:$0xf]
          %v393 = vld [vmem:[%s0 + $0x1c] sm:$0xf]
          %v394 = vld [vmem:[%s0 + $0x20] sm:$0xf]
          %v395 = vld [vmem:[%s0 + $0x24] sm:$0xf]
          %v396 = vld [vmem:[%s0 + $0x28] sm:$0xf]
          %v397 = vld [vmem:[%s0 + $0x2c] sm:$0xf]
          %v398 = vld [vmem:[%s0 + $0x30] sm:$0xf]
          %v399 = vld [vmem:[%s0 + $0x34] sm:$0xf]
          %v400 = vld [vmem:[%s0 + $0x38] sm:$0xf]
          %v401 = vld [vmem:[%s0 + $0x3c] sm:$0xf]
          %v402 = vld [vmem:[%s0 + $0x40] sm:$0xf]
          %v403 = vld [vmem:[%s0 + $0x44] sm:$0xf]
          %v404 = vld [vmem:[%s0 + $0x48] sm:$0xf]
          %v405 = vld [vmem:[%s0 + $0x4c] sm:$0xf]
          %v406 = vld [vmem:[%s0 + $0x50] sm:$0xf]
          %v407 = vld [vmem:[%s0 + $0x54] sm:$0xf]
          %v408 = vld [vmem:[%s0 + $0x58] sm:$0xf]
          %v409 = vld [vmem:[%s0 + $0x5c] sm:$0xf]
          %v410 = vld [vmem:[%s0 + $0x60] sm:$0xf]
          %v411 = vld [vmem:[%s0 + $0x64] sm:$0xf]
          %v412 = vld [vmem:[%s0 + $0x68] sm:$0xf]
          %v413 = vld [vmem:[%s0 + $0x6c] sm:$0xf]
          %v414 = vld [vmem:[%s0 + $0x70] sm:$0xf]
          %v415 = vld [vmem:[%s0 + $0x74] sm:$0xf]
          %v416 = vld [vmem:[%s0 + $0x78] sm:$0xf]
          %v417 = vld [vmem:[%s0 + $0x7c] sm:$0xf]
          %v418 = vld [vmem:[%s0 + $0x80] sm:$0xf]
          %v419 = vld [vmem:[%s0 + $0x84] sm:$0xf]
          %v420 = vld [vmem:[%s0 + $0x88] sm:$0xf]
          %v421 = vld [vmem:[%s0 + $0x8c] sm:$0xf]
          %v422 = vld [vmem:[%s0 + $0x90] sm:$0xf]
          %v423 = vld [vmem:[%s0 + $0x94] sm:$0xf]
          %v424 = vld [vmem:[%s0 + $0x98] sm:$0xf]
          %v425 = vld [vmem:[%s0 + $0x9c] sm:$0xf]
          %426 = vst [vmem:[#allocation2] sm:$0xf] %v386
          %427 = vst [vmem:[#allocation2 + $0x4] sm:$0xf] %v387
          %428 = vst [vmem:[#allocation2 + $0x8] sm:$0xf] %v388
          %429 = vst [vmem:[#allocation2 + $0xc] sm:$0xf] %v389
          %430 = vst [vmem:[#allocation2 + $0x10] sm:$0xf] %v390
          %431 = vst [vmem:[#allocation2 + $0x14] sm:$0xf] %v391
          %432 = vst [vmem:[#allocation2 + $0x18] sm:$0xf] %v392
          %433 = vst [vmem:[#allocation2 + $0x1c] sm:$0xf] %v393
          %434 = vst [vmem:[#allocation2 + $0x20] sm:$0xf] %v394
          %435 = vst [vmem:[#allocation2 + $0x24] sm:$0xf] %v395
          %436 = vst [vmem:[#allocation2 + $0x28] sm:$0xf] %v396
          %437 = vst [vmem:[#allocation2 + $0x2c] sm:$0xf] %v397
          %438 = vst [vmem:[#allocation2 + $0x30] sm:$0xf] %v398
          %439 = vst [vmem:[#allocation2 + $0x34] sm:$0xf] %v399
          %440 = vst [vmem:[#allocation2 + $0x38] sm:$0xf] %v400
          %441 = vst [vmem:[#allocation2 + $0x3c] sm:$0xf] %v401
          %442 = vst [vmem:[#allocation2 + $0x40] sm:$0xf] %v402
          %443 = vst [vmem:[#allocation2 + $0x44] sm:$0xf] %v403
          %444 = vst [vmem:[#allocation2 + $0x48] sm:$0xf] %v404
          %445 = vst [vmem:[#allocation2 + $0x4c] sm:$0xf] %v405
          %446 = vst [vmem:[#allocation2 + $0x50] sm:$0xf] %v406
          %447 = vst [vmem:[#allocation2 + $0x54] sm:$0xf] %v407
          %448 = vst [vmem:[#allocation2 + $0x58] sm:$0xf] %v408
          %449 = vst [vmem:[#allocation2 + $0x5c] sm:$0xf] %v409
          %450 = vst [vmem:[#allocation2 + $0x60] sm:$0xf] %v410
          %451 = vst [vmem:[#allocation2 + $0x64] sm:$0xf] %v411
          %452 = vst [vmem:[#allocation2 + $0x68] sm:$0xf] %v412
          %453 = vst [vmem:[#allocation2 + $0x6c] sm:$0xf] %v413
          %454 = vst [vmem:[#allocation2 + $0x70] sm:$0xf] %v414
          %455 = vst [vmem:[#allocation2 + $0x74] sm:$0xf] %v415
          %456 = vst [vmem:[#allocation2 + $0x78] sm:$0xf] %v416
          %457 = vst [vmem:[#allocation2 + $0x7c] sm:$0xf] %v417
          %458 = vst [vmem:[#allocation2 + $0x80] sm:$0xf] %v418
          %459 = vst [vmem:[#allocation2 + $0x84] sm:$0xf] %v419
          %460 = vst [vmem:[#allocation2 + $0x88] sm:$0xf] %v420
          %461 = vst [vmem:[#allocation2 + $0x8c] sm:$0xf] %v421
          %462 = vst [vmem:[#allocation2 + $0x90] sm:$0xf] %v422
          %463 = vst [vmem:[#allocation2 + $0x94] sm:$0xf] %v423
          %464 = vst [vmem:[#allocation2 + $0x98] sm:$0xf] %v424
          %465 = vst [vmem:[#allocation2 + $0x9c] sm:$0xf] %v425
          %466 = vst [vmem:[#allocation3] sm:$0xff] 0.0
          %467 = vst [vmem:[#allocation3 + $0x8] sm:$0xff] 0.0
          %468 = vst [vmem:[#allocation3 + $0x10] sm:$0xff] 0.0
          %469 = vst [vmem:[#allocation3 + $0x18] sm:$0xff] 0.0
          %470 = vst [vmem:[#allocation3 + $0x20] sm:$0xff] 0.0
          %471 = vst [vmem:[#allocation3 + $0x28] sm:$0xff] 0.0
          %472 = vst [vmem:[#allocation3 + $0x30] sm:$0xff] 0.0
          %473 = vst [vmem:[#allocation3 + $0x38] sm:$0xff] 0.0
          %474 = vst [vmem:[#allocation3 + $0x40] sm:$0xff] 0.0
          %475 = vst [vmem:[#allocation3 + $0x48] sm:$0xff] 0.0
          %476 = vst [vmem:[#allocation3 + $0x50] sm:$0xff] 0.0
          %477 = vst [vmem:[#allocation3 + $0x58] sm:$0xff] 0.0
          %478 = vst [vmem:[#allocation3 + $0x60] sm:$0xff] 0.0
          %479 = vst [vmem:[#allocation3 + $0x68] sm:$0xff] 0.0
          %480 = vst [vmem:[#allocation3 + $0x70] sm:$0xff] 0.0
          %481 = vst [vmem:[#allocation3 + $0x78] sm:$0xff] 0.0
        $region72: #{forward.2} parent=47 // pred_fallthru
          _
        %v482 = vld [vmem:[#allocation2] sm:$0xf]
        %v483 = vld [vmem:[#allocation2 + $0x8] sm:$0xf]
        %v484 = vld [vmem:[#allocation2 + $0x10] sm:$0xf]
        %v485 = vld [vmem:[#allocation2 + $0x18] sm:$0xf]
        %v486 = vld [vmem:[#allocation2 + $0x20] sm:$0xf]
        %v487 = vld [vmem:[#allocation2 + $0x28] sm:$0xf]
        %v488 = vld [vmem:[#allocation2 + $0x30] sm:$0xf]
        %v489 = vld [vmem:[#allocation2 + $0x38] sm:$0xf]
        %v490 = vld [vmem:[#allocation2 + $0x50] sm:$0xf]
        %v491 = vld [vmem:[#allocation2 + $0x58] sm:$0xf]
        %v492 = vld [vmem:[#allocation2 + $0x60] sm:$0xf]
        %v493 = vld [vmem:[#allocation2 + $0x68] sm:$0xf]
        %v494 = vld [vmem:[#allocation2 + $0x70] sm:$0xf]
        %v495 = vld [vmem:[#allocation2 + $0x78] sm:$0xf]
        %v496 = vld [vmem:[#allocation2 + $0x80] sm:$0xf]
        %v497 = vld [vmem:[#allocation2 + $0x88] sm:$0xf]
        %v498 = vld [vmem:[%s319] sm:$0xf]
        %v499 = vld [vmem:[%s319 + $0x4] sm:$0xf]
        %v500 = vld [vmem:[%s319 + $0x8] sm:$0xf]
        %v501 = vld [vmem:[%s319 + $0xc] sm:$0xf]
        %v502 = vld [vmem:[%s319 + $0x10] sm:$0xf]
        %v503 = vld [vmem:[%s319 + $0x14] sm:$0xf]
        %v504 = vld [vmem:[%s319 + $0x18] sm:$0xf]
        %v505 = vld [vmem:[%s319 + $0x1c] sm:$0xf]
        %v506 = vld [vmem:[%s319 + $0x20] sm:$0xf]
        %v507 = vld [vmem:[%s319 + $0x24] sm:$0xf]
        %v508 = vld [vmem:[%s319 + $0x28] sm:$0xf]
        %v509 = vld [vmem:[%s319 + $0x2c] sm:$0xf]
        %v510 = vld [vmem:[%s319 + $0x30] sm:$0xf]
        %v511 = vld [vmem:[%s319 + $0x34] sm:$0xf]
        %v512 = vld [vmem:[%s319 + $0x38] sm:$0xf]
        %v513 = vld [vmem:[%s319 + $0x3c] sm:$0xf]
        %v514 = vld [vmem:[#allocation2 + $0x4] sm:$0x1]
        %v515 = vld [vmem:[#allocation2 + $0xc] sm:$0x1]
        %v516 = vld [vmem:[#allocation2 + $0x14] sm:$0x1]
        %v517 = vld [vmem:[#allocation2 + $0x1c] sm:$0x1]
        %v518 = vld [vmem:[#allocation2 + $0x24] sm:$0x1]
        %v519 = vld [vmem:[#allocation2 + $0x2c] sm:$0x1]
        %v520 = vld [vmem:[#allocation2 + $0x34] sm:$0x1]
        %v521 = vld [vmem:[#allocation2 + $0x3c] sm:$0x1]
        %v522 = vld [vmem:[#allocation2 + $0x54] sm:$0x1]
        %v523 = vld [vmem:[#allocation2 + $0x5c] sm:$0x1]
        %v524 = vld [vmem:[#allocation2 + $0x64] sm:$0x1]
        %v525 = vld [vmem:[#allocation2 + $0x6c] sm:$0x1]
        %v526 = vld [vmem:[#allocation2 + $0x74] sm:$0x1]
        %v527 = vld [vmem:[#allocation2 + $0x7c] sm:$0x1]
        %v528 = vld [vmem:[#allocation2 + $0x84] sm:$0x1]
        %v529 = vld [vmem:[#allocation2 + $0x8c] sm:$0x1]
        %vm530 = vsmask.f32 3328
        %vm531 = vsmask.f32 7440
        %vm532 = vmor %vm530, %vm531
        %v534 = vshrl.u32 %v482, 16
        %v536 = vrot.slane %v534, 4
        %v537 = vshll.u32 %v482, 16
        %v539 = vrot.slane %v537, 5
        %v540 = vor.u32 %v536, %v539
        %v541 = vrot.slane %v540, 4
        %v543 = vshll.u32 %v514, 16
        %v545 = vrot.slane %v543, 5
        %v546 = vsel %vm532, %v541, %v545
        %v548 = vshrl.u32 %v483, 16
        %v550 = vrot.slane %v548, 4
        %v551 = vshll.u32 %v483, 16
        %v553 = vrot.slane %v551, 5
        %v554 = vor.u32 %v550, %v553
        %v555 = vrot.slane %v554, 4
        %v557 = vshll.u32 %v515, 16
        %v559 = vrot.slane %v557, 5
        %v560 = vsel %vm532, %v555, %v559
        %v562 = vshrl.u32 %v484, 16
        %v564 = vrot.slane %v562, 4
        %v565 = vshll.u32 %v484, 16
        %v567 = vrot.slane %v565, 5
        %v568 = vor.u32 %v564, %v567
        %v569 = vrot.slane %v568, 4
        %v571 = vshll.u32 %v516, 16
        %v573 = vrot.slane %v571, 5
        %v574 = vsel %vm532, %v569, %v573
        %v576 = vshrl.u32 %v485, 16
        %v578 = vrot.slane %v576, 4
        %v579 = vshll.u32 %v485, 16
        %v581 = vrot.slane %v579, 5
        %v582 = vor.u32 %v578, %v581
        %v583 = vrot.slane %v582, 4
        %v585 = vshll.u32 %v517, 16
        %v587 = vrot.slane %v585, 5
        %v588 = vsel %vm532, %v583, %v587
        %v590 = vshrl.u32 %v486, 16
        %v592 = vrot.slane %v590, 4
        %v593 = vshll.u32 %v486, 16
        %v595 = vrot.slane %v593, 5
        %v596 = vor.u32 %v592, %v595
        %v597 = vrot.slane %v596, 4
        %v599 = vshll.u32 %v518, 16
        %v601 = vrot.slane %v599, 5
        %v602 = vsel %vm532, %v597, %v601
        %v604 = vshrl.u32 %v487, 16
        %v606 = vrot.slane %v604, 4
        %v607 = vshll.u32 %v487, 16
        %v609 = vrot.slane %v607, 5
        %v610 = vor.u32 %v606, %v609
        %v611 = vrot.slane %v610, 4
        %v613 = vshll.u32 %v519, 16
        %v615 = vrot.slane %v613, 5
        %v616 = vsel %vm532, %v611, %v615
        %v618 = vshrl.u32 %v488, 16
        %v620 = vrot.slane %v618, 4
        %v621 = vshll.u32 %v488, 16
        %v623 = vrot.slane %v621, 5
        %v624 = vor.u32 %v620, %v623
        %v625 = vrot.slane %v624, 4
        %v627 = vshll.u32 %v520, 16
        %v629 = vrot.slane %v627, 5
        %v630 = vsel %vm532, %v625, %v629
        %v632 = vshrl.u32 %v489, 16
        %v634 = vrot.slane %v632, 4
        %v635 = vshll.u32 %v489, 16
        %v637 = vrot.slane %v635, 5
        %v638 = vor.u32 %v634, %v637
        %v639 = vrot.slane %v638, 4
        %v641 = vshll.u32 %v521, 16
        %v643 = vrot.slane %v641, 5
        %v644 = vsel %vm532, %v639, %v643
        %v646 = vshrl.u32 %v490, 16
        %v648 = vrot.slane %v646, 4
        %v649 = vshll.u32 %v490, 16
        %v651 = vrot.slane %v649, 5
        %v652 = vor.u32 %v648, %v651
        %v653 = vrot.slane %v652, 4
        %v655 = vshll.u32 %v522, 16
        %v657 = vrot.slane %v655, 5
        %v658 = vsel %vm532, %v653, %v657
        %v660 = vshrl.u32 %v491, 16
        %v662 = vrot.slane %v660, 4
        %v663 = vshll.u32 %v491, 16
        %v665 = vrot.slane %v663, 5
        %v666 = vor.u32 %v662, %v665
        %v667 = vrot.slane %v666, 4
        %v669 = vshll.u32 %v523, 16
        %v671 = vrot.slane %v669, 5
        %v672 = vsel %vm532, %v667, %v671
        %v674 = vshrl.u32 %v492, 16
        %v676 = vrot.slane %v674, 4
        %v677 = vshll.u32 %v492, 16
        %v679 = vrot.slane %v677, 5
        %v680 = vor.u32 %v676, %v679
        %v681 = vrot.slane %v680, 4
        %v683 = vshll.u32 %v524, 16
        %v685 = vrot.slane %v683, 5
        %v686 = vsel %vm532, %v681, %v685
        %v688 = vshrl.u32 %v493, 16
        %v690 = vrot.slane %v688, 4
        %v691 = vshll.u32 %v493, 16
        %v693 = vrot.slane %v691, 5
        %v694 = vor.u32 %v690, %v693
        %v695 = vrot.slane %v694, 4
        %v697 = vshll.u32 %v525, 16
        %v699 = vrot.slane %v697, 5
        %v700 = vsel %vm532, %v695, %v699
        %v702 = vshrl.u32 %v494, 16
        %v704 = vrot.slane %v702, 4
        %v705 = vshll.u32 %v494, 16
        %v707 = vrot.slane %v705, 5
        %v708 = vor.u32 %v704, %v707
        %v709 = vrot.slane %v708, 4
        %v711 = vshll.u32 %v526, 16
        %v713 = vrot.slane %v711, 5
        %v714 = vsel %vm532, %v709, %v713
        %v716 = vshrl.u32 %v495, 16
        %v718 = vrot.slane %v716, 4
        %v719 = vshll.u32 %v495, 16
        %v721 = vrot.slane %v719, 5
        %v722 = vor.u32 %v718, %v721
        %v723 = vrot.slane %v722, 4
        %v725 = vshll.u32 %v527, 16
        %v727 = vrot.slane %v725, 5
        %v728 = vsel %vm532, %v723, %v727
        %v730 = vshrl.u32 %v496, 16
        %v732 = vrot.slane %v730, 4
        %v733 = vshll.u32 %v496, 16
        %v735 = vrot.slane %v733, 5
        %v736 = vor.u32 %v732, %v735
        %v737 = vrot.slane %v736, 4
        %v739 = vshll.u32 %v528, 16
        %v741 = vrot.slane %v739, 5
        %v742 = vsel %vm532, %v737, %v741
        %v744 = vshrl.u32 %v497, 16
        %v746 = vrot.slane %v744, 4
        %v747 = vshll.u32 %v497, 16
        %v749 = vrot.slane %v747, 5
        %v750 = vor.u32 %v746, %v749
        %v751 = vrot.slane %v750, 4
        %v753 = vshll.u32 %v529, 16
        %v755 = vrot.slane %v753, 5
        %v756 = vsel %vm532, %v751, %v755
        %s757 = scalar_lea.vmem %s319, 64 [#allocation4]
        %v758 = vld [vmem:[%s757] sm:$0xf]
        %v759 = vld [vmem:[%s757 + $0x4] sm:$0xf]
        %v760 = vld [vmem:[%s757 + $0x8] sm:$0xf]
        %v761 = vld [vmem:[%s757 + $0xc] sm:$0xf]
        %v762 = vld [vmem:[%s757 + $0x10] sm:$0xf]
        %v763 = vld [vmem:[%s757 + $0x14] sm:$0xf]
        %v764 = vld [vmem:[%s757 + $0x18] sm:$0xf]
        %v765 = vld [vmem:[%s757 + $0x1c] sm:$0xf]
        %v766 = vld [vmem:[%s757 + $0x20] sm:$0xf]
        %v767 = vld [vmem:[%s757 + $0x24] sm:$0xf]
        %v768 = vld [vmem:[%s757 + $0x28] sm:$0xf]
        %v769 = vld [vmem:[%s757 + $0x2c] sm:$0xf]
        %v770 = vld [vmem:[%s757 + $0x30] sm:$0xf]
        %v771 = vld [vmem:[%s757 + $0x34] sm:$0xf]
        %v772 = vld [vmem:[%s757 + $0x38] sm:$0xf]
        %v773 = vld [vmem:[%s757 + $0x3c] sm:$0xf]
        %v774 = vunpack.c.l.b16 %v546
        %v775 = vunpack.c.l.b16 %v560
        %v776 = vunpack.c.l.b16 %v574
        %v777 = vunpack.c.l.b16 %v588
        %v778 = vunpack.c.l.b16 %v602
        %v779 = vunpack.c.l.b16 %v616
        %v780 = vunpack.c.l.b16 %v630
        %v781 = vunpack.c.l.b16 %v644
        %v782 = vunpack.c.l.b16 %v658
        %v783 = vunpack.c.l.b16 %v672
        %v784 = vunpack.c.l.b16 %v686
        %v785 = vunpack.c.l.b16 %v700
        %v786 = vunpack.c.l.b16 %v714
        %v787 = vunpack.c.l.b16 %v728
        %v788 = vunpack.c.l.b16 %v742
        %v789 = vunpack.c.l.b16 %v756
        %v790 = vpack.c.b16 %v775, %v774
        %v791 = vpack.c.b16 %v777, %v776
        %v792 = vpack.c.b16 %v779, %v778
        %v793 = vpack.c.b16 %v781, %v780
        %v794 = vpack.c.b16 %v783, %v782
        %v795 = vpack.c.b16 %v785, %v784
        %v796 = vpack.c.b16 %v787, %v786
        %v797 = vpack.c.b16 %v789, %v788
        %v822 = vunpack.c.l.b16 %v758
        %v823 = vunpack.c.l.b16 %v759
        %v824 = vunpack.c.l.b16 %v760
        %v825 = vunpack.c.l.b16 %v761
        %v826 = vunpack.c.l.b16 %v762
        %v827 = vunpack.c.l.b16 %v763
        %v828 = vunpack.c.l.b16 %v764
        %v829 = vunpack.c.l.b16 %v765
        %v830 = vunpack.c.l.b16 %v766
        %v831 = vunpack.c.l.b16 %v767
        %v832 = vunpack.c.l.b16 %v768
        %v833 = vunpack.c.l.b16 %v769
        %v834 = vunpack.c.l.b16 %v770
        %v835 = vunpack.c.l.b16 %v771
        %v836 = vunpack.c.l.b16 %v772
        %v837 = vunpack.c.l.b16 %v773
        %v838 = vpack.c.b16 %v823, %v822
        %v839 = vpack.c.b16 %v825, %v824
        %v840 = vpack.c.b16 %v827, %v826
        %v841 = vpack.c.b16 %v829, %v828
        %v842 = vpack.c.b16 %v831, %v830
        %v843 = vpack.c.b16 %v833, %v832
        %v844 = vpack.c.b16 %v835, %v834
        %v845 = vpack.c.b16 %v837, %v836
        %854 = vmatpush.bf16.msra.mxu0 %v845
        %855 = vmatpush.bf16.msra.mxu0 %v844
        %856 = vmatpush.bf16.msra.mxu0 %v843
        %857 = vmatpush.bf16.msra.mxu0 %v842
        %858 = vmatpush.bf16.msra.mxu0 %v841
        %859 = vmatpush.bf16.msra.mxu0 %v840
        %860 = vmatpush.bf16.msra.mxu0 %v839
        %861 = vmatpush.bf16.msra.mxu0 %v838
        %862 = vmatmul.bf16.gmra.mxu0 %v790
        %v863 = vpop.f32.mrf.mxu0
        %v864 = vadd.f32 0.0, %v863
        %v865 = vpop.f32.mrf.mxu0
        %v866 = vadd.f32 0.0, %v865
        %867 = vmatmul.bf16.gmra.mxu0 %v791
        %v868 = vpop.f32.mrf.mxu0
        %v869 = vadd.f32 0.0, %v868
        %v870 = vpop.f32.mrf.mxu0
        %v871 = vadd.f32 0.0, %v870
        %872 = vmatmul.bf16.gmra.mxu0 %v792
        %v873 = vpop.f32.mrf.mxu0
        %v874 = vadd.f32 0.0, %v873
        %v875 = vpop.f32.mrf.mxu0
        %v876 = vadd.f32 0.0, %v875
        %877 = vmatmul.bf16.gmra.mxu0 %v793
        %v878 = vpop.f32.mrf.mxu0
        %v879 = vadd.f32 0.0, %v878
        %v880 = vpop.f32.mrf.mxu0
        %v881 = vadd.f32 0.0, %v880
        %882 = vmatmul.bf16.gmra.mxu0 %v794
        %v883 = vpop.f32.mrf.mxu0
        %v884 = vadd.f32 0.0, %v883
        %v885 = vpop.f32.mrf.mxu0
        %v886 = vadd.f32 0.0, %v885
        %887 = vmatmul.bf16.gmra.mxu0 %v795
        %v888 = vpop.f32.mrf.mxu0
        %v889 = vadd.f32 0.0, %v888
        %v890 = vpop.f32.mrf.mxu0
        %v891 = vadd.f32 0.0, %v890
        %892 = vmatmul.bf16.gmra.mxu0 %v796
        %v893 = vpop.f32.mrf.mxu0
        %v894 = vadd.f32 0.0, %v893
        %v895 = vpop.f32.mrf.mxu0
        %v896 = vadd.f32 0.0, %v895
        %897 = vmatmul.bf16.gmra.mxu0 %v797
        %v898 = vpop.f32.mrf.mxu0
        %v899 = vadd.f32 0.0, %v898
        %v900 = vpop.f32.mrf.mxu0
        %v901 = vadd.f32 0.0, %v900
        %902 = vdwg.mxu0
        %v919 = vunpack.c.l.b16 %v482
        %v920 = vunpack.c.l.b16 %v483
        %v921 = vunpack.c.l.b16 %v484
        %v922 = vunpack.c.l.b16 %v485
        %v923 = vunpack.c.l.b16 %v486
        %v924 = vunpack.c.l.b16 %v487
        %v925 = vunpack.c.l.b16 %v488
        %v926 = vunpack.c.l.b16 %v489
        %v927 = vunpack.c.l.b16 %v490
        %v928 = vunpack.c.l.b16 %v491
        %v929 = vunpack.c.l.b16 %v492
        %v930 = vunpack.c.l.b16 %v493
        %v931 = vunpack.c.l.b16 %v494
        %v932 = vunpack.c.l.b16 %v495
        %v933 = vunpack.c.l.b16 %v496
        %v934 = vunpack.c.l.b16 %v497
        %v935 = vpack.c.b16 %v920, %v919
        %v936 = vpack.c.b16 %v922, %v921
        %v937 = vpack.c.b16 %v924, %v923
        %v938 = vpack.c.b16 %v926, %v925
        %v939 = vpack.c.b16 %v928, %v927
        %v940 = vpack.c.b16 %v930, %v929
        %v941 = vpack.c.b16 %v932, %v931
        %v942 = vpack.c.b16 %v934, %v933
        %v967 = vunpack.c.l.b16 %v498
        %v968 = vunpack.c.l.b16 %v499
        %v969 = vunpack.c.l.b16 %v500
        %v970 = vunpack.c.l.b16 %v501
        %v971 = vunpack.c.l.b16 %v502
        %v972 = vunpack.c.l.b16 %v503
        %v973 = vunpack.c.l.b16 %v504
        %v974 = vunpack.c.l.b16 %v505
        %v975 = vunpack.c.l.b16 %v506
        %v976 = vunpack.c.l.b16 %v507
        %v977 = vunpack.c.l.b16 %v508
        %v978 = vunpack.c.l.b16 %v509
        %v979 = vunpack.c.l.b16 %v510
        %v980 = vunpack.c.l.b16 %v511
        %v981 = vunpack.c.l.b16 %v512
        %v982 = vunpack.c.l.b16 %v513
        %v983 = vpack.c.b16 %v968, %v967
        %v984 = vpack.c.b16 %v970, %v969
        %v985 = vpack.c.b16 %v972, %v971
        %v986 = vpack.c.b16 %v974, %v973
        %v987 = vpack.c.b16 %v976, %v975
        %v988 = vpack.c.b16 %v978, %v977
        %v989 = vpack.c.b16 %v980, %v979
        %v990 = vpack.c.b16 %v982, %v981
        %999 = vmatpush.bf16.msra.mxu0 %v990
        %1000 = vmatpush.bf16.msra.mxu0 %v989
        %1001 = vmatpush.bf16.msra.mxu0 %v988
        %1002 = vmatpush.bf16.msra.mxu0 %v987
        %1003 = vmatpush.bf16.msra.mxu0 %v986
        %1004 = vmatpush.bf16.msra.mxu0 %v985
        %1005 = vmatpush.bf16.msra.mxu0 %v984
        %1006 = vmatpush.bf16.msra.mxu0 %v983
        %1007 = vmatmul.bf16.gmra.mxu0 %v935
        %v1008 = vpop.f32.mrf.mxu0
        %v1009 = vadd.f32 %v864, %v1008
        %v1010 = vpop.f32.mrf.mxu0
        %v1011 = vadd.f32 %v866, %v1010
        %1012 = vmatmul.bf16.gmra.mxu0 %v936
        %v1013 = vpop.f32.mrf.mxu0
        %v1014 = vadd.f32 %v869, %v1013
        %v1015 = vpop.f32.mrf.mxu0
        %v1016 = vadd.f32 %v871, %v1015
        %1017 = vmatmul.bf16.gmra.mxu0 %v937
        %v1018 = vpop.f32.mrf.mxu0
        %v1019 = vadd.f32 %v874, %v1018
        %v1020 = vpop.f32.mrf.mxu0
        %v1021 = vadd.f32 %v876, %v1020
        %1022 = vmatmul.bf16.gmra.mxu0 %v938
        %v1023 = vpop.f32.mrf.mxu0
        %v1024 = vadd.f32 %v879, %v1023
        %v1025 = vpop.f32.mrf.mxu0
        %v1026 = vadd.f32 %v881, %v1025
        %1027 = vmatmul.bf16.gmra.mxu0 %v939
        %v1028 = vpop.f32.mrf.mxu0
        %v1029 = vadd.f32 %v884, %v1028
        %v1030 = vpop.f32.mrf.mxu0
        %v1031 = vadd.f32 %v886, %v1030
        %1032 = vmatmul.bf16.gmra.mxu0 %v940
        %v1033 = vpop.f32.mrf.mxu0
        %v1034 = vadd.f32 %v889, %v1033
        %v1035 = vpop.f32.mrf.mxu0
        %v1036 = vadd.f32 %v891, %v1035
        %1037 = vmatmul.bf16.gmra.mxu0 %v941
        %v1038 = vpop.f32.mrf.mxu0
        %v1039 = vadd.f32 %v894, %v1038
        %v1040 = vpop.f32.mrf.mxu0
        %v1041 = vadd.f32 %v896, %v1040
        %1042 = vmatmul.bf16.gmra.mxu0 %v942
        %v1043 = vpop.f32.mrf.mxu0
        %v1044 = vadd.f32 %v899, %v1043
        %v1045 = vpop.f32.mrf.mxu0
        %v1046 = vadd.f32 %v901, %v1045
        %1047 = vdwg.mxu0
        %v1048 = vld [vmem:[#allocation2] sm:$0xe]
        %v1049 = vld [vmem:[#allocation2 + $0x8] sm:$0xe]
        %v1050 = vld [vmem:[#allocation2 + $0x10] sm:$0xe]
        %v1051 = vld [vmem:[#allocation2 + $0x18] sm:$0xe]
        %v1052 = vld [vmem:[#allocation2 + $0x20] sm:$0xe]
        %v1053 = vld [vmem:[#allocation2 + $0x28] sm:$0xe]
        %v1054 = vld [vmem:[#allocation2 + $0x30] sm:$0xe]
        %v1055 = vld [vmem:[#allocation2 + $0x38] sm:$0xe]
        %v1056 = vld [vmem:[#allocation2 + $0x50] sm:$0xe]
        %v1057 = vld [vmem:[#allocation2 + $0x58] sm:$0xe]
        %v1058 = vld [vmem:[#allocation2 + $0x60] sm:$0xe]
        %v1059 = vld [vmem:[#allocation2 + $0x68] sm:$0xe]
        %v1060 = vld [vmem:[#allocation2 + $0x70] sm:$0xe]
        %v1061 = vld [vmem:[#allocation2 + $0x78] sm:$0xe]
        %v1062 = vld [vmem:[#allocation2 + $0x80] sm:$0xe]
        %v1063 = vld [vmem:[#allocation2 + $0x88] sm:$0xe]
        %vm1096 = vcmask 1042432
        %vm1097 = vcmask 1046532
        %vm1098 = vmor %vm1096, %vm1097
        %v1099 = vrot.slane %v1048, 5
        %v1100 = vrot.slane %v1099, 4
        %v1101 = vrot.slane %v514, 5
        %v1102 = vsel %vm1098, %v1100, %v1101
        %v1103 = vrot.slane %v1049, 5
        %v1104 = vrot.slane %v1103, 4
        %v1105 = vrot.slane %v515, 5
        %v1106 = vsel %vm1098, %v1104, %v1105
        %v1107 = vrot.slane %v1050, 5
        %v1108 = vrot.slane %v1107, 4
        %v1109 = vrot.slane %v516, 5
        %v1110 = vsel %vm1098, %v1108, %v1109
        %v1111 = vrot.slane %v1051, 5
        %v1112 = vrot.slane %v1111, 4
        %v1113 = vrot.slane %v517, 5
        %v1114 = vsel %vm1098, %v1112, %v1113
        %v1115 = vrot.slane %v1052, 5
        %v1116 = vrot.slane %v1115, 4
        %v1117 = vrot.slane %v518, 5
        %v1118 = vsel %vm1098, %v1116, %v1117
        %v1119 = vrot.slane %v1053, 5
        %v1120 = vrot.slane %v1119, 4
        %v1121 = vrot.slane %v519, 5
        %v1122 = vsel %vm1098, %v1120, %v1121
        %v1123 = vrot.slane %v1054, 5
        %v1124 = vrot.slane %v1123, 4
        %v1125 = vrot.slane %v520, 5
        %v1126 = vsel %vm1098, %v1124, %v1125
        %v1127 = vrot.slane %v1055, 5
        %v1128 = vrot.slane %v1127, 4
        %v1129 = vrot.slane %v521, 5
        %v1130 = vsel %vm1098, %v1128, %v1129
        %v1131 = vrot.slane %v1056, 5
        %v1132 = vrot.slane %v1131, 4
        %v1133 = vrot.slane %v522, 5
        %v1134 = vsel %vm1098, %v1132, %v1133
        %v1135 = vrot.slane %v1057, 5
        %v1136 = vrot.slane %v1135, 4
        %v1137 = vrot.slane %v523, 5
        %v1138 = vsel %vm1098, %v1136, %v1137
        %v1139 = vrot.slane %v1058, 5
        %v1140 = vrot.slane %v1139, 4
        %v1141 = vrot.slane %v524, 5
        %v1142 = vsel %vm1098, %v1140, %v1141
        %v1143 = vrot.slane %v1059, 5
        %v1144 = vrot.slane %v1143, 4
        %v1145 = vrot.slane %v525, 5
        %v1146 = vsel %vm1098, %v1144, %v1145
        %v1147 = vrot.slane %v1060, 5
        %v1148 = vrot.slane %v1147, 4
        %v1149 = vrot.slane %v526, 5
        %v1150 = vsel %vm1098, %v1148, %v1149
        %v1151 = vrot.slane %v1061, 5
        %v1152 = vrot.slane %v1151, 4
        %v1153 = vrot.slane %v527, 5
        %v1154 = vsel %vm1098, %v1152, %v1153
        %v1155 = vrot.slane %v1062, 5
        %v1156 = vrot.slane %v1155, 4
        %v1157 = vrot.slane %v528, 5
        %v1158 = vsel %vm1098, %v1156, %v1157
        %v1159 = vrot.slane %v1063, 5
        %v1160 = vrot.slane %v1159, 4
        %v1161 = vrot.slane %v529, 5
        %v1162 = vsel %vm1098, %v1160, %v1161
        %s1163 = scalar_lea.vmem %s319, 128 [#allocation4]
        %v1164 = vld [vmem:[%s1163] sm:$0xf]
        %v1165 = vld [vmem:[%s1163 + $0x4] sm:$0xf]
        %v1166 = vld [vmem:[%s1163 + $0x8] sm:$0xf]
        %v1167 = vld [vmem:[%s1163 + $0xc] sm:$0xf]
        %v1168 = vld [vmem:[%s1163 + $0x10] sm:$0xf]
        %v1169 = vld [vmem:[%s1163 + $0x14] sm:$0xf]
        %v1170 = vld [vmem:[%s1163 + $0x18] sm:$0xf]
        %v1171 = vld [vmem:[%s1163 + $0x1c] sm:$0xf]
        %v1172 = vld [vmem:[%s1163 + $0x20] sm:$0xf]
        %v1173 = vld [vmem:[%s1163 + $0x24] sm:$0xf]
        %v1174 = vld [vmem:[%s1163 + $0x28] sm:$0xf]
        %v1175 = vld [vmem:[%s1163 + $0x2c] sm:$0xf]
        %v1176 = vld [vmem:[%s1163 + $0x30] sm:$0xf]
        %v1177 = vld [vmem:[%s1163 + $0x34] sm:$0xf]
        %v1178 = vld [vmem:[%s1163 + $0x38] sm:$0xf]
        %v1179 = vld [vmem:[%s1163 + $0x3c] sm:$0xf]
        %v1180 = vunpack.c.l.b16 %v1102
        %v1181 = vunpack.c.l.b16 %v1106
        %v1182 = vunpack.c.l.b16 %v1110
        %v1183 = vunpack.c.l.b16 %v1114
        %v1184 = vunpack.c.l.b16 %v1118
        %v1185 = vunpack.c.l.b16 %v1122
        %v1186 = vunpack.c.l.b16 %v1126
        %v1187 = vunpack.c.l.b16 %v1130
        %v1188 = vunpack.c.l.b16 %v1134
        %v1189 = vunpack.c.l.b16 %v1138
        %v1190 = vunpack.c.l.b16 %v1142
        %v1191 = vunpack.c.l.b16 %v1146
        %v1192 = vunpack.c.l.b16 %v1150
        %v1193 = vunpack.c.l.b16 %v1154
        %v1194 = vunpack.c.l.b16 %v1158
        %v1195 = vunpack.c.l.b16 %v1162
        %v1196 = vpack.c.b16 %v1181, %v1180
        %v1197 = vpack.c.b16 %v1183, %v1182
        %v1198 = vpack.c.b16 %v1185, %v1184
        %v1199 = vpack.c.b16 %v1187, %v1186
        %v1200 = vpack.c.b16 %v1189, %v1188
        %v1201 = vpack.c.b16 %v1191, %v1190
        %v1202 = vpack.c.b16 %v1193, %v1192
        %v1203 = vpack.c.b16 %v1195, %v1194
        %v1228 = vunpack.c.l.b16 %v1164
        %v1229 = vunpack.c.l.b16 %v1165
        %v1230 = vunpack.c.l.b16 %v1166
        %v1231 = vunpack.c.l.b16 %v1167
        %v1232 = vunpack.c.l.b16 %v1168
        %v1233 = vunpack.c.l.b16 %v1169
        %v1234 = vunpack.c.l.b16 %v1170
        %v1235 = vunpack.c.l.b16 %v1171
        %v1236 = vunpack.c.l.b16 %v1172
        %v1237 = vunpack.c.l.b16 %v1173
        %v1238 = vunpack.c.l.b16 %v1174
        %v1239 = vunpack.c.l.b16 %v1175
        %v1240 = vunpack.c.l.b16 %v1176
        %v1241 = vunpack.c.l.b16 %v1177
        %v1242 = vunpack.c.l.b16 %v1178
        %v1243 = vunpack.c.l.b16 %v1179
        %v1244 = vpack.c.b16 %v1229, %v1228
        %v1245 = vpack.c.b16 %v1231, %v1230
        %v1246 = vpack.c.b16 %v1233, %v1232
        %v1247 = vpack.c.b16 %v1235, %v1234
        %v1248 = vpack.c.b16 %v1237, %v1236
        %v1249 = vpack.c.b16 %v1239, %v1238
        %v1250 = vpack.c.b16 %v1241, %v1240
        %v1251 = vpack.c.b16 %v1243, %v1242
        %1260 = vmatpush.bf16.msra.mxu0 %v1251
        %1261 = vmatpush.bf16.msra.mxu0 %v1250
        %1262 = vmatpush.bf16.msra.mxu0 %v1249
        %1263 = vmatpush.bf16.msra.mxu0 %v1248
        %1264 = vmatpush.bf16.msra.mxu0 %v1247
        %1265 = vmatpush.bf16.msra.mxu0 %v1246
        %1266 = vmatpush.bf16.msra.mxu0 %v1245
        %1267 = vmatpush.bf16.msra.mxu0 %v1244
        %1268 = vmatmul.bf16.gmra.mxu0 %v1196
        %v1269 = vpop.f32.mrf.mxu0
        %v1270 = vadd.f32 0.0, %v1269
        %v1271 = vpop.f32.mrf.mxu0
        %v1272 = vadd.f32 0.0, %v1271
        %1273 = vmatmul.bf16.gmra.mxu0 %v1197
        %v1274 = vpop.f32.mrf.mxu0
        %v1275 = vadd.f32 0.0, %v1274
        %v1276 = vpop.f32.mrf.mxu0
        %v1277 = vadd.f32 0.0, %v1276
        %1278 = vmatmul.bf16.gmra.mxu0 %v1198
        %v1279 = vpop.f32.mrf.mxu0
        %v1280 = vadd.f32 0.0, %v1279
        %v1281 = vpop.f32.mrf.mxu0
        %v1282 = vadd.f32 0.0, %v1281
        %1283 = vmatmul.bf16.gmra.mxu0 %v1199
        %v1284 = vpop.f32.mrf.mxu0
        %v1285 = vadd.f32 0.0, %v1284
        %v1286 = vpop.f32.mrf.mxu0
        %v1287 = vadd.f32 0.0, %v1286
        %1288 = vmatmul.bf16.gmra.mxu0 %v1200
        %v1289 = vpop.f32.mrf.mxu0
        %v1290 = vadd.f32 0.0, %v1289
        %v1291 = vpop.f32.mrf.mxu0
        %v1292 = vadd.f32 0.0, %v1291
        %1293 = vmatmul.bf16.gmra.mxu0 %v1201
        %v1294 = vpop.f32.mrf.mxu0
        %v1295 = vadd.f32 0.0, %v1294
        %v1296 = vpop.f32.mrf.mxu0
        %v1297 = vadd.f32 0.0, %v1296
        %1298 = vmatmul.bf16.gmra.mxu0 %v1202
        %v1299 = vpop.f32.mrf.mxu0
        %v1300 = vadd.f32 0.0, %v1299
        %v1301 = vpop.f32.mrf.mxu0
        %v1302 = vadd.f32 0.0, %v1301
        %1303 = vmatmul.bf16.gmra.mxu0 %v1203
        %v1304 = vpop.f32.mrf.mxu0
        %v1305 = vadd.f32 0.0, %v1304
        %v1306 = vpop.f32.mrf.mxu0
        %v1307 = vadd.f32 0.0, %v1306
        %1308 = vdwg.mxu0
        %v1309 = vadd.f32 %v1009, %v1270
        %v1310 = vadd.f32 %v1011, %v1272
        %v1311 = vadd.f32 %v1014, %v1275
        %v1312 = vadd.f32 %v1016, %v1277
        %v1313 = vadd.f32 %v1019, %v1280
        %v1314 = vadd.f32 %v1021, %v1282
        %v1315 = vadd.f32 %v1024, %v1285
        %v1316 = vadd.f32 %v1026, %v1287
        %v1317 = vadd.f32 %v1029, %v1290
        %v1318 = vadd.f32 %v1031, %v1292
        %v1319 = vadd.f32 %v1034, %v1295
        %v1320 = vadd.f32 %v1036, %v1297
        %v1321 = vadd.f32 %v1039, %v1300
        %v1322 = vadd.f32 %v1041, %v1302
        %v1323 = vadd.f32 %v1044, %v1305
        %v1324 = vadd.f32 %v1046, %v1307
        %s1325 = scalar_lea.vmem [#allocation2], 8
        %v1326 = vld [vmem:[%s1325] sm:$0xf]
        %v1327 = vld [vmem:[%s1325 + $0x8] sm:$0xf]
        %v1328 = vld [vmem:[%s1325 + $0x10] sm:$0xf]
        %v1329 = vld [vmem:[%s1325 + $0x18] sm:$0xf]
        %v1330 = vld [vmem:[%s1325 + $0x20] sm:$0xf]
        %v1331 = vld [vmem:[%s1325 + $0x28] sm:$0xf]
        %v1332 = vld [vmem:[%s1325 + $0x30] sm:$0xf]
        %v1333 = vld [vmem:[%s1325 + $0x38] sm:$0xf]
        %v1334 = vld [vmem:[%s1325 + $0x50] sm:$0xf]
        %v1335 = vld [vmem:[%s1325 + $0x58] sm:$0xf]
        %v1336 = vld [vmem:[%s1325 + $0x60] sm:$0xf]
        %v1337 = vld [vmem:[%s1325 + $0x68] sm:$0xf]
        %v1338 = vld [vmem:[%s1325 + $0x70] sm:$0xf]
        %v1339 = vld [vmem:[%s1325 + $0x78] sm:$0xf]
        %v1340 = vld [vmem:[%s1325 + $0x80] sm:$0xf]
        %v1341 = vld [vmem:[%s1325 + $0x88] sm:$0xf]
        %s1342 = scalar_lea.vmem %s319, 192 [#allocation4]
        %v1343 = vld [vmem:[%s1342] sm:$0xf]
        %v1344 = vld [vmem:[%s1342 + $0x4] sm:$0xf]
        %v1345 = vld [vmem:[%s1342 + $0x8] sm:$0xf]
        %v1346 = vld [vmem:[%s1342 + $0xc] sm:$0xf]
        %v1347 = vld [vmem:[%s1342 + $0x10] sm:$0xf]
        %v1348 = vld [vmem:[%s1342 + $0x14] sm:$0xf]
        %v1349 = vld [vmem:[%s1342 + $0x18] sm:$0xf]
        %v1350 = vld [vmem:[%s1342 + $0x1c] sm:$0xf]
        %v1351 = vld [vmem:[%s1342 + $0x20] sm:$0xf]
        %v1352 = vld [vmem:[%s1342 + $0x24] sm:$0xf]
        %v1353 = vld [vmem:[%s1342 + $0x28] sm:$0xf]
        %v1354 = vld [vmem:[%s1342 + $0x2c] sm:$0xf]
        %v1355 = vld [vmem:[%s1342 + $0x30] sm:$0xf]
        %v1356 = vld [vmem:[%s1342 + $0x34] sm:$0xf]
        %v1357 = vld [vmem:[%s1342 + $0x38] sm:$0xf]
        %v1358 = vld [vmem:[%s1342 + $0x3c] sm:$0xf]
        %v1375 = vunpack.c.l.b16 %v1326
        %v1376 = vunpack.c.l.b16 %v1327
        %v1377 = vunpack.c.l.b16 %v1328
        %v1378 = vunpack.c.l.b16 %v1329
        %v1379 = vunpack.c.l.b16 %v1330
        %v1380 = vunpack.c.l.b16 %v1331
        %v1381 = vunpack.c.l.b16 %v1332
        %v1382 = vunpack.c.l.b16 %v1333
        %v1383 = vunpack.c.l.b16 %v1334
        %v1384 = vunpack.c.l.b16 %v1335
        %v1385 = vunpack.c.l.b16 %v1336
        %v1386 = vunpack.c.l.b16 %v1337
        %v1387 = vunpack.c.l.b16 %v1338
        %v1388 = vunpack.c.l.b16 %v1339
        %v1389 = vunpack.c.l.b16 %v1340
        %v1390 = vunpack.c.l.b16 %v1341
        %v1391 = vpack.c.b16 %v1376, %v1375
        %v1392 = vpack.c.b16 %v1378, %v1377
        %v1393 = vpack.c.b16 %v1380, %v1379
        %v1394 = vpack.c.b16 %v1382, %v1381
        %v1395 = vpack.c.b16 %v1384, %v1383
        %v1396 = vpack.c.b16 %v1386, %v1385
        %v1397 = vpack.c.b16 %v1388, %v1387
        %v1398 = vpack.c.b16 %v1390, %v1389
        %v1423 = vunpack.c.l.b16 %v1343
        %v1424 = vunpack.c.l.b16 %v1344
        %v1425 = vunpack.c.l.b16 %v1345
        %v1426 = vunpack.c.l.b16 %v1346
        %v1427 = vunpack.c.l.b16 %v1347
        %v1428 = vunpack.c.l.b16 %v1348
        %v1429 = vunpack.c.l.b16 %v1349
        %v1430 = vunpack.c.l.b16 %v1350
        %v1431 = vunpack.c.l.b16 %v1351
        %v1432 = vunpack.c.l.b16 %v1352
        %v1433 = vunpack.c.l.b16 %v1353
        %v1434 = vunpack.c.l.b16 %v1354
        %v1435 = vunpack.c.l.b16 %v1355
        %v1436 = vunpack.c.l.b16 %v1356
        %v1437 = vunpack.c.l.b16 %v1357
        %v1438 = vunpack.c.l.b16 %v1358
        %v1439 = vpack.c.b16 %v1424, %v1423
        %v1440 = vpack.c.b16 %v1426, %v1425
        %v1441 = vpack.c.b16 %v1428, %v1427
        %v1442 = vpack.c.b16 %v1430, %v1429
        %v1443 = vpack.c.b16 %v1432, %v1431
        %v1444 = vpack.c.b16 %v1434, %v1433
        %v1445 = vpack.c.b16 %v1436, %v1435
        %v1446 = vpack.c.b16 %v1438, %v1437
        %1455 = vmatpush.bf16.msra.mxu0 %v1446
        %1456 = vmatpush.bf16.msra.mxu0 %v1445
        %1457 = vmatpush.bf16.msra.mxu0 %v1444
        %1458 = vmatpush.bf16.msra.mxu0 %v1443
        %1459 = vmatpush.bf16.msra.mxu0 %v1442
        %1460 = vmatpush.bf16.msra.mxu0 %v1441
        %1461 = vmatpush.bf16.msra.mxu0 %v1440
        %1462 = vmatpush.bf16.msra.mxu0 %v1439
        %1463 = vmatmul.bf16.gmra.mxu0 %v1391
        %v1464 = vpop.f32.mrf.mxu0
        %v1465 = vadd.f32 0.0, %v1464
        %v1466 = vpop.f32.mrf.mxu0
        %v1467 = vadd.f32 0.0, %v1466
        %1468 = vmatmul.bf16.gmra.mxu0 %v1392
        %v1469 = vpop.f32.mrf.mxu0
        %v1470 = vadd.f32 0.0, %v1469
        %v1471 = vpop.f32.mrf.mxu0
        %v1472 = vadd.f32 0.0, %v1471
        %1473 = vmatmul.bf16.gmra.mxu0 %v1393
        %v1474 = vpop.f32.mrf.mxu0
        %v1475 = vadd.f32 0.0, %v1474
        %v1476 = vpop.f32.mrf.mxu0
        %v1477 = vadd.f32 0.0, %v1476
        %1478 = vmatmul.bf16.gmra.mxu0 %v1394
        %v1479 = vpop.f32.mrf.mxu0
        %v1480 = vadd.f32 0.0, %v1479
        %v1481 = vpop.f32.mrf.mxu0
        %v1482 = vadd.f32 0.0, %v1481
        %1483 = vmatmul.bf16.gmra.mxu0 %v1395
        %v1484 = vpop.f32.mrf.mxu0
        %v1485 = vadd.f32 0.0, %v1484
        %v1486 = vpop.f32.mrf.mxu0
        %v1487 = vadd.f32 0.0, %v1486
        %1488 = vmatmul.bf16.gmra.mxu0 %v1396
        %v1489 = vpop.f32.mrf.mxu0
        %v1490 = vadd.f32 0.0, %v1489
        %v1491 = vpop.f32.mrf.mxu0
        %v1492 = vadd.f32 0.0, %v1491
        %1493 = vmatmul.bf16.gmra.mxu0 %v1397
        %v1494 = vpop.f32.mrf.mxu0
        %v1495 = vadd.f32 0.0, %v1494
        %v1496 = vpop.f32.mrf.mxu0
        %v1497 = vadd.f32 0.0, %v1496
        %1498 = vmatmul.bf16.gmra.mxu0 %v1398
        %v1499 = vpop.f32.mrf.mxu0
        %v1500 = vadd.f32 0.0, %v1499
        %v1501 = vpop.f32.mrf.mxu0
        %v1502 = vadd.f32 0.0, %v1501
        %1503 = vdwg.mxu0
        %v1504 = vadd.f32 %v1309, %v1465
        %v1505 = vadd.f32 %v1310, %v1467
        %v1506 = vadd.f32 %v1311, %v1470
        %v1507 = vadd.f32 %v1312, %v1472
        %v1508 = vadd.f32 %v1313, %v1475
        %v1509 = vadd.f32 %v1314, %v1477
        %v1510 = vadd.f32 %v1315, %v1480
        %v1511 = vadd.f32 %v1316, %v1482
        %v1512 = vadd.f32 %v1317, %v1485
        %v1513 = vadd.f32 %v1318, %v1487
        %v1514 = vadd.f32 %v1319, %v1490
        %v1515 = vadd.f32 %v1320, %v1492
        %v1516 = vadd.f32 %v1321, %v1495
        %v1517 = vadd.f32 %v1322, %v1497
        %v1518 = vadd.f32 %v1323, %v1500
        %v1519 = vadd.f32 %v1324, %v1502
        %v1520 = vld [vmem:[%s1325] sm:$0xf]
        %v1521 = vld [vmem:[%s1325 + $0x4] sm:$0x1]
        %v1522 = vld [vmem:[%s1325 + $0x8] sm:$0xf]
        %v1523 = vld [vmem:[%s1325 + $0xc] sm:$0x1]
        %v1524 = vld [vmem:[%s1325 + $0x10] sm:$0xf]
        %v1525 = vld [vmem:[%s1325 + $0x14] sm:$0x1]
        %v1526 = vld [vmem:[%s1325 + $0x18] sm:$0xf]
        %v1527 = vld [vmem:[%s1325 + $0x1c] sm:$0x1]
        %v1528 = vld [vmem:[%s1325 + $0x20] sm:$0xf]
        %v1529 = vld [vmem:[%s1325 + $0x24] sm:$0x1]
        %v1530 = vld [vmem:[%s1325 + $0x28] sm:$0xf]
        %v1531 = vld [vmem:[%s1325 + $0x2c] sm:$0x1]
        %v1532 = vld [vmem:[%s1325 + $0x30] sm:$0xf]
        %v1533 = vld [vmem:[%s1325 + $0x34] sm:$0x1]
        %v1534 = vld [vmem:[%s1325 + $0x38] sm:$0xf]
        %v1535 = vld [vmem:[%s1325 + $0x3c] sm:$0x1]
        %v1536 = vld [vmem:[%s1325 + $0x50] sm:$0xf]
        %v1537 = vld [vmem:[%s1325 + $0x54] sm:$0x1]
        %v1538 = vld [vmem:[%s1325 + $0x58] sm:$0xf]
        %v1539 = vld [vmem:[%s1325 + $0x5c] sm:$0x1]
        %v1540 = vld [vmem:[%s1325 + $0x60] sm:$0xf]
        %v1541 = vld [vmem:[%s1325 + $0x64] sm:$0x1]
        %v1542 = vld [vmem:[%s1325 + $0x68] sm:$0xf]
        %v1543 = vld [vmem:[%s1325 + $0x6c] sm:$0x1]
        %v1544 = vld [vmem:[%s1325 + $0x70] sm:$0xf]
        %v1545 = vld [vmem:[%s1325 + $0x74] sm:$0x1]
        %v1546 = vld [vmem:[%s1325 + $0x78] sm:$0xf]
        %v1547 = vld [vmem:[%s1325 + $0x7c] sm:$0x1]
        %v1548 = vld [vmem:[%s1325 + $0x80] sm:$0xf]
        %v1549 = vld [vmem:[%s1325 + $0x84] sm:$0x1]
        %v1550 = vld [vmem:[%s1325 + $0x88] sm:$0xf]
        %v1551 = vld [vmem:[%s1325 + $0x8c] sm:$0x1]
        %v1553 = vshrl.u32 %v1520, 16
        %v1555 = vrot.slane %v1553, 4
        %v1556 = vshll.u32 %v1520, 16
        %v1558 = vrot.slane %v1556, 5
        %v1559 = vor.u32 %v1555, %v1558
        %v1560 = vrot.slane %v1559, 4
        %v1562 = vshll.u32 %v1521, 16
        %v1564 = vrot.slane %v1562, 5
        %v1565 = vsel %vm532, %v1560, %v1564
        %v1567 = vshrl.u32 %v1522, 16
        %v1569 = vrot.slane %v1567, 4
        %v1570 = vshll.u32 %v1522, 16
        %v1572 = vrot.slane %v1570, 5
        %v1573 = vor.u32 %v1569, %v1572
        %v1574 = vrot.slane %v1573, 4
        %v1576 = vshll.u32 %v1523, 16
        %v1578 = vrot.slane %v1576, 5
        %v1579 = vsel %vm532, %v1574, %v1578
        %v1581 = vshrl.u32 %v1524, 16
        %v1583 = vrot.slane %v1581, 4
        %v1584 = vshll.u32 %v1524, 16
        %v1586 = vrot.slane %v1584, 5
        %v1587 = vor.u32 %v1583, %v1586
        %v1588 = vrot.slane %v1587, 4
        %v1590 = vshll.u32 %v1525, 16
        %v1592 = vrot.slane %v1590, 5
        %v1593 = vsel %vm532, %v1588, %v1592
        %v1595 = vshrl.u32 %v1526, 16
        %v1597 = vrot.slane %v1595, 4
        %v1598 = vshll.u32 %v1526, 16
        %v1600 = vrot.slane %v1598, 5
        %v1601 = vor.u32 %v1597, %v1600
        %v1602 = vrot.slane %v1601, 4
        %v1604 = vshll.u32 %v1527, 16
        %v1606 = vrot.slane %v1604, 5
        %v1607 = vsel %vm532, %v1602, %v1606
        %v1609 = vshrl.u32 %v1528, 16
        %v1611 = vrot.slane %v1609, 4
        %v1612 = vshll.u32 %v1528, 16
        %v1614 = vrot.slane %v1612, 5
        %v1615 = vor.u32 %v1611, %v1614
        %v1616 = vrot.slane %v1615, 4
        %v1618 = vshll.u32 %v1529, 16
        %v1620 = vrot.slane %v1618, 5
        %v1621 = vsel %vm532, %v1616, %v1620
        %v1623 = vshrl.u32 %v1530, 16
        %v1625 = vrot.slane %v1623, 4
        %v1626 = vshll.u32 %v1530, 16
        %v1628 = vrot.slane %v1626, 5
        %v1629 = vor.u32 %v1625, %v1628
        %v1630 = vrot.slane %v1629, 4
        %v1632 = vshll.u32 %v1531, 16
        %v1634 = vrot.slane %v1632, 5
        %v1635 = vsel %vm532, %v1630, %v1634
        %v1637 = vshrl.u32 %v1532, 16
        %v1639 = vrot.slane %v1637, 4
        %v1640 = vshll.u32 %v1532, 16
        %v1642 = vrot.slane %v1640, 5
        %v1643 = vor.u32 %v1639, %v1642
        %v1644 = vrot.slane %v1643, 4
        %v1646 = vshll.u32 %v1533, 16
        %v1648 = vrot.slane %v1646, 5
        %v1649 = vsel %vm532, %v1644, %v1648
        %v1651 = vshrl.u32 %v1534, 16
        %v1653 = vrot.slane %v1651, 4
        %v1654 = vshll.u32 %v1534, 16
        %v1656 = vrot.slane %v1654, 5
        %v1657 = vor.u32 %v1653, %v1656
        %v1658 = vrot.slane %v1657, 4
        %v1660 = vshll.u32 %v1535, 16
        %v1662 = vrot.slane %v1660, 5
        %v1663 = vsel %vm532, %v1658, %v1662
        %v1665 = vshrl.u32 %v1536, 16
        %v1667 = vrot.slane %v1665, 4
        %v1668 = vshll.u32 %v1536, 16
        %v1670 = vrot.slane %v1668, 5
        %v1671 = vor.u32 %v1667, %v1670
        %v1672 = vrot.slane %v1671, 4
        %v1674 = vshll.u32 %v1537, 16
        %v1676 = vrot.slane %v1674, 5
        %v1677 = vsel %vm532, %v1672, %v1676
        %v1679 = vshrl.u32 %v1538, 16
        %v1681 = vrot.slane %v1679, 4
        %v1682 = vshll.u32 %v1538, 16
        %v1684 = vrot.slane %v1682, 5
        %v1685 = vor.u32 %v1681, %v1684
        %v1686 = vrot.slane %v1685, 4
        %v1688 = vshll.u32 %v1539, 16
        %v1690 = vrot.slane %v1688, 5
        %v1691 = vsel %vm532, %v1686, %v1690
        %v1693 = vshrl.u32 %v1540, 16
        %v1695 = vrot.slane %v1693, 4
        %v1696 = vshll.u32 %v1540, 16
        %v1698 = vrot.slane %v1696, 5
        %v1699 = vor.u32 %v1695, %v1698
        %v1700 = vrot.slane %v1699, 4
        %v1702 = vshll.u32 %v1541, 16
        %v1704 = vrot.slane %v1702, 5
        %v1705 = vsel %vm532, %v1700, %v1704
        %v1707 = vshrl.u32 %v1542, 16
        %v1709 = vrot.slane %v1707, 4
        %v1710 = vshll.u32 %v1542, 16
        %v1712 = vrot.slane %v1710, 5
        %v1713 = vor.u32 %v1709, %v1712
        %v1714 = vrot.slane %v1713, 4
        %v1716 = vshll.u32 %v1543, 16
        %v1718 = vrot.slane %v1716, 5
        %v1719 = vsel %vm532, %v1714, %v1718
        %v1721 = vshrl.u32 %v1544, 16
        %v1723 = vrot.slane %v1721, 4
        %v1724 = vshll.u32 %v1544, 16
        %v1726 = vrot.slane %v1724, 5
        %v1727 = vor.u32 %v1723, %v1726
        %v1728 = vrot.slane %v1727, 4
        %v1730 = vshll.u32 %v1545, 16
        %v1732 = vrot.slane %v1730, 5
        %v1733 = vsel %vm532, %v1728, %v1732
        %v1735 = vshrl.u32 %v1546, 16
        %v1737 = vrot.slane %v1735, 4
        %v1738 = vshll.u32 %v1546, 16
        %v1740 = vrot.slane %v1738, 5
        %v1741 = vor.u32 %v1737, %v1740
        %v1742 = vrot.slane %v1741, 4
        %v1744 = vshll.u32 %v1547, 16
        %v1746 = vrot.slane %v1744, 5
        %v1747 = vsel %vm532, %v1742, %v1746
        %v1749 = vshrl.u32 %v1548, 16
        %v1751 = vrot.slane %v1749, 4
        %v1752 = vshll.u32 %v1548, 16
        %v1754 = vrot.slane %v1752, 5
        %v1755 = vor.u32 %v1751, %v1754
        %v1756 = vrot.slane %v1755, 4
        %v1758 = vshll.u32 %v1549, 16
        %v1760 = vrot.slane %v1758, 5
        %v1761 = vsel %vm532, %v1756, %v1760
        %v1763 = vshrl.u32 %v1550, 16
        %v1765 = vrot.slane %v1763, 4
        %v1766 = vshll.u32 %v1550, 16
        %v1768 = vrot.slane %v1766, 5
        %v1769 = vor.u32 %v1765, %v1768
        %v1770 = vrot.slane %v1769, 4
        %v1772 = vshll.u32 %v1551, 16
        %v1774 = vrot.slane %v1772, 5
        %v1775 = vsel %vm532, %v1770, %v1774
        %s1776 = scalar_lea.vmem %s319, 256 [#allocation4]
        %v1777 = vld [vmem:[%s1776] sm:$0xf]
        %v1778 = vld [vmem:[%s1776 + $0x4] sm:$0xf]
        %v1779 = vld [vmem:[%s1776 + $0x8] sm:$0xf]
        %v1780 = vld [vmem:[%s1776 + $0xc] sm:$0xf]
        %v1781 = vld [vmem:[%s1776 + $0x10] sm:$0xf]
        %v1782 = vld [vmem:[%s1776 + $0x14] sm:$0xf]
        %v1783 = vld [vmem:[%s1776 + $0x18] sm:$0xf]
        %v1784 = vld [vmem:[%s1776 + $0x1c] sm:$0xf]
        %v1785 = vld [vmem:[%s1776 + $0x20] sm:$0xf]
        %v1786 = vld [vmem:[%s1776 + $0x24] sm:$0xf]
        %v1787 = vld [vmem:[%s1776 + $0x28] sm:$0xf]
        %v1788 = vld [vmem:[%s1776 + $0x2c] sm:$0xf]
        %v1789 = vld [vmem:[%s1776 + $0x30] sm:$0xf]
        %v1790 = vld [vmem:[%s1776 + $0x34] sm:$0xf]
        %v1791 = vld [vmem:[%s1776 + $0x38] sm:$0xf]
        %v1792 = vld [vmem:[%s1776 + $0x3c] sm:$0xf]
        %v1793 = vunpack.c.l.b16 %v1565
        %v1794 = vunpack.c.l.b16 %v1579
        %v1795 = vunpack.c.l.b16 %v1593
        %v1796 = vunpack.c.l.b16 %v1607
        %v1797 = vunpack.c.l.b16 %v1621
        %v1798 = vunpack.c.l.b16 %v1635
        %v1799 = vunpack.c.l.b16 %v1649
        %v1800 = vunpack.c.l.b16 %v1663
        %v1801 = vunpack.c.l.b16 %v1677
        %v1802 = vunpack.c.l.b16 %v1691
        %v1803 = vunpack.c.l.b16 %v1705
        %v1804 = vunpack.c.l.b16 %v1719
        %v1805 = vunpack.c.l.b16 %v1733
        %v1806 = vunpack.c.l.b16 %v1747
        %v1807 = vunpack.c.l.b16 %v1761
        %v1808 = vunpack.c.l.b16 %v1775
        %v1809 = vpack.c.b16 %v1794, %v1793
        %v1810 = vpack.c.b16 %v1796, %v1795
        %v1811 = vpack.c.b16 %v1798, %v1797
        %v1812 = vpack.c.b16 %v1800, %v1799
        %v1813 = vpack.c.b16 %v1802, %v1801
        %v1814 = vpack.c.b16 %v1804, %v1803
        %v1815 = vpack.c.b16 %v1806, %v1805
        %v1816 = vpack.c.b16 %v1808, %v1807
        %v1841 = vunpack.c.l.b16 %v1777
        %v1842 = vunpack.c.l.b16 %v1778
        %v1843 = vunpack.c.l.b16 %v1779
        %v1844 = vunpack.c.l.b16 %v1780
        %v1845 = vunpack.c.l.b16 %v1781
        %v1846 = vunpack.c.l.b16 %v1782
        %v1847 = vunpack.c.l.b16 %v1783
        %v1848 = vunpack.c.l.b16 %v1784
        %v1849 = vunpack.c.l.b16 %v1785
        %v1850 = vunpack.c.l.b16 %v1786
        %v1851 = vunpack.c.l.b16 %v1787
        %v1852 = vunpack.c.l.b16 %v1788
        %v1853 = vunpack.c.l.b16 %v1789
        %v1854 = vunpack.c.l.b16 %v1790
        %v1855 = vunpack.c.l.b16 %v1791
        %v1856 = vunpack.c.l.b16 %v1792
        %v1857 = vpack.c.b16 %v1842, %v1841
        %v1858 = vpack.c.b16 %v1844, %v1843
        %v1859 = vpack.c.b16 %v1846, %v1845
        %v1860 = vpack.c.b16 %v1848, %v1847
        %v1861 = vpack.c.b16 %v1850, %v1849
        %v1862 = vpack.c.b16 %v1852, %v1851
        %v1863 = vpack.c.b16 %v1854, %v1853
        %v1864 = vpack.c.b16 %v1856, %v1855
        %1873 = vmatpush.bf16.msra.mxu0 %v1864
        %1874 = vmatpush.bf16.msra.mxu0 %v1863
        %1875 = vmatpush.bf16.msra.mxu0 %v1862
        %1876 = vmatpush.bf16.msra.mxu0 %v1861
        %1877 = vmatpush.bf16.msra.mxu0 %v1860
        %1878 = vmatpush.bf16.msra.mxu0 %v1859
        %1879 = vmatpush.bf16.msra.mxu0 %v1858
        %1880 = vmatpush.bf16.msra.mxu0 %v1857
        %1881 = vmatmul.bf16.gmra.mxu0 %v1809
        %v1882 = vpop.f32.mrf.mxu0
        %v1883 = vadd.f32 0.0, %v1882
        %v1884 = vpop.f32.mrf.mxu0
        %v1885 = vadd.f32 0.0, %v1884
        %1886 = vmatmul.bf16.gmra.mxu0 %v1810
        %v1887 = vpop.f32.mrf.mxu0
        %v1888 = vadd.f32 0.0, %v1887
        %v1889 = vpop.f32.mrf.mxu0
        %v1890 = vadd.f32 0.0, %v1889
        %1891 = vmatmul.bf16.gmra.mxu0 %v1811
        %v1892 = vpop.f32.mrf.mxu0
        %v1893 = vadd.f32 0.0, %v1892
        %v1894 = vpop.f32.mrf.mxu0
        %v1895 = vadd.f32 0.0, %v1894
        %1896 = vmatmul.bf16.gmra.mxu0 %v1812
        %v1897 = vpop.f32.mrf.mxu0
        %v1898 = vadd.f32 0.0, %v1897
        %v1899 = vpop.f32.mrf.mxu0
        %v1900 = vadd.f32 0.0, %v1899
        %1901 = vmatmul.bf16.gmra.mxu0 %v1813
        %v1902 = vpop.f32.mrf.mxu0
        %v1903 = vadd.f32 0.0, %v1902
        %v1904 = vpop.f32.mrf.mxu0
        %v1905 = vadd.f32 0.0, %v1904
        %1906 = vmatmul.bf16.gmra.mxu0 %v1814
        %v1907 = vpop.f32.mrf.mxu0
        %v1908 = vadd.f32 0.0, %v1907
        %v1909 = vpop.f32.mrf.mxu0
        %v1910 = vadd.f32 0.0, %v1909
        %1911 = vmatmul.bf16.gmra.mxu0 %v1815
        %v1912 = vpop.f32.mrf.mxu0
        %v1913 = vadd.f32 0.0, %v1912
        %v1914 = vpop.f32.mrf.mxu0
        %v1915 = vadd.f32 0.0, %v1914
        %1916 = vmatmul.bf16.gmra.mxu0 %v1816
        %v1917 = vpop.f32.mrf.mxu0
        %v1918 = vadd.f32 0.0, %v1917
        %v1919 = vpop.f32.mrf.mxu0
        %v1920 = vadd.f32 0.0, %v1919
        %1921 = vdwg.mxu0
        %v1922 = vadd.f32 %v1504, %v1883
        %v1923 = vadd.f32 %v1505, %v1885
        %v1924 = vadd.f32 %v1506, %v1888
        %v1925 = vadd.f32 %v1507, %v1890
        %v1926 = vadd.f32 %v1508, %v1893
        %v1927 = vadd.f32 %v1509, %v1895
        %v1928 = vadd.f32 %v1510, %v1898
        %v1929 = vadd.f32 %v1511, %v1900
        %v1930 = vadd.f32 %v1512, %v1903
        %v1931 = vadd.f32 %v1513, %v1905
        %v1932 = vadd.f32 %v1514, %v1908
        %v1933 = vadd.f32 %v1515, %v1910
        %v1934 = vadd.f32 %v1516, %v1913
        %v1935 = vadd.f32 %v1517, %v1915
        %v1936 = vadd.f32 %v1518, %v1918
        %v1937 = vadd.f32 %v1519, %v1920
        %v1938 = vld [vmem:[%s1325] sm:$0xe]
        %v1939 = vld [vmem:[%s1325 + $0x8] sm:$0xe]
        %v1940 = vld [vmem:[%s1325 + $0x10] sm:$0xe]
        %v1941 = vld [vmem:[%s1325 + $0x18] sm:$0xe]
        %v1942 = vld [vmem:[%s1325 + $0x20] sm:$0xe]
        %v1943 = vld [vmem:[%s1325 + $0x28] sm:$0xe]
        %v1944 = vld [vmem:[%s1325 + $0x30] sm:$0xe]
        %v1945 = vld [vmem:[%s1325 + $0x38] sm:$0xe]
        %v1946 = vld [vmem:[%s1325 + $0x50] sm:$0xe]
        %v1947 = vld [vmem:[%s1325 + $0x58] sm:$0xe]
        %v1948 = vld [vmem:[%s1325 + $0x60] sm:$0xe]
        %v1949 = vld [vmem:[%s1325 + $0x68] sm:$0xe]
        %v1950 = vld [vmem:[%s1325 + $0x70] sm:$0xe]
        %v1951 = vld [vmem:[%s1325 + $0x78] sm:$0xe]
        %v1952 = vld [vmem:[%s1325 + $0x80] sm:$0xe]
        %v1953 = vld [vmem:[%s1325 + $0x88] sm:$0xe]
        %v1986 = vrot.slane %v1938, 5
        %v1987 = vrot.slane %v1986, 4
        %v1988 = vrot.slane %v1521, 5
        %v1989 = vsel %vm1098, %v1987, %v1988
        %v1990 = vrot.slane %v1939, 5
        %v1991 = vrot.slane %v1990, 4
        %v1992 = vrot.slane %v1523, 5
        %v1993 = vsel %vm1098, %v1991, %v1992
        %v1994 = vrot.slane %v1940, 5
        %v1995 = vrot.slane %v1994, 4
        %v1996 = vrot.slane %v1525, 5
        %v1997 = vsel %vm1098, %v1995, %v1996
        %v1998 = vrot.slane %v1941, 5
        %v1999 = vrot.slane %v1998, 4
        %v2000 = vrot.slane %v1527, 5
        %v2001 = vsel %vm1098, %v1999, %v2000
        %v2002 = vrot.slane %v1942, 5
        %v2003 = vrot.slane %v2002, 4
        %v2004 = vrot.slane %v1529, 5
        %v2005 = vsel %vm1098, %v2003, %v2004
        %v2006 = vrot.slane %v1943, 5
        %v2007 = vrot.slane %v2006, 4
        %v2008 = vrot.slane %v1531, 5
        %v2009 = vsel %vm1098, %v2007, %v2008
        %v2010 = vrot.slane %v1944, 5
        %v2011 = vrot.slane %v2010, 4
        %v2012 = vrot.slane %v1533, 5
        %v2013 = vsel %vm1098, %v2011, %v2012
        %v2014 = vrot.slane %v1945, 5
        %v2015 = vrot.slane %v2014, 4
        %v2016 = vrot.slane %v1535, 5
        %v2017 = vsel %vm1098, %v2015, %v2016
        %v2018 = vrot.slane %v1946, 5
        %v2019 = vrot.slane %v2018, 4
        %v2020 = vrot.slane %v1537, 5
        %v2021 = vsel %vm1098, %v2019, %v2020
        %v2022 = vrot.slane %v1947, 5
        %v2023 = vrot.slane %v2022, 4
        %v2024 = vrot.slane %v1539, 5
        %v2025 = vsel %vm1098, %v2023, %v2024
        %v2026 = vrot.slane %v1948, 5
        %v2027 = vrot.slane %v2026, 4
        %v2028 = vrot.slane %v1541, 5
        %v2029 = vsel %vm1098, %v2027, %v2028
        %v2030 = vrot.slane %v1949, 5
        %v2031 = vrot.slane %v2030, 4
        %v2032 = vrot.slane %v1543, 5
        %v2033 = vsel %vm1098, %v2031, %v2032
        %v2034 = vrot.slane %v1950, 5
        %v2035 = vrot.slane %v2034, 4
        %v2036 = vrot.slane %v1545, 5
        %v2037 = vsel %vm1098, %v2035, %v2036
        %v2038 = vrot.slane %v1951, 5
        %v2039 = vrot.slane %v2038, 4
        %v2040 = vrot.slane %v1547, 5
        %v2041 = vsel %vm1098, %v2039, %v2040
        %v2042 = vrot.slane %v1952, 5
        %v2043 = vrot.slane %v2042, 4
        %v2044 = vrot.slane %v1549, 5
        %v2045 = vsel %vm1098, %v2043, %v2044
        %v2046 = vrot.slane %v1953, 5
        %v2047 = vrot.slane %v2046, 4
        %v2048 = vrot.slane %v1551, 5
        %v2049 = vsel %vm1098, %v2047, %v2048
        %s2050 = scalar_lea.vmem %s319, 320 [#allocation4]
        %v2051 = vld [vmem:[%s2050] sm:$0xf]
        %v2052 = vld [vmem:[%s2050 + $0x4] sm:$0xf]
        %v2053 = vld [vmem:[%s2050 + $0x8] sm:$0xf]
        %v2054 = vld [vmem:[%s2050 + $0xc] sm:$0xf]
        %v2055 = vld [vmem:[%s2050 + $0x10] sm:$0xf]
        %v2056 = vld [vmem:[%s2050 + $0x14] sm:$0xf]
        %v2057 = vld [vmem:[%s2050 + $0x18] sm:$0xf]
        %v2058 = vld [vmem:[%s2050 + $0x1c] sm:$0xf]
        %v2059 = vld [vmem:[%s2050 + $0x20] sm:$0xf]
        %v2060 = vld [vmem:[%s2050 + $0x24] sm:$0xf]
        %v2061 = vld [vmem:[%s2050 + $0x28] sm:$0xf]
        %v2062 = vld [vmem:[%s2050 + $0x2c] sm:$0xf]
        %v2063 = vld [vmem:[%s2050 + $0x30] sm:$0xf]
        %v2064 = vld [vmem:[%s2050 + $0x34] sm:$0xf]
        %v2065 = vld [vmem:[%s2050 + $0x38] sm:$0xf]
        %v2066 = vld [vmem:[%s2050 + $0x3c] sm:$0xf]
        %v2067 = vunpack.c.l.b16 %v1989
        %v2068 = vunpack.c.l.b16 %v1993
        %v2069 = vunpack.c.l.b16 %v1997
        %v2070 = vunpack.c.l.b16 %v2001
        %v2071 = vunpack.c.l.b16 %v2005
        %v2072 = vunpack.c.l.b16 %v2009
        %v2073 = vunpack.c.l.b16 %v2013
        %v2074 = vunpack.c.l.b16 %v2017
        %v2075 = vunpack.c.l.b16 %v2021
        %v2076 = vunpack.c.l.b16 %v2025
        %v2077 = vunpack.c.l.b16 %v2029
        %v2078 = vunpack.c.l.b16 %v2033
        %v2079 = vunpack.c.l.b16 %v2037
        %v2080 = vunpack.c.l.b16 %v2041
        %v2081 = vunpack.c.l.b16 %v2045
        %v2082 = vunpack.c.l.b16 %v2049
        %v2083 = vpack.c.b16 %v2068, %v2067
        %v2084 = vpack.c.b16 %v2070, %v2069
        %v2085 = vpack.c.b16 %v2072, %v2071
        %v2086 = vpack.c.b16 %v2074, %v2073
        %v2087 = vpack.c.b16 %v2076, %v2075
        %v2088 = vpack.c.b16 %v2078, %v2077
        %v2089 = vpack.c.b16 %v2080, %v2079
        %v2090 = vpack.c.b16 %v2082, %v2081
        %v2115 = vunpack.c.l.b16 %v2051
        %v2116 = vunpack.c.l.b16 %v2052
        %v2117 = vunpack.c.l.b16 %v2053
        %v2118 = vunpack.c.l.b16 %v2054
        %v2119 = vunpack.c.l.b16 %v2055
        %v2120 = vunpack.c.l.b16 %v2056
        %v2121 = vunpack.c.l.b16 %v2057
        %v2122 = vunpack.c.l.b16 %v2058
        %v2123 = vunpack.c.l.b16 %v2059
        %v2124 = vunpack.c.l.b16 %v2060
        %v2125 = vunpack.c.l.b16 %v2061
        %v2126 = vunpack.c.l.b16 %v2062
        %v2127 = vunpack.c.l.b16 %v2063
        %v2128 = vunpack.c.l.b16 %v2064
        %v2129 = vunpack.c.l.b16 %v2065
        %v2130 = vunpack.c.l.b16 %v2066
        %v2131 = vpack.c.b16 %v2116, %v2115
        %v2132 = vpack.c.b16 %v2118, %v2117
        %v2133 = vpack.c.b16 %v2120, %v2119
        %v2134 = vpack.c.b16 %v2122, %v2121
        %v2135 = vpack.c.b16 %v2124, %v2123
        %v2136 = vpack.c.b16 %v2126, %v2125
        %v2137 = vpack.c.b16 %v2128, %v2127
        %v2138 = vpack.c.b16 %v2130, %v2129
        %2147 = vmatpush.bf16.msra.mxu0 %v2138
        %2148 = vmatpush.bf16.msra.mxu0 %v2137
        %2149 = vmatpush.bf16.msra.mxu0 %v2136
        %2150 = vmatpush.bf16.msra.mxu0 %v2135
        %2151 = vmatpush.bf16.msra.mxu0 %v2134
        %2152 = vmatpush.bf16.msra.mxu0 %v2133
        %2153 = vmatpush.bf16.msra.mxu0 %v2132
        %2154 = vmatpush.bf16.msra.mxu0 %v2131
        %2155 = vmatmul.bf16.gmra.mxu0 %v2083
        %v2156 = vpop.f32.mrf.mxu0
        %v2157 = vadd.f32 0.0, %v2156
        %v2158 = vpop.f32.mrf.mxu0
        %v2159 = vadd.f32 0.0, %v2158
        %2160 = vmatmul.bf16.gmra.mxu0 %v2084
        %v2161 = vpop.f32.mrf.mxu0
        %v2162 = vadd.f32 0.0, %v2161
        %v2163 = vpop.f32.mrf.mxu0
        %v2164 = vadd.f32 0.0, %v2163
        %2165 = vmatmul.bf16.gmra.mxu0 %v2085
        %v2166 = vpop.f32.mrf.mxu0
        %v2167 = vadd.f32 0.0, %v2166
        %v2168 = vpop.f32.mrf.mxu0
        %v2169 = vadd.f32 0.0, %v2168
        %2170 = vmatmul.bf16.gmra.mxu0 %v2086
        %v2171 = vpop.f32.mrf.mxu0
        %v2172 = vadd.f32 0.0, %v2171
        %v2173 = vpop.f32.mrf.mxu0
        %v2174 = vadd.f32 0.0, %v2173
        %2175 = vmatmul.bf16.gmra.mxu0 %v2087
        %v2176 = vpop.f32.mrf.mxu0
        %v2177 = vadd.f32 0.0, %v2176
        %v2178 = vpop.f32.mrf.mxu0
        %v2179 = vadd.f32 0.0, %v2178
        %2180 = vmatmul.bf16.gmra.mxu0 %v2088
        %v2181 = vpop.f32.mrf.mxu0
        %v2182 = vadd.f32 0.0, %v2181
        %v2183 = vpop.f32.mrf.mxu0
        %v2184 = vadd.f32 0.0, %v2183
        %2185 = vmatmul.bf16.gmra.mxu0 %v2089
        %v2186 = vpop.f32.mrf.mxu0
        %v2187 = vadd.f32 0.0, %v2186
        %v2188 = vpop.f32.mrf.mxu0
        %v2189 = vadd.f32 0.0, %v2188
        %2190 = vmatmul.bf16.gmra.mxu0 %v2090
        %v2191 = vpop.f32.mrf.mxu0
        %v2192 = vadd.f32 0.0, %v2191
        %v2193 = vpop.f32.mrf.mxu0
        %v2194 = vadd.f32 0.0, %v2193
        %2195 = vdwg.mxu0
        %v2196 = vadd.f32 %v1922, %v2157
        %v2197 = vadd.f32 %v1923, %v2159
        %v2198 = vadd.f32 %v1924, %v2162
        %v2199 = vadd.f32 %v1925, %v2164
        %v2200 = vadd.f32 %v1926, %v2167
        %v2201 = vadd.f32 %v1927, %v2169
        %v2202 = vadd.f32 %v1928, %v2172
        %v2203 = vadd.f32 %v1929, %v2174
        %v2204 = vadd.f32 %v1930, %v2177
        %v2205 = vadd.f32 %v1931, %v2179
        %v2206 = vadd.f32 %v1932, %v2182
        %v2207 = vadd.f32 %v1933, %v2184
        %v2208 = vadd.f32 %v1934, %v2187
        %v2209 = vadd.f32 %v1935, %v2189
        %v2210 = vadd.f32 %v1936, %v2192
        %v2211 = vadd.f32 %v1937, %v2194
        %s2212 = scalar_lea.vmem [#allocation2], 16
        %v2213 = vld [vmem:[%s2212] sm:$0xf]
        %v2214 = vld [vmem:[%s2212 + $0x8] sm:$0xf]
        %v2215 = vld [vmem:[%s2212 + $0x10] sm:$0xf]
        %v2216 = vld [vmem:[%s2212 + $0x18] sm:$0xf]
        %v2217 = vld [vmem:[%s2212 + $0x20] sm:$0xf]
        %v2218 = vld [vmem:[%s2212 + $0x28] sm:$0xf]
        %v2219 = vld [vmem:[%s2212 + $0x30] sm:$0xf]
        %v2220 = vld [vmem:[%s2212 + $0x38] sm:$0xf]
        %v2221 = vld [vmem:[%s2212 + $0x50] sm:$0xf]
        %v2222 = vld [vmem:[%s2212 + $0x58] sm:$0xf]
        %v2223 = vld [vmem:[%s2212 + $0x60] sm:$0xf]
        %v2224 = vld [vmem:[%s2212 + $0x68] sm:$0xf]
        %v2225 = vld [vmem:[%s2212 + $0x70] sm:$0xf]
        %v2226 = vld [vmem:[%s2212 + $0x78] sm:$0xf]
        %v2227 = vld [vmem:[%s2212 + $0x80] sm:$0xf]
        %v2228 = vld [vmem:[%s2212 + $0x88] sm:$0xf]
        %s2229 = scalar_lea.vmem %s319, 384 [#allocation4]
        %v2230 = vld [vmem:[%s2229] sm:$0xf]
        %v2231 = vld [vmem:[%s2229 + $0x4] sm:$0xf]
        %v2232 = vld [vmem:[%s2229 + $0x8] sm:$0xf]
        %v2233 = vld [vmem:[%s2229 + $0xc] sm:$0xf]
        %v2234 = vld [vmem:[%s2229 + $0x10] sm:$0xf]
        %v2235 = vld [vmem:[%s2229 + $0x14] sm:$0xf]
        %v2236 = vld [vmem:[%s2229 + $0x18] sm:$0xf]
        %v2237 = vld [vmem:[%s2229 + $0x1c] sm:$0xf]
        %v2238 = vld [vmem:[%s2229 + $0x20] sm:$0xf]
        %v2239 = vld [vmem:[%s2229 + $0x24] sm:$0xf]
        %v2240 = vld [vmem:[%s2229 + $0x28] sm:$0xf]
        %v2241 = vld [vmem:[%s2229 + $0x2c] sm:$0xf]
        %v2242 = vld [vmem:[%s2229 + $0x30] sm:$0xf]
        %v2243 = vld [vmem:[%s2229 + $0x34] sm:$0xf]
        %v2244 = vld [vmem:[%s2229 + $0x38] sm:$0xf]
        %v2245 = vld [vmem:[%s2229 + $0x3c] sm:$0xf]
        %v2262 = vunpack.c.l.b16 %v2213
        %v2263 = vunpack.c.l.b16 %v2214
        %v2264 = vunpack.c.l.b16 %v2215
        %v2265 = vunpack.c.l.b16 %v2216
        %v2266 = vunpack.c.l.b16 %v2217
        %v2267 = vunpack.c.l.b16 %v2218
        %v2268 = vunpack.c.l.b16 %v2219
        %v2269 = vunpack.c.l.b16 %v2220
        %v2270 = vunpack.c.l.b16 %v2221
        %v2271 = vunpack.c.l.b16 %v2222
        %v2272 = vunpack.c.l.b16 %v2223
        %v2273 = vunpack.c.l.b16 %v2224
        %v2274 = vunpack.c.l.b16 %v2225
        %v2275 = vunpack.c.l.b16 %v2226
        %v2276 = vunpack.c.l.b16 %v2227
        %v2277 = vunpack.c.l.b16 %v2228
        %v2278 = vpack.c.b16 %v2263, %v2262
        %v2279 = vpack.c.b16 %v2265, %v2264
        %v2280 = vpack.c.b16 %v2267, %v2266
        %v2281 = vpack.c.b16 %v2269, %v2268
        %v2282 = vpack.c.b16 %v2271, %v2270
        %v2283 = vpack.c.b16 %v2273, %v2272
        %v2284 = vpack.c.b16 %v2275, %v2274
        %v2285 = vpack.c.b16 %v2277, %v2276
        %v2310 = vunpack.c.l.b16 %v2230
        %v2311 = vunpack.c.l.b16 %v2231
        %v2312 = vunpack.c.l.b16 %v2232
        %v2313 = vunpack.c.l.b16 %v2233
        %v2314 = vunpack.c.l.b16 %v2234
        %v2315 = vunpack.c.l.b16 %v2235
        %v2316 = vunpack.c.l.b16 %v2236
        %v2317 = vunpack.c.l.b16 %v2237
        %v2318 = vunpack.c.l.b16 %v2238
        %v2319 = vunpack.c.l.b16 %v2239
        %v2320 = vunpack.c.l.b16 %v2240
        %v2321 = vunpack.c.l.b16 %v2241
        %v2322 = vunpack.c.l.b16 %v2242
        %v2323 = vunpack.c.l.b16 %v2243
        %v2324 = vunpack.c.l.b16 %v2244
        %v2325 = vunpack.c.l.b16 %v2245
        %v2326 = vpack.c.b16 %v2311, %v2310
        %v2327 = vpack.c.b16 %v2313, %v2312
        %v2328 = vpack.c.b16 %v2315, %v2314
        %v2329 = vpack.c.b16 %v2317, %v2316
        %v2330 = vpack.c.b16 %v2319, %v2318
        %v2331 = vpack.c.b16 %v2321, %v2320
        %v2332 = vpack.c.b16 %v2323, %v2322
        %v2333 = vpack.c.b16 %v2325, %v2324
        %2342 = vmatpush.bf16.msra.mxu0 %v2333
        %2343 = vmatpush.bf16.msra.mxu0 %v2332
        %2344 = vmatpush.bf16.msra.mxu0 %v2331
        %2345 = vmatpush.bf16.msra.mxu0 %v2330
        %2346 = vmatpush.bf16.msra.mxu0 %v2329
        %2347 = vmatpush.bf16.msra.mxu0 %v2328
        %2348 = vmatpush.bf16.msra.mxu0 %v2327
        %2349 = vmatpush.bf16.msra.mxu0 %v2326
        %2350 = vmatmul.bf16.gmra.mxu0 %v2278
        %v2351 = vpop.f32.mrf.mxu0
        %v2352 = vadd.f32 0.0, %v2351
        %v2353 = vpop.f32.mrf.mxu0
        %v2354 = vadd.f32 0.0, %v2353
        %2355 = vmatmul.bf16.gmra.mxu0 %v2279
        %v2356 = vpop.f32.mrf.mxu0
        %v2357 = vadd.f32 0.0, %v2356
        %v2358 = vpop.f32.mrf.mxu0
        %v2359 = vadd.f32 0.0, %v2358
        %2360 = vmatmul.bf16.gmra.mxu0 %v2280
        %v2361 = vpop.f32.mrf.mxu0
        %v2362 = vadd.f32 0.0, %v2361
        %v2363 = vpop.f32.mrf.mxu0
        %v2364 = vadd.f32 0.0, %v2363
        %2365 = vmatmul.bf16.gmra.mxu0 %v2281
        %v2366 = vpop.f32.mrf.mxu0
        %v2367 = vadd.f32 0.0, %v2366
        %v2368 = vpop.f32.mrf.mxu0
        %v2369 = vadd.f32 0.0, %v2368
        %2370 = vmatmul.bf16.gmra.mxu0 %v2282
        %v2371 = vpop.f32.mrf.mxu0
        %v2372 = vadd.f32 0.0, %v2371
        %v2373 = vpop.f32.mrf.mxu0
        %v2374 = vadd.f32 0.0, %v2373
        %2375 = vmatmul.bf16.gmra.mxu0 %v2283
        %v2376 = vpop.f32.mrf.mxu0
        %v2377 = vadd.f32 0.0, %v2376
        %v2378 = vpop.f32.mrf.mxu0
        %v2379 = vadd.f32 0.0, %v2378
        %2380 = vmatmul.bf16.gmra.mxu0 %v2284
        %v2381 = vpop.f32.mrf.mxu0
        %v2382 = vadd.f32 0.0, %v2381
        %v2383 = vpop.f32.mrf.mxu0
        %v2384 = vadd.f32 0.0, %v2383
        %2385 = vmatmul.bf16.gmra.mxu0 %v2285
        %v2386 = vpop.f32.mrf.mxu0
        %v2387 = vadd.f32 0.0, %v2386
        %v2388 = vpop.f32.mrf.mxu0
        %v2389 = vadd.f32 0.0, %v2388
        %2390 = vdwg.mxu0
        %v2391 = vadd.f32 %v2196, %v2352
        %v2392 = vadd.f32 %v2197, %v2354
        %v2393 = vadd.f32 %v2198, %v2357
        %v2394 = vadd.f32 %v2199, %v2359
        %v2395 = vadd.f32 %v2200, %v2362
        %v2396 = vadd.f32 %v2201, %v2364
        %v2397 = vadd.f32 %v2202, %v2367
        %v2398 = vadd.f32 %v2203, %v2369
        %v2399 = vadd.f32 %v2204, %v2372
        %v2400 = vadd.f32 %v2205, %v2374
        %v2401 = vadd.f32 %v2206, %v2377
        %v2402 = vadd.f32 %v2207, %v2379
        %v2403 = vadd.f32 %v2208, %v2382
        %v2404 = vadd.f32 %v2209, %v2384
        %v2405 = vadd.f32 %v2210, %v2387
        %v2406 = vadd.f32 %v2211, %v2389
        %v2407 = vld [vmem:[%s2212] sm:$0xf]
        %v2408 = vld [vmem:[%s2212 + $0x4] sm:$0x1]
        %v2409 = vld [vmem:[%s2212 + $0x8] sm:$0xf]
        %v2410 = vld [vmem:[%s2212 + $0xc] sm:$0x1]
        %v2411 = vld [vmem:[%s2212 + $0x10] sm:$0xf]
        %v2412 = vld [vmem:[%s2212 + $0x14] sm:$0x1]
        %v2413 = vld [vmem:[%s2212 + $0x18] sm:$0xf]
        %v2414 = vld [vmem:[%s2212 + $0x1c] sm:$0x1]
        %v2415 = vld [vmem:[%s2212 + $0x20] sm:$0xf]
        %v2416 = vld [vmem:[%s2212 + $0x24] sm:$0x1]
        %v2417 = vld [vmem:[%s2212 + $0x28] sm:$0xf]
        %v2418 = vld [vmem:[%s2212 + $0x2c] sm:$0x1]
        %v2419 = vld [vmem:[%s2212 + $0x30] sm:$0xf]
        %v2420 = vld [vmem:[%s2212 + $0x34] sm:$0x1]
        %v2421 = vld [vmem:[%s2212 + $0x38] sm:$0xf]
        %v2422 = vld [vmem:[%s2212 + $0x3c] sm:$0x1]
        %v2423 = vld [vmem:[%s2212 + $0x50] sm:$0xf]
        %v2424 = vld [vmem:[%s2212 + $0x54] sm:$0x1]
        %v2425 = vld [vmem:[%s2212 + $0x58] sm:$0xf]
        %v2426 = vld [vmem:[%s2212 + $0x5c] sm:$0x1]
        %v2427 = vld [vmem:[%s2212 + $0x60] sm:$0xf]
        %v2428 = vld [vmem:[%s2212 + $0x64] sm:$0x1]
        %v2429 = vld [vmem:[%s2212 + $0x68] sm:$0xf]
        %v2430 = vld [vmem:[%s2212 + $0x6c] sm:$0x1]
        %v2431 = vld [vmem:[%s2212 + $0x70] sm:$0xf]
        %v2432 = vld [vmem:[%s2212 + $0x74] sm:$0x1]
        %v2433 = vld [vmem:[%s2212 + $0x78] sm:$0xf]
        %v2434 = vld [vmem:[%s2212 + $0x7c] sm:$0x1]
        %v2435 = vld [vmem:[%s2212 + $0x80] sm:$0xf]
        %v2436 = vld [vmem:[%s2212 + $0x84] sm:$0x1]
        %v2437 = vld [vmem:[%s2212 + $0x88] sm:$0xf]
        %v2438 = vld [vmem:[%s2212 + $0x8c] sm:$0x1]
        %v2440 = vshrl.u32 %v2407, 16
        %v2442 = vrot.slane %v2440, 4
        %v2443 = vshll.u32 %v2407, 16
        %v2445 = vrot.slane %v2443, 5
        %v2446 = vor.u32 %v2442, %v2445
        %v2447 = vrot.slane %v2446, 4
        %v2449 = vshll.u32 %v2408, 16
        %v2451 = vrot.slane %v2449, 5
        %v2452 = vsel %vm532, %v2447, %v2451
        %v2454 = vshrl.u32 %v2409, 16
        %v2456 = vrot.slane %v2454, 4
        %v2457 = vshll.u32 %v2409, 16
        %v2459 = vrot.slane %v2457, 5
        %v2460 = vor.u32 %v2456, %v2459
        %v2461 = vrot.slane %v2460, 4
        %v2463 = vshll.u32 %v2410, 16
        %v2465 = vrot.slane %v2463, 5
        %v2466 = vsel %vm532, %v2461, %v2465
        %v2468 = vshrl.u32 %v2411, 16
        %v2470 = vrot.slane %v2468, 4
        %v2471 = vshll.u32 %v2411, 16
        %v2473 = vrot.slane %v2471, 5
        %v2474 = vor.u32 %v2470, %v2473
        %v2475 = vrot.slane %v2474, 4
        %v2477 = vshll.u32 %v2412, 16
        %v2479 = vrot.slane %v2477, 5
        %v2480 = vsel %vm532, %v2475, %v2479
        %v2482 = vshrl.u32 %v2413, 16
        %v2484 = vrot.slane %v2482, 4
        %v2485 = vshll.u32 %v2413, 16
        %v2487 = vrot.slane %v2485, 5
        %v2488 = vor.u32 %v2484, %v2487
        %v2489 = vrot.slane %v2488, 4
        %v2491 = vshll.u32 %v2414, 16
        %v2493 = vrot.slane %v2491, 5
        %v2494 = vsel %vm532, %v2489, %v2493
        %v2496 = vshrl.u32 %v2415, 16
        %v2498 = vrot.slane %v2496, 4
        %v2499 = vshll.u32 %v2415, 16
        %v2501 = vrot.slane %v2499, 5
        %v2502 = vor.u32 %v2498, %v2501
        %v2503 = vrot.slane %v2502, 4
        %v2505 = vshll.u32 %v2416, 16
        %v2507 = vrot.slane %v2505, 5
        %v2508 = vsel %vm532, %v2503, %v2507
        %v2510 = vshrl.u32 %v2417, 16
        %v2512 = vrot.slane %v2510, 4
        %v2513 = vshll.u32 %v2417, 16
        %v2515 = vrot.slane %v2513, 5
        %v2516 = vor.u32 %v2512, %v2515
        %v2517 = vrot.slane %v2516, 4
        %v2519 = vshll.u32 %v2418, 16
        %v2521 = vrot.slane %v2519, 5
        %v2522 = vsel %vm532, %v2517, %v2521
        %v2524 = vshrl.u32 %v2419, 16
        %v2526 = vrot.slane %v2524, 4
        %v2527 = vshll.u32 %v2419, 16
        %v2529 = vrot.slane %v2527, 5
        %v2530 = vor.u32 %v2526, %v2529
        %v2531 = vrot.slane %v2530, 4
        %v2533 = vshll.u32 %v2420, 16
        %v2535 = vrot.slane %v2533, 5
        %v2536 = vsel %vm532, %v2531, %v2535
        %v2538 = vshrl.u32 %v2421, 16
        %v2540 = vrot.slane %v2538, 4
        %v2541 = vshll.u32 %v2421, 16
        %v2543 = vrot.slane %v2541, 5
        %v2544 = vor.u32 %v2540, %v2543
        %v2545 = vrot.slane %v2544, 4
        %v2547 = vshll.u32 %v2422, 16
        %v2549 = vrot.slane %v2547, 5
        %v2550 = vsel %vm532, %v2545, %v2549
        %v2552 = vshrl.u32 %v2423, 16
        %v2554 = vrot.slane %v2552, 4
        %v2555 = vshll.u32 %v2423, 16
        %v2557 = vrot.slane %v2555, 5
        %v2558 = vor.u32 %v2554, %v2557
        %v2559 = vrot.slane %v2558, 4
        %v2561 = vshll.u32 %v2424, 16
        %v2563 = vrot.slane %v2561, 5
        %v2564 = vsel %vm532, %v2559, %v2563
        %v2566 = vshrl.u32 %v2425, 16
        %v2568 = vrot.slane %v2566, 4
        %v2569 = vshll.u32 %v2425, 16
        %v2571 = vrot.slane %v2569, 5
        %v2572 = vor.u32 %v2568, %v2571
        %v2573 = vrot.slane %v2572, 4
        %v2575 = vshll.u32 %v2426, 16
        %v2577 = vrot.slane %v2575, 5
        %v2578 = vsel %vm532, %v2573, %v2577
        %v2580 = vshrl.u32 %v2427, 16
        %v2582 = vrot.slane %v2580, 4
        %v2583 = vshll.u32 %v2427, 16
        %v2585 = vrot.slane %v2583, 5
        %v2586 = vor.u32 %v2582, %v2585
        %v2587 = vrot.slane %v2586, 4
        %v2589 = vshll.u32 %v2428, 16
        %v2591 = vrot.slane %v2589, 5
        %v2592 = vsel %vm532, %v2587, %v2591
        %v2594 = vshrl.u32 %v2429, 16
        %v2596 = vrot.slane %v2594, 4
        %v2597 = vshll.u32 %v2429, 16
        %v2599 = vrot.slane %v2597, 5
        %v2600 = vor.u32 %v2596, %v2599
        %v2601 = vrot.slane %v2600, 4
        %v2603 = vshll.u32 %v2430, 16
        %v2605 = vrot.slane %v2603, 5
        %v2606 = vsel %vm532, %v2601, %v2605
        %v2608 = vshrl.u32 %v2431, 16
        %v2610 = vrot.slane %v2608, 4
        %v2611 = vshll.u32 %v2431, 16
        %v2613 = vrot.slane %v2611, 5
        %v2614 = vor.u32 %v2610, %v2613
        %v2615 = vrot.slane %v2614, 4
        %v2617 = vshll.u32 %v2432, 16
        %v2619 = vrot.slane %v2617, 5
        %v2620 = vsel %vm532, %v2615, %v2619
        %v2622 = vshrl.u32 %v2433, 16
        %v2624 = vrot.slane %v2622, 4
        %v2625 = vshll.u32 %v2433, 16
        %v2627 = vrot.slane %v2625, 5
        %v2628 = vor.u32 %v2624, %v2627
        %v2629 = vrot.slane %v2628, 4
        %v2631 = vshll.u32 %v2434, 16
        %v2633 = vrot.slane %v2631, 5
        %v2634 = vsel %vm532, %v2629, %v2633
        %v2636 = vshrl.u32 %v2435, 16
        %v2638 = vrot.slane %v2636, 4
        %v2639 = vshll.u32 %v2435, 16
        %v2641 = vrot.slane %v2639, 5
        %v2642 = vor.u32 %v2638, %v2641
        %v2643 = vrot.slane %v2642, 4
        %v2645 = vshll.u32 %v2436, 16
        %v2647 = vrot.slane %v2645, 5
        %v2648 = vsel %vm532, %v2643, %v2647
        %v2650 = vshrl.u32 %v2437, 16
        %v2652 = vrot.slane %v2650, 4
        %v2653 = vshll.u32 %v2437, 16
        %v2655 = vrot.slane %v2653, 5
        %v2656 = vor.u32 %v2652, %v2655
        %v2657 = vrot.slane %v2656, 4
        %v2659 = vshll.u32 %v2438, 16
        %v2661 = vrot.slane %v2659, 5
        %v2662 = vsel %vm532, %v2657, %v2661
        %s2663 = scalar_lea.vmem %s319, 448 [#allocation4]
        %v2664 = vld [vmem:[%s2663] sm:$0xf]
        %v2665 = vld [vmem:[%s2663 + $0x4] sm:$0xf]
        %v2666 = vld [vmem:[%s2663 + $0x8] sm:$0xf]
        %v2667 = vld [vmem:[%s2663 + $0xc] sm:$0xf]
        %v2668 = vld [vmem:[%s2663 + $0x10] sm:$0xf]
        %v2669 = vld [vmem:[%s2663 + $0x14] sm:$0xf]
        %v2670 = vld [vmem:[%s2663 + $0x18] sm:$0xf]
        %v2671 = vld [vmem:[%s2663 + $0x1c] sm:$0xf]
        %v2672 = vld [vmem:[%s2663 + $0x20] sm:$0xf]
        %v2673 = vld [vmem:[%s2663 + $0x24] sm:$0xf]
        %v2674 = vld [vmem:[%s2663 + $0x28] sm:$0xf]
        %v2675 = vld [vmem:[%s2663 + $0x2c] sm:$0xf]
        %v2676 = vld [vmem:[%s2663 + $0x30] sm:$0xf]
        %v2677 = vld [vmem:[%s2663 + $0x34] sm:$0xf]
        %v2678 = vld [vmem:[%s2663 + $0x38] sm:$0xf]
        %v2679 = vld [vmem:[%s2663 + $0x3c] sm:$0xf]
        %v2680 = vunpack.c.l.b16 %v2452
        %v2681 = vunpack.c.l.b16 %v2466
        %v2682 = vunpack.c.l.b16 %v2480
        %v2683 = vunpack.c.l.b16 %v2494
        %v2684 = vunpack.c.l.b16 %v2508
        %v2685 = vunpack.c.l.b16 %v2522
        %v2686 = vunpack.c.l.b16 %v2536
        %v2687 = vunpack.c.l.b16 %v2550
        %v2688 = vunpack.c.l.b16 %v2564
        %v2689 = vunpack.c.l.b16 %v2578
        %v2690 = vunpack.c.l.b16 %v2592
        %v2691 = vunpack.c.l.b16 %v2606
        %v2692 = vunpack.c.l.b16 %v2620
        %v2693 = vunpack.c.l.b16 %v2634
        %v2694 = vunpack.c.l.b16 %v2648
        %v2695 = vunpack.c.l.b16 %v2662
        %v2696 = vpack.c.b16 %v2681, %v2680
        %v2697 = vpack.c.b16 %v2683, %v2682
        %v2698 = vpack.c.b16 %v2685, %v2684
        %v2699 = vpack.c.b16 %v2687, %v2686
        %v2700 = vpack.c.b16 %v2689, %v2688
        %v2701 = vpack.c.b16 %v2691, %v2690
        %v2702 = vpack.c.b16 %v2693, %v2692
        %v2703 = vpack.c.b16 %v2695, %v2694
        %v2728 = vunpack.c.l.b16 %v2664
        %v2729 = vunpack.c.l.b16 %v2665
        %v2730 = vunpack.c.l.b16 %v2666
        %v2731 = vunpack.c.l.b16 %v2667
        %v2732 = vunpack.c.l.b16 %v2668
        %v2733 = vunpack.c.l.b16 %v2669
        %v2734 = vunpack.c.l.b16 %v2670
        %v2735 = vunpack.c.l.b16 %v2671
        %v2736 = vunpack.c.l.b16 %v2672
        %v2737 = vunpack.c.l.b16 %v2673
        %v2738 = vunpack.c.l.b16 %v2674
        %v2739 = vunpack.c.l.b16 %v2675
        %v2740 = vunpack.c.l.b16 %v2676
        %v2741 = vunpack.c.l.b16 %v2677
        %v2742 = vunpack.c.l.b16 %v2678
        %v2743 = vunpack.c.l.b16 %v2679
        %v2744 = vpack.c.b16 %v2729, %v2728
        %v2745 = vpack.c.b16 %v2731, %v2730
        %v2746 = vpack.c.b16 %v2733, %v2732
        %v2747 = vpack.c.b16 %v2735, %v2734
        %v2748 = vpack.c.b16 %v2737, %v2736
        %v2749 = vpack.c.b16 %v2739, %v2738
        %v2750 = vpack.c.b16 %v2741, %v2740
        %v2751 = vpack.c.b16 %v2743, %v2742
        %2760 = vmatpush.bf16.msra.mxu0 %v2751
        %2761 = vmatpush.bf16.msra.mxu0 %v2750
        %2762 = vmatpush.bf16.msra.mxu0 %v2749
        %2763 = vmatpush.bf16.msra.mxu0 %v2748
        %2764 = vmatpush.bf16.msra.mxu0 %v2747
        %2765 = vmatpush.bf16.msra.mxu0 %v2746
        %2766 = vmatpush.bf16.msra.mxu0 %v2745
        %2767 = vmatpush.bf16.msra.mxu0 %v2744
        %2768 = vmatmul.bf16.gmra.mxu0 %v2696
        %v2769 = vpop.f32.mrf.mxu0
        %v2770 = vadd.f32 0.0, %v2769
        %v2771 = vpop.f32.mrf.mxu0
        %v2772 = vadd.f32 0.0, %v2771
        %2773 = vmatmul.bf16.gmra.mxu0 %v2697
        %v2774 = vpop.f32.mrf.mxu0
        %v2775 = vadd.f32 0.0, %v2774
        %v2776 = vpop.f32.mrf.mxu0
        %v2777 = vadd.f32 0.0, %v2776
        %2778 = vmatmul.bf16.gmra.mxu0 %v2698
        %v2779 = vpop.f32.mrf.mxu0
        %v2780 = vadd.f32 0.0, %v2779
        %v2781 = vpop.f32.mrf.mxu0
        %v2782 = vadd.f32 0.0, %v2781
        %2783 = vmatmul.bf16.gmra.mxu0 %v2699
        %v2784 = vpop.f32.mrf.mxu0
        %v2785 = vadd.f32 0.0, %v2784
        %v2786 = vpop.f32.mrf.mxu0
        %v2787 = vadd.f32 0.0, %v2786
        %2788 = vmatmul.bf16.gmra.mxu0 %v2700
        %v2789 = vpop.f32.mrf.mxu0
        %v2790 = vadd.f32 0.0, %v2789
        %v2791 = vpop.f32.mrf.mxu0
        %v2792 = vadd.f32 0.0, %v2791
        %2793 = vmatmul.bf16.gmra.mxu0 %v2701
        %v2794 = vpop.f32.mrf.mxu0
        %v2795 = vadd.f32 0.0, %v2794
        %v2796 = vpop.f32.mrf.mxu0
        %v2797 = vadd.f32 0.0, %v2796
        %2798 = vmatmul.bf16.gmra.mxu0 %v2702
        %v2799 = vpop.f32.mrf.mxu0
        %v2800 = vadd.f32 0.0, %v2799
        %v2801 = vpop.f32.mrf.mxu0
        %v2802 = vadd.f32 0.0, %v2801
        %2803 = vmatmul.bf16.gmra.mxu0 %v2703
        %v2804 = vpop.f32.mrf.mxu0
        %v2805 = vadd.f32 0.0, %v2804
        %v2806 = vpop.f32.mrf.mxu0
        %v2807 = vadd.f32 0.0, %v2806
        %2808 = vdwg.mxu0
        %v2809 = vadd.f32 %v2391, %v2770
        %v2810 = vadd.f32 %v2392, %v2772
        %v2811 = vadd.f32 %v2393, %v2775
        %v2812 = vadd.f32 %v2394, %v2777
        %v2813 = vadd.f32 %v2395, %v2780
        %v2814 = vadd.f32 %v2396, %v2782
        %v2815 = vadd.f32 %v2397, %v2785
        %v2816 = vadd.f32 %v2398, %v2787
        %v2817 = vadd.f32 %v2399, %v2790
        %v2818 = vadd.f32 %v2400, %v2792
        %v2819 = vadd.f32 %v2401, %v2795
        %v2820 = vadd.f32 %v2402, %v2797
        %v2821 = vadd.f32 %v2403, %v2800
        %v2822 = vadd.f32 %v2404, %v2802
        %v2823 = vadd.f32 %v2405, %v2805
        %v2824 = vadd.f32 %v2406, %v2807
        %v2825 = vld [vmem:[%s2212] sm:$0xe]
        %v2826 = vld [vmem:[%s2212 + $0x8] sm:$0xe]
        %v2827 = vld [vmem:[%s2212 + $0x10] sm:$0xe]
        %v2828 = vld [vmem:[%s2212 + $0x18] sm:$0xe]
        %v2829 = vld [vmem:[%s2212 + $0x20] sm:$0xe]
        %v2830 = vld [vmem:[%s2212 + $0x28] sm:$0xe]
        %v2831 = vld [vmem:[%s2212 + $0x30] sm:$0xe]
        %v2832 = vld [vmem:[%s2212 + $0x38] sm:$0xe]
        %v2833 = vld [vmem:[%s2212 + $0x50] sm:$0xe]
        %v2834 = vld [vmem:[%s2212 + $0x58] sm:$0xe]
        %v2835 = vld [vmem:[%s2212 + $0x60] sm:$0xe]
        %v2836 = vld [vmem:[%s2212 + $0x68] sm:$0xe]
        %v2837 = vld [vmem:[%s2212 + $0x70] sm:$0xe]
        %v2838 = vld [vmem:[%s2212 + $0x78] sm:$0xe]
        %v2839 = vld [vmem:[%s2212 + $0x80] sm:$0xe]
        %v2840 = vld [vmem:[%s2212 + $0x88] sm:$0xe]
        %v2873 = vrot.slane %v2825, 5
        %v2874 = vrot.slane %v2873, 4
        %v2875 = vrot.slane %v2408, 5
        %v2876 = vsel %vm1098, %v2874, %v2875
        %v2877 = vrot.slane %v2826, 5
        %v2878 = vrot.slane %v2877, 4
        %v2879 = vrot.slane %v2410, 5
        %v2880 = vsel %vm1098, %v2878, %v2879
        %v2881 = vrot.slane %v2827, 5
        %v2882 = vrot.slane %v2881, 4
        %v2883 = vrot.slane %v2412, 5
        %v2884 = vsel %vm1098, %v2882, %v2883
        %v2885 = vrot.slane %v2828, 5
        %v2886 = vrot.slane %v2885, 4
        %v2887 = vrot.slane %v2414, 5
        %v2888 = vsel %vm1098, %v2886, %v2887
        %v2889 = vrot.slane %v2829, 5
        %v2890 = vrot.slane %v2889, 4
        %v2891 = vrot.slane %v2416, 5
        %v2892 = vsel %vm1098, %v2890, %v2891
        %v2893 = vrot.slane %v2830, 5
        %v2894 = vrot.slane %v2893, 4
        %v2895 = vrot.slane %v2418, 5
        %v2896 = vsel %vm1098, %v2894, %v2895
        %v2897 = vrot.slane %v2831, 5
        %v2898 = vrot.slane %v2897, 4
        %v2899 = vrot.slane %v2420, 5
        %v2900 = vsel %vm1098, %v2898, %v2899
        %v2901 = vrot.slane %v2832, 5
        %v2902 = vrot.slane %v2901, 4
        %v2903 = vrot.slane %v2422, 5
        %v2904 = vsel %vm1098, %v2902, %v2903
        %v2905 = vrot.slane %v2833, 5
        %v2906 = vrot.slane %v2905, 4
        %v2907 = vrot.slane %v2424, 5
        %v2908 = vsel %vm1098, %v2906, %v2907
        %v2909 = vrot.slane %v2834, 5
        %v2910 = vrot.slane %v2909, 4
        %v2911 = vrot.slane %v2426, 5
        %v2912 = vsel %vm1098, %v2910, %v2911
        %v2913 = vrot.slane %v2835, 5
        %v2914 = vrot.slane %v2913, 4
        %v2915 = vrot.slane %v2428, 5
        %v2916 = vsel %vm1098, %v2914, %v2915
        %v2917 = vrot.slane %v2836, 5
        %v2918 = vrot.slane %v2917, 4
        %v2919 = vrot.slane %v2430, 5
        %v2920 = vsel %vm1098, %v2918, %v2919
        %v2921 = vrot.slane %v2837, 5
        %v2922 = vrot.slane %v2921, 4
        %v2923 = vrot.slane %v2432, 5
        %v2924 = vsel %vm1098, %v2922, %v2923
        %v2925 = vrot.slane %v2838, 5
        %v2926 = vrot.slane %v2925, 4
        %v2927 = vrot.slane %v2434, 5
        %v2928 = vsel %vm1098, %v2926, %v2927
        %v2929 = vrot.slane %v2839, 5
        %v2930 = vrot.slane %v2929, 4
        %v2931 = vrot.slane %v2436, 5
        %v2932 = vsel %vm1098, %v2930, %v2931
        %v2933 = vrot.slane %v2840, 5
        %v2934 = vrot.slane %v2933, 4
        %v2935 = vrot.slane %v2438, 5
        %v2936 = vsel %vm1098, %v2934, %v2935
        %s2937 = scalar_lea.vmem %s319, 512 [#allocation4]
        %v2938 = vld [vmem:[%s2937] sm:$0xf]
        %v2939 = vld [vmem:[%s2937 + $0x4] sm:$0xf]
        %v2940 = vld [vmem:[%s2937 + $0x8] sm:$0xf]
        %v2941 = vld [vmem:[%s2937 + $0xc] sm:$0xf]
        %v2942 = vld [vmem:[%s2937 + $0x10] sm:$0xf]
        %v2943 = vld [vmem:[%s2937 + $0x14] sm:$0xf]
        %v2944 = vld [vmem:[%s2937 + $0x18] sm:$0xf]
        %v2945 = vld [vmem:[%s2937 + $0x1c] sm:$0xf]
        %v2946 = vld [vmem:[%s2937 + $0x20] sm:$0xf]
        %v2947 = vld [vmem:[%s2937 + $0x24] sm:$0xf]
        %v2948 = vld [vmem:[%s2937 + $0x28] sm:$0xf]
        %v2949 = vld [vmem:[%s2937 + $0x2c] sm:$0xf]
        %v2950 = vld [vmem:[%s2937 + $0x30] sm:$0xf]
        %v2951 = vld [vmem:[%s2937 + $0x34] sm:$0xf]
        %v2952 = vld [vmem:[%s2937 + $0x38] sm:$0xf]
        %v2953 = vld [vmem:[%s2937 + $0x3c] sm:$0xf]
        %v2954 = vunpack.c.l.b16 %v2876
        %v2955 = vunpack.c.l.b16 %v2880
        %v2956 = vunpack.c.l.b16 %v2884
        %v2957 = vunpack.c.l.b16 %v2888
        %v2958 = vunpack.c.l.b16 %v2892
        %v2959 = vunpack.c.l.b16 %v2896
        %v2960 = vunpack.c.l.b16 %v2900
        %v2961 = vunpack.c.l.b16 %v2904
        %v2962 = vunpack.c.l.b16 %v2908
        %v2963 = vunpack.c.l.b16 %v2912
        %v2964 = vunpack.c.l.b16 %v2916
        %v2965 = vunpack.c.l.b16 %v2920
        %v2966 = vunpack.c.l.b16 %v2924
        %v2967 = vunpack.c.l.b16 %v2928
        %v2968 = vunpack.c.l.b16 %v2932
        %v2969 = vunpack.c.l.b16 %v2936
        %v2970 = vpack.c.b16 %v2955, %v2954
        %v2971 = vpack.c.b16 %v2957, %v2956
        %v2972 = vpack.c.b16 %v2959, %v2958
        %v2973 = vpack.c.b16 %v2961, %v2960
        %v2974 = vpack.c.b16 %v2963, %v2962
        %v2975 = vpack.c.b16 %v2965, %v2964
        %v2976 = vpack.c.b16 %v2967, %v2966
        %v2977 = vpack.c.b16 %v2969, %v2968
        %v3002 = vunpack.c.l.b16 %v2938
        %v3003 = vunpack.c.l.b16 %v2939
        %v3004 = vunpack.c.l.b16 %v2940
        %v3005 = vunpack.c.l.b16 %v2941
        %v3006 = vunpack.c.l.b16 %v2942
        %v3007 = vunpack.c.l.b16 %v2943
        %v3008 = vunpack.c.l.b16 %v2944
        %v3009 = vunpack.c.l.b16 %v2945
        %v3010 = vunpack.c.l.b16 %v2946
        %v3011 = vunpack.c.l.b16 %v2947
        %v3012 = vunpack.c.l.b16 %v2948
        %v3013 = vunpack.c.l.b16 %v2949
        %v3014 = vunpack.c.l.b16 %v2950
        %v3015 = vunpack.c.l.b16 %v2951
        %v3016 = vunpack.c.l.b16 %v2952
        %v3017 = vunpack.c.l.b16 %v2953
        %v3018 = vpack.c.b16 %v3003, %v3002
        %v3019 = vpack.c.b16 %v3005, %v3004
        %v3020 = vpack.c.b16 %v3007, %v3006
        %v3021 = vpack.c.b16 %v3009, %v3008
        %v3022 = vpack.c.b16 %v3011, %v3010
        %v3023 = vpack.c.b16 %v3013, %v3012
        %v3024 = vpack.c.b16 %v3015, %v3014
        %v3025 = vpack.c.b16 %v3017, %v3016
        %3034 = vmatpush.bf16.msra.mxu0 %v3025
        %3035 = vmatpush.bf16.msra.mxu0 %v3024
        %3036 = vmatpush.bf16.msra.mxu0 %v3023
        %3037 = vmatpush.bf16.msra.mxu0 %v3022
        %3038 = vmatpush.bf16.msra.mxu0 %v3021
        %3039 = vmatpush.bf16.msra.mxu0 %v3020
        %3040 = vmatpush.bf16.msra.mxu0 %v3019
        %3041 = vmatpush.bf16.msra.mxu0 %v3018
        %3042 = vmatmul.bf16.gmra.mxu0 %v2970
        %v3043 = vpop.f32.mrf.mxu0
        %v3044 = vadd.f32 0.0, %v3043
        %v3045 = vpop.f32.mrf.mxu0
        %v3046 = vadd.f32 0.0, %v3045
        %3047 = vmatmul.bf16.gmra.mxu0 %v2971
        %v3048 = vpop.f32.mrf.mxu0
        %v3049 = vadd.f32 0.0, %v3048
        %v3050 = vpop.f32.mrf.mxu0
        %v3051 = vadd.f32 0.0, %v3050
        %3052 = vmatmul.bf16.gmra.mxu0 %v2972
        %v3053 = vpop.f32.mrf.mxu0
        %v3054 = vadd.f32 0.0, %v3053
        %v3055 = vpop.f32.mrf.mxu0
        %v3056 = vadd.f32 0.0, %v3055
        %3057 = vmatmul.bf16.gmra.mxu0 %v2973
        %v3058 = vpop.f32.mrf.mxu0
        %v3059 = vadd.f32 0.0, %v3058
        %v3060 = vpop.f32.mrf.mxu0
        %v3061 = vadd.f32 0.0, %v3060
        %3062 = vmatmul.bf16.gmra.mxu0 %v2974
        %v3063 = vpop.f32.mrf.mxu0
        %v3064 = vadd.f32 0.0, %v3063
        %v3065 = vpop.f32.mrf.mxu0
        %v3066 = vadd.f32 0.0, %v3065
        %3067 = vmatmul.bf16.gmra.mxu0 %v2975
        %v3068 = vpop.f32.mrf.mxu0
        %v3069 = vadd.f32 0.0, %v3068
        %v3070 = vpop.f32.mrf.mxu0
        %v3071 = vadd.f32 0.0, %v3070
        %3072 = vmatmul.bf16.gmra.mxu0 %v2976
        %v3073 = vpop.f32.mrf.mxu0
        %v3074 = vadd.f32 0.0, %v3073
        %v3075 = vpop.f32.mrf.mxu0
        %v3076 = vadd.f32 0.0, %v3075
        %3077 = vmatmul.bf16.gmra.mxu0 %v2977
        %v3078 = vpop.f32.mrf.mxu0
        %v3079 = vadd.f32 0.0, %v3078
        %v3080 = vpop.f32.mrf.mxu0
        %v3081 = vadd.f32 0.0, %v3080
        %3082 = vdwg.mxu0
        %v3083 = vadd.f32 %v2809, %v3044
        %v3084 = vadd.f32 %v2810, %v3046
        %v3085 = vadd.f32 %v2811, %v3049
        %v3086 = vadd.f32 %v2812, %v3051
        %v3087 = vadd.f32 %v2813, %v3054
        %v3088 = vadd.f32 %v2814, %v3056
        %v3089 = vadd.f32 %v2815, %v3059
        %v3090 = vadd.f32 %v2816, %v3061
        %v3091 = vadd.f32 %v2817, %v3064
        %v3092 = vadd.f32 %v2818, %v3066
        %v3093 = vadd.f32 %v2819, %v3069
        %v3094 = vadd.f32 %v2820, %v3071
        %v3095 = vadd.f32 %v2821, %v3074
        %v3096 = vadd.f32 %v2822, %v3076
        %v3097 = vadd.f32 %v2823, %v3079
        %v3098 = vadd.f32 %v2824, %v3081
        %v3099 = vadd.f32 %v3083, %v3084
        %v3100 = vadd.f32 %v3099, %v3085
        %v3101 = vadd.f32 %v3100, %v3086
        %v3102 = vadd.f32 %v3101, %v3087
        %v3103 = vadd.f32 %v3102, %v3088
        %v3104 = vadd.f32 %v3103, %v3089
        %v3105 = vadd.f32 %v3104, %v3090
        %v3106 = vadd.f32 %v3105, %v3091
        %v3107 = vadd.f32 %v3106, %v3092
        %v3108 = vadd.f32 %v3107, %v3093
        %v3109 = vadd.f32 %v3108, %v3094
        %v3110 = vadd.f32 %v3109, %v3095
        %v3111 = vadd.f32 %v3110, %v3096
        %v3112 = vadd.f32 %v3111, %v3097
        %v3113 = vadd.f32 %v3112, %v3098
        %v3114 = vrot.slane %v3113, 4
        %v3115 = vadd.f32 %v3113, %v3114
        %v3116 = vrot.slane %v3115, 2
        %v3117 = vadd.f32 %v3115, %v3116
        %v3118 = vrot.slane %v3117, 1
        %v3119 = vadd.f32 %v3117, %v3118
        %v3120 = vmul.f32 %v3083, %v3083
        %v3121 = vmul.f32 %v3084, %v3084
        %v3122 = vmul.f32 %v3085, %v3085
        %v3123 = vmul.f32 %v3086, %v3086
        %v3124 = vmul.f32 %v3087, %v3087
        %v3125 = vmul.f32 %v3088, %v3088
        %v3126 = vmul.f32 %v3089, %v3089
        %v3127 = vmul.f32 %v3090, %v3090
        %v3128 = vmul.f32 %v3091, %v3091
        %v3129 = vmul.f32 %v3092, %v3092
        %v3130 = vmul.f32 %v3093, %v3093
        %v3131 = vmul.f32 %v3094, %v3094
        %v3132 = vmul.f32 %v3095, %v3095
        %v3133 = vmul.f32 %v3096, %v3096
        %v3134 = vmul.f32 %v3097, %v3097
        %v3135 = vmul.f32 %v3098, %v3098
        %v3136 = vadd.f32 %v3120, %v3121
        %v3137 = vadd.f32 %v3136, %v3122
        %v3138 = vadd.f32 %v3137, %v3123
        %v3139 = vadd.f32 %v3138, %v3124
        %v3140 = vadd.f32 %v3139, %v3125
        %v3141 = vadd.f32 %v3140, %v3126
        %v3142 = vadd.f32 %v3141, %v3127
        %v3143 = vadd.f32 %v3142, %v3128
        %v3144 = vadd.f32 %v3143, %v3129
        %v3145 = vadd.f32 %v3144, %v3130
        %v3146 = vadd.f32 %v3145, %v3131
        %v3147 = vadd.f32 %v3146, %v3132
        %v3148 = vadd.f32 %v3147, %v3133
        %v3149 = vadd.f32 %v3148, %v3134
        %v3150 = vadd.f32 %v3149, %v3135
        %v3151 = vrot.slane %v3150, 4
        %v3152 = vadd.f32 %v3150, %v3151
        %v3153 = vrot.slane %v3152, 2
        %v3154 = vadd.f32 %v3152, %v3153
        %v3155 = vrot.slane %v3154, 1
        %v3156 = vadd.f32 %v3154, %v3155
        %v3157 = vmul.f32 %v3119, 0.0078125
        %v3158 = vmul.f32 %v3156, 0.0078125
        %v3159 = vmul.f32 %v3157, %v3157
        %v3160 = vsub.f32 %v3158, %v3159
        %v3161 = vsub.f32 %v3083, %v3157
        %v3162 = vsub.f32 %v3084, %v3157
        %v3163 = vsub.f32 %v3085, %v3157
        %v3164 = vsub.f32 %v3086, %v3157
        %v3165 = vsub.f32 %v3087, %v3157
        %v3166 = vsub.f32 %v3088, %v3157
        %v3167 = vsub.f32 %v3089, %v3157
        %v3168 = vsub.f32 %v3090, %v3157
        %v3169 = vsub.f32 %v3091, %v3157
        %v3170 = vsub.f32 %v3092, %v3157
        %v3171 = vsub.f32 %v3093, %v3157
        %v3172 = vsub.f32 %v3094, %v3157
        %v3173 = vsub.f32 %v3095, %v3157
        %v3174 = vsub.f32 %v3096, %v3157
        %v3175 = vsub.f32 %v3097, %v3157
        %v3176 = vsub.f32 %v3098, %v3157
        %v3177 = vadd.f32 %v3160, 1e-05
        %v3178 = vrsqrt.pop %v3177
        %v3179 = vmul.f32 %v3178, %v3177
        %v3180 = vmul.f32 %v3179, %v3178
        %v3181 = vmul.f32 0.5, %v3180
        %v3182 = vsub.f32 1.5, %v3181
        %v3183 = vmul.f32 %v3178, %v3182
        %vm3184 = vweird.f32 %v3177
        %vm3185 = vweird.f32 %v3178
        %vm3186 = vmor %vm3184, %vm3185
        %v3187 = vsel %vm3186, %v3178, %v3183
        %v3188 = vmul.f32 %v3161, %v3187
        %v3189 = vmul.f32 %v3162, %v3187
        %v3190 = vmul.f32 %v3163, %v3187
        %v3191 = vmul.f32 %v3164, %v3187
        %v3192 = vmul.f32 %v3165, %v3187
        %v3193 = vmul.f32 %v3166, %v3187
        %v3194 = vmul.f32 %v3167, %v3187
        %v3195 = vmul.f32 %v3168, %v3187
        %v3196 = vmul.f32 %v3169, %v3187
        %v3197 = vmul.f32 %v3170, %v3187
        %v3198 = vmul.f32 %v3171, %v3187
        %v3199 = vmul.f32 %v3172, %v3187
        %v3200 = vmul.f32 %v3173, %v3187
        %v3201 = vmul.f32 %v3174, %v3187
        %v3202 = vmul.f32 %v3175, %v3187
        %v3203 = vmul.f32 %v3176, %v3187
        %v3204 = vld [vmem:[%s328] sm:$0x1]
        %v3206 = vperm.slane %v3204, 0
        %v3208 = vmul.f32 %v3188, %v3206
        %v3209 = vmul.f32 %v3189, %v3206
        %v3210 = vmul.f32 %v3190, %v3206
        %v3211 = vmul.f32 %v3191, %v3206
        %v3212 = vmul.f32 %v3192, %v3206
        %v3213 = vmul.f32 %v3193, %v3206
        %v3214 = vmul.f32 %v3194, %v3206
        %v3215 = vmul.f32 %v3195, %v3206
        %v3216 = vmul.f32 %v3196, %v3206
        %v3217 = vmul.f32 %v3197, %v3206
        %v3218 = vmul.f32 %v3198, %v3206
        %v3219 = vmul.f32 %v3199, %v3206
        %v3220 = vmul.f32 %v3200, %v3206
        %v3221 = vmul.f32 %v3201, %v3206
        %v3222 = vmul.f32 %v3202, %v3206
        %v3223 = vmul.f32 %v3203, %v3206
        %v3224 = vld [vmem:[%s337] sm:$0x1]
        %v3226 = vperm.slane %v3224, 0
        %v3228 = vadd.f32 %v3208, %v3226
        %v3229 = vadd.f32 %v3209, %v3226
        %v3230 = vadd.f32 %v3210, %v3226
        %v3231 = vadd.f32 %v3211, %v3226
        %v3232 = vadd.f32 %v3212, %v3226
        %v3233 = vadd.f32 %v3213, %v3226
        %v3234 = vadd.f32 %v3214, %v3226
        %v3235 = vadd.f32 %v3215, %v3226
        %v3236 = vadd.f32 %v3216, %v3226
        %v3237 = vadd.f32 %v3217, %v3226
        %v3238 = vadd.f32 %v3218, %v3226
        %v3239 = vadd.f32 %v3219, %v3226
        %v3240 = vadd.f32 %v3220, %v3226
        %v3241 = vadd.f32 %v3221, %v3226
        %v3242 = vadd.f32 %v3222, %v3226
        %v3243 = vadd.f32 %v3223, %v3226
        %p3244 = scmp.ge.s32.totalorder %s25, 2
        %p3245 = scmp.lt.s32.totalorder %s25, 0
        %s3246 = ssub.s32 0, %s25
        %s3247 = scalar_select %p3245, %s3246, %s25
        %s3248 = sand.u32 %s3247, 1
        %s3249 = ssub.s32 0, %s3248
        %s3250 = scalar_select %p3245, %s3249, %s3248
        %p3251 = scmp.ne.s32.totalorder %s3250, 0
        %p3252 = scmp.lt.s32.totalorder %s3250, 0
        %p3253 = pnand %p3252, %p3251
        %p3254 = pneg %p3253
        %s3255 = sadd.s32 %s3250, 2
        %s3256 = scalar_select %p3254, %s3255, %s3250
        %p3257 = scmp.eq.s32.totalorder %s3256, 0
        %p3258 = pnand %p3244, %p3257
        %p3259 = pneg %p3258
        %v3260 = vld [vmem:[#allocation3] sm:$0xff]
        %v3261 = vld [vmem:[#allocation3 + $0x8] sm:$0xff]
        %v3262 = vld [vmem:[#allocation3 + $0x10] sm:$0xff]
        %v3263 = vld [vmem:[#allocation3 + $0x18] sm:$0xff]
        %v3264 = vld [vmem:[#allocation3 + $0x20] sm:$0xff]
        %v3265 = vld [vmem:[#allocation3 + $0x28] sm:$0xff]
        %v3266 = vld [vmem:[#allocation3 + $0x30] sm:$0xff]
        %v3267 = vld [vmem:[#allocation3 + $0x38] sm:$0xff]
        %v3268 = vld [vmem:[#allocation3 + $0x40] sm:$0xff]
        %v3269 = vld [vmem:[#allocation3 + $0x48] sm:$0xff]
        %v3270 = vld [vmem:[#allocation3 + $0x50] sm:$0xff]
        %v3271 = vld [vmem:[#allocation3 + $0x58] sm:$0xff]
        %v3272 = vld [vmem:[#allocation3 + $0x60] sm:$0xff]
        %v3273 = vld [vmem:[#allocation3 + $0x68] sm:$0xff]
        %v3274 = vld [vmem:[#allocation3 + $0x70] sm:$0xff]
        %v3275 = vld [vmem:[#allocation3 + $0x78] sm:$0xff]
        %s3276 = scalar_select %p3259, 1, 0
        %v3277 = vstv %s3276
        %vm3278 = vcmp.eq.s32.totalorder %v3277, 1
        %v3279 = vsel %vm3278, %v3260, 0.0
        %v3280 = vsel %vm3278, %v3261, 0.0
        %v3281 = vsel %vm3278, %v3262, 0.0
        %v3282 = vsel %vm3278, %v3263, 0.0
        %v3283 = vsel %vm3278, %v3264, 0.0
        %v3284 = vsel %vm3278, %v3265, 0.0
        %v3285 = vsel %vm3278, %v3266, 0.0
        %v3286 = vsel %vm3278, %v3267, 0.0
        %v3287 = vsel %vm3278, %v3268, 0.0
        %v3288 = vsel %vm3278, %v3269, 0.0
        %v3289 = vsel %vm3278, %v3270, 0.0
        %v3290 = vsel %vm3278, %v3271, 0.0
        %v3291 = vsel %vm3278, %v3272, 0.0
        %v3292 = vsel %vm3278, %v3273, 0.0
        %v3293 = vsel %vm3278, %v3274, 0.0
        %v3294 = vsel %vm3278, %v3275, 0.0
        %v3295 = vadd.f32 %v3228, %v3279
        %v3296 = vadd.f32 %v3229, %v3280
        %v3297 = vadd.f32 %v3230, %v3281
        %v3298 = vadd.f32 %v3231, %v3282
        %v3299 = vadd.f32 %v3232, %v3283
        %v3300 = vadd.f32 %v3233, %v3284
        %v3301 = vadd.f32 %v3234, %v3285
        %v3302 = vadd.f32 %v3235, %v3286
        %v3303 = vadd.f32 %v3236, %v3287
        %v3304 = vadd.f32 %v3237, %v3288
        %v3305 = vadd.f32 %v3238, %v3289
        %v3306 = vadd.f32 %v3239, %v3290
        %v3307 = vadd.f32 %v3240, %v3291
        %v3308 = vadd.f32 %v3241, %v3292
        %v3309 = vadd.f32 %v3242, %v3293
        %v3310 = vadd.f32 %v3243, %v3294
        %v3311 = vmax.f32 %v3295, 0.0
        %v3312 = vmax.f32 %v3296, 0.0
        %v3313 = vmax.f32 %v3297, 0.0
        %v3314 = vmax.f32 %v3298, 0.0
        %v3315 = vmax.f32 %v3299, 0.0
        %v3316 = vmax.f32 %v3300, 0.0
        %v3317 = vmax.f32 %v3301, 0.0
        %v3318 = vmax.f32 %v3302, 0.0
        %v3319 = vmax.f32 %v3303, 0.0
        %v3320 = vmax.f32 %v3304, 0.0
        %v3321 = vmax.f32 %v3305, 0.0
        %v3322 = vmax.f32 %v3306, 0.0
        %v3323 = vmax.f32 %v3307, 0.0
        %v3324 = vmax.f32 %v3308, 0.0
        %v3325 = vmax.f32 %v3309, 0.0
        %v3326 = vmax.f32 %v3310, 0.0
        // Predicated region
        $region73: #{forward.2} parent=47 // pred_check
          %p3327 = pneg %p3257
        $region74: #{forward.2} parent=47 // pred_check_branch
          %3329 = sbr.rel (%p3327) target = $region76
        $region75: #{forward.2} parent=47 // pred_region
          %3330 = vst [vmem:[#allocation3] sm:$0xff] %v3311
          %3331 = vst [vmem:[#allocation3 + $0x8] sm:$0xff] %v3312
          %3332 = vst [vmem:[#allocation3 + $0x10] sm:$0xff] %v3313
          %3333 = vst [vmem:[#allocation3 + $0x18] sm:$0xff] %v3314
          %3334 = vst [vmem:[#allocation3 + $0x20] sm:$0xff] %v3315
          %3335 = vst [vmem:[#allocation3 + $0x28] sm:$0xff] %v3316
          %3336 = vst [vmem:[#allocation3 + $0x30] sm:$0xff] %v3317
          %3337 = vst [vmem:[#allocation3 + $0x38] sm:$0xff] %v3318
          %3338 = vst [vmem:[#allocation3 + $0x40] sm:$0xff] %v3319
          %3339 = vst [vmem:[#allocation3 + $0x48] sm:$0xff] %v3320
          %3340 = vst [vmem:[#allocation3 + $0x50] sm:$0xff] %v3321
          %3341 = vst [vmem:[#allocation3 + $0x58] sm:$0xff] %v3322
          %3342 = vst [vmem:[#allocation3 + $0x60] sm:$0xff] %v3323
          %3343 = vst [vmem:[#allocation3 + $0x68] sm:$0xff] %v3324
          %3344 = vst [vmem:[#allocation3 + $0x70] sm:$0xff] %v3325
          %3345 = vst [vmem:[#allocation3 + $0x78] sm:$0xff] %v3326
        $region76: #{forward.2} parent=47 // pred_fallthru
          _
        %v3346 = vpack.c.bf16 %v3311, %v3311
        %v3347 = vpack.c.bf16 %v3312, %v3312
        %v3348 = vpack.c.bf16 %v3313, %v3313
        %v3349 = vpack.c.bf16 %v3314, %v3314
        %v3350 = vpack.c.bf16 %v3315, %v3315
        %v3351 = vpack.c.bf16 %v3316, %v3316
        %v3352 = vpack.c.bf16 %v3317, %v3317
        %v3353 = vpack.c.bf16 %v3318, %v3318
        %v3354 = vpack.c.bf16 %v3319, %v3319
        %v3355 = vpack.c.bf16 %v3320, %v3320
        %v3356 = vpack.c.bf16 %v3321, %v3321
        %v3357 = vpack.c.bf16 %v3322, %v3322
        %v3358 = vpack.c.bf16 %v3323, %v3323
        %v3359 = vpack.c.bf16 %v3324, %v3324
        %v3360 = vpack.c.bf16 %v3325, %v3325
        %v3361 = vpack.c.bf16 %v3326, %v3326
        %v3363 = vshrl.u32 %v3346, 16
        %v3365 = vrot.slane %v3363, 7
        %v3366 = vshll.u32 %v3346, 16
        %v3368 = vor.u32 %v3365, %v3366
        %v3369 = vrot.slane %v3365, 4
        %v3371 = vshrl.u32 %v3347, 16
        %v3373 = vrot.slane %v3371, 7
        %v3374 = vshll.u32 %v3347, 16
        %v3376 = vor.u32 %v3373, %v3374
        %v3377 = vrot.slane %v3373, 4
        %v3379 = vshrl.u32 %v3348, 16
        %v3381 = vrot.slane %v3379, 7
        %v3382 = vshll.u32 %v3348, 16
        %v3384 = vor.u32 %v3381, %v3382
        %v3385 = vrot.slane %v3381, 4
        %v3387 = vshrl.u32 %v3349, 16
        %v3389 = vrot.slane %v3387, 7
        %v3390 = vshll.u32 %v3349, 16
        %v3392 = vor.u32 %v3389, %v3390
        %v3393 = vrot.slane %v3389, 4
        %v3395 = vshrl.u32 %v3350, 16
        %v3397 = vrot.slane %v3395, 7
        %v3398 = vshll.u32 %v3350, 16
        %v3400 = vor.u32 %v3397, %v3398
        %v3401 = vrot.slane %v3397, 4
        %v3403 = vshrl.u32 %v3351, 16
        %v3405 = vrot.slane %v3403, 7
        %v3406 = vshll.u32 %v3351, 16
        %v3408 = vor.u32 %v3405, %v3406
        %v3409 = vrot.slane %v3405, 4
        %v3411 = vshrl.u32 %v3352, 16
        %v3413 = vrot.slane %v3411, 7
        %v3414 = vshll.u32 %v3352, 16
        %v3416 = vor.u32 %v3413, %v3414
        %v3417 = vrot.slane %v3413, 4
        %v3419 = vshrl.u32 %v3353, 16
        %v3421 = vrot.slane %v3419, 7
        %v3422 = vshll.u32 %v3353, 16
        %v3424 = vor.u32 %v3421, %v3422
        %v3425 = vrot.slane %v3421, 4
        %v3427 = vshrl.u32 %v3354, 16
        %v3429 = vrot.slane %v3427, 7
        %v3430 = vshll.u32 %v3354, 16
        %v3432 = vor.u32 %v3429, %v3430
        %v3433 = vrot.slane %v3429, 4
        %v3435 = vshrl.u32 %v3355, 16
        %v3437 = vrot.slane %v3435, 7
        %v3438 = vshll.u32 %v3355, 16
        %v3440 = vor.u32 %v3437, %v3438
        %v3441 = vrot.slane %v3437, 4
        %v3443 = vshrl.u32 %v3356, 16
        %v3445 = vrot.slane %v3443, 7
        %v3446 = vshll.u32 %v3356, 16
        %v3448 = vor.u32 %v3445, %v3446
        %v3449 = vrot.slane %v3445, 4
        %v3451 = vshrl.u32 %v3357, 16
        %v3453 = vrot.slane %v3451, 7
        %v3454 = vshll.u32 %v3357, 16
        %v3456 = vor.u32 %v3453, %v3454
        %v3457 = vrot.slane %v3453, 4
        %v3459 = vshrl.u32 %v3358, 16
        %v3461 = vrot.slane %v3459, 7
        %v3462 = vshll.u32 %v3358, 16
        %v3464 = vor.u32 %v3461, %v3462
        %v3465 = vrot.slane %v3461, 4
        %v3467 = vshrl.u32 %v3359, 16
        %v3469 = vrot.slane %v3467, 7
        %v3470 = vshll.u32 %v3359, 16
        %v3472 = vor.u32 %v3469, %v3470
        %v3473 = vrot.slane %v3469, 4
        %v3475 = vshrl.u32 %v3360, 16
        %v3477 = vrot.slane %v3475, 7
        %v3478 = vshll.u32 %v3360, 16
        %v3480 = vor.u32 %v3477, %v3478
        %v3481 = vrot.slane %v3477, 4
        %v3483 = vshrl.u32 %v3361, 16
        %v3485 = vrot.slane %v3483, 7
        %v3486 = vshll.u32 %v3361, 16
        %v3488 = vor.u32 %v3485, %v3486
        %v3489 = vrot.slane %v3485, 4
        %vm3522 = vcmask 1043456
        %vm3523 = vsmask.f32 7938
        %vm3524 = vmand %vm3522, %vm3523
        %v3525 = vld [vmem:[%s1325] sm:$0xf]
        %v3526 = vsel %vm3524, %v3368, %v3525
        %3527 = vst [vmem:[%s1325] sm:$0xf] %v3526
        %vm3528 = vcmask 1040384
        %vm3529 = vsmask.f32 256
        %vm3530 = vmand %vm3528, %vm3529
        %v3531 = vld [vmem:[%s1325 + $0x4] sm:$0x1]
        %v3532 = vsel %vm3530, %v3369, %v3531
        %3533 = vst [vmem:[%s1325 + $0x4] sm:$0x1] %v3532
        %v3534 = vld [vmem:[%s1325 + $0x8] sm:$0xf]
        %v3535 = vsel %vm3524, %v3376, %v3534
        %3536 = vst [vmem:[%s1325 + $0x8] sm:$0xf] %v3535
        %v3537 = vld [vmem:[%s1325 + $0xc] sm:$0x1]
        %v3538 = vsel %vm3530, %v3377, %v3537
        %3539 = vst [vmem:[%s1325 + $0xc] sm:$0x1] %v3538
        %v3540 = vld [vmem:[%s1325 + $0x10] sm:$0xf]
        %v3541 = vsel %vm3524, %v3384, %v3540
        %3542 = vst [vmem:[%s1325 + $0x10] sm:$0xf] %v3541
        %v3543 = vld [vmem:[%s1325 + $0x14] sm:$0x1]
        %v3544 = vsel %vm3530, %v3385, %v3543
        %3545 = vst [vmem:[%s1325 + $0x14] sm:$0x1] %v3544
        %v3546 = vld [vmem:[%s1325 + $0x18] sm:$0xf]
        %v3547 = vsel %vm3524, %v3392, %v3546
        %3548 = vst [vmem:[%s1325 + $0x18] sm:$0xf] %v3547
        %v3549 = vld [vmem:[%s1325 + $0x1c] sm:$0x1]
        %v3550 = vsel %vm3530, %v3393, %v3549
        %3551 = vst [vmem:[%s1325 + $0x1c] sm:$0x1] %v3550
        %v3552 = vld [vmem:[%s1325 + $0x20] sm:$0xf]
        %v3553 = vsel %vm3524, %v3400, %v3552
        %3554 = vst [vmem:[%s1325 + $0x20] sm:$0xf] %v3553
        %v3555 = vld [vmem:[%s1325 + $0x24] sm:$0x1]
        %v3556 = vsel %vm3530, %v3401, %v3555
        %3557 = vst [vmem:[%s1325 + $0x24] sm:$0x1] %v3556
        %v3558 = vld [vmem:[%s1325 + $0x28] sm:$0xf]
        %v3559 = vsel %vm3524, %v3408, %v3558
        %3560 = vst [vmem:[%s1325 + $0x28] sm:$0xf] %v3559
        %v3561 = vld [vmem:[%s1325 + $0x2c] sm:$0x1]
        %v3562 = vsel %vm3530, %v3409, %v3561
        %3563 = vst [vmem:[%s1325 + $0x2c] sm:$0x1] %v3562
        %v3564 = vld [vmem:[%s1325 + $0x30] sm:$0xf]
        %v3565 = vsel %vm3524, %v3416, %v3564
        %3566 = vst [vmem:[%s1325 + $0x30] sm:$0xf] %v3565
        %v3567 = vld [vmem:[%s1325 + $0x34] sm:$0x1]
        %v3568 = vsel %vm3530, %v3417, %v3567
        %3569 = vst [vmem:[%s1325 + $0x34] sm:$0x1] %v3568
        %v3570 = vld [vmem:[%s1325 + $0x38] sm:$0xf]
        %v3571 = vsel %vm3524, %v3424, %v3570
        %3572 = vst [vmem:[%s1325 + $0x38] sm:$0xf] %v3571
        %v3573 = vld [vmem:[%s1325 + $0x3c] sm:$0x1]
        %v3574 = vsel %vm3530, %v3425, %v3573
        %3575 = vst [vmem:[%s1325 + $0x3c] sm:$0x1] %v3574
        %v3576 = vld [vmem:[%s1325 + $0x50] sm:$0xf]
        %v3577 = vsel %vm3524, %v3432, %v3576
        %3578 = vst [vmem:[%s1325 + $0x50] sm:$0xf] %v3577
        %v3579 = vld [vmem:[%s1325 + $0x54] sm:$0x1]
        %v3580 = vsel %vm3530, %v3433, %v3579
        %3581 = vst [vmem:[%s1325 + $0x54] sm:$0x1] %v3580
        %v3582 = vld [vmem:[%s1325 + $0x58] sm:$0xf]
        %v3583 = vsel %vm3524, %v3440, %v3582
        %3584 = vst [vmem:[%s1325 + $0x58] sm:$0xf] %v3583
        %v3585 = vld [vmem:[%s1325 + $0x5c] sm:$0x1]
        %v3586 = vsel %vm3530, %v3441, %v3585
        %3587 = vst [vmem:[%s1325 + $0x5c] sm:$0x1] %v3586
        %v3588 = vld [vmem:[%s1325 + $0x60] sm:$0xf]
        %v3589 = vsel %vm3524, %v3448, %v3588
        %3590 = vst [vmem:[%s1325 + $0x60] sm:$0xf] %v3589
        %v3591 = vld [vmem:[%s1325 + $0x64] sm:$0x1]
        %v3592 = vsel %vm3530, %v3449, %v3591
        %3593 = vst [vmem:[%s1325 + $0x64] sm:$0x1] %v3592
        %v3594 = vld [vmem:[%s1325 + $0x68] sm:$0xf]
        %v3595 = vsel %vm3524, %v3456, %v3594
        %3596 = vst [vmem:[%s1325 + $0x68] sm:$0xf] %v3595
        %v3597 = vld [vmem:[%s1325 + $0x6c] sm:$0x1]
        %v3598 = vsel %vm3530, %v3457, %v3597
        %3599 = vst [vmem:[%s1325 + $0x6c] sm:$0x1] %v3598
        %v3600 = vld [vmem:[%s1325 + $0x70] sm:$0xf]
        %v3601 = vsel %vm3524, %v3464, %v3600
        %3602 = vst [vmem:[%s1325 + $0x70] sm:$0xf] %v3601
        %v3603 = vld [vmem:[%s1325 + $0x74] sm:$0x1]
        %v3604 = vsel %vm3530, %v3465, %v3603
        %3605 = vst [vmem:[%s1325 + $0x74] sm:$0x1] %v3604
        %v3606 = vld [vmem:[%s1325 + $0x78] sm:$0xf]
        %v3607 = vsel %vm3524, %v3472, %v3606
        %3608 = vst [vmem:[%s1325 + $0x78] sm:$0xf] %v3607
        %v3609 = vld [vmem:[%s1325 + $0x7c] sm:$0x1]
        %v3610 = vsel %vm3530, %v3473, %v3609
        %3611 = vst [vmem:[%s1325 + $0x7c] sm:$0x1] %v3610
        %v3612 = vld [vmem:[%s1325 + $0x80] sm:$0xf]
        %v3613 = vsel %vm3524, %v3480, %v3612
        %3614 = vst [vmem:[%s1325 + $0x80] sm:$0xf] %v3613
        %v3615 = vld [vmem:[%s1325 + $0x84] sm:$0x1]
        %v3616 = vsel %vm3530, %v3481, %v3615
        %3617 = vst [vmem:[%s1325 + $0x84] sm:$0x1] %v3616
        %v3618 = vld [vmem:[%s1325 + $0x88] sm:$0xf]
        %v3619 = vsel %vm3524, %v3488, %v3618
        %3620 = vst [vmem:[%s1325 + $0x88] sm:$0xf] %v3619
        %v3621 = vld [vmem:[%s1325 + $0x8c] sm:$0x1]
        %v3622 = vsel %vm3530, %v3489, %v3621
        %3623 = vst [vmem:[%s1325 + $0x8c] sm:$0x1] %v3622
        %p3624 = scmp.eq.s32.totalorder %s25, 4
        // Predicated region
        $region77: #{forward.2} parent=47 // pred_check
          %p3625 = pneg %p3624
        $region78: #{forward.2} parent=47 // pred_check_branch
          %3627 = sbr.rel (%p3625) target = $region80
        $region79: #{forward.2} parent=47 // pred_region
          %v3628 = vpack.c.bf16 %v3312, %v3311
          %v3629 = vpack.c.bf16 %v3314, %v3313
          %v3630 = vpack.c.bf16 %v3316, %v3315
          %v3631 = vpack.c.bf16 %v3318, %v3317
          %v3632 = vpack.c.bf16 %v3320, %v3319
          %v3633 = vpack.c.bf16 %v3322, %v3321
          %v3634 = vpack.c.bf16 %v3324, %v3323
          %v3635 = vpack.c.bf16 %v3326, %v3325
          %v3636 = vld [vmem:[%s4] sm:$0xf]
          %v3637 = vld [vmem:[%s4 + $0x4] sm:$0xf]
          %v3638 = vld [vmem:[%s4 + $0x8] sm:$0xf]
          %v3639 = vld [vmem:[%s4 + $0xc] sm:$0xf]
          %v3640 = vld [vmem:[%s4 + $0x10] sm:$0xf]
          %v3641 = vld [vmem:[%s4 + $0x14] sm:$0xf]
          %v3642 = vld [vmem:[%s4 + $0x18] sm:$0xf]
          %v3643 = vld [vmem:[%s4 + $0x1c] sm:$0xf]
          %v3644 = vld [vmem:[%s4 + $0x20] sm:$0xf]
          %v3645 = vld [vmem:[%s4 + $0x24] sm:$0xf]
          %v3646 = vld [vmem:[%s4 + $0x28] sm:$0xf]
          %v3647 = vld [vmem:[%s4 + $0x2c] sm:$0xf]
          %v3648 = vld [vmem:[%s4 + $0x30] sm:$0xf]
          %v3649 = vld [vmem:[%s4 + $0x34] sm:$0xf]
          %v3650 = vld [vmem:[%s4 + $0x38] sm:$0xf]
          %v3651 = vld [vmem:[%s4 + $0x3c] sm:$0xf]
          %v3668 = vunpack.c.l.b16 %v3636
          %v3669 = vunpack.c.l.b16 %v3637
          %v3670 = vunpack.c.l.b16 %v3638
          %v3671 = vunpack.c.l.b16 %v3639
          %v3672 = vunpack.c.l.b16 %v3640
          %v3673 = vunpack.c.l.b16 %v3641
          %v3674 = vunpack.c.l.b16 %v3642
          %v3675 = vunpack.c.l.b16 %v3643
          %v3676 = vunpack.c.l.b16 %v3644
          %v3677 = vunpack.c.l.b16 %v3645
          %v3678 = vunpack.c.l.b16 %v3646
          %v3679 = vunpack.c.l.b16 %v3647
          %v3680 = vunpack.c.l.b16 %v3648
          %v3681 = vunpack.c.l.b16 %v3649
          %v3682 = vunpack.c.l.b16 %v3650
          %v3683 = vunpack.c.l.b16 %v3651
          %v3684 = vpack.c.b16 %v3669, %v3668
          %v3685 = vpack.c.b16 %v3671, %v3670
          %v3686 = vpack.c.b16 %v3673, %v3672
          %v3687 = vpack.c.b16 %v3675, %v3674
          %v3688 = vpack.c.b16 %v3677, %v3676
          %v3689 = vpack.c.b16 %v3679, %v3678
          %v3690 = vpack.c.b16 %v3681, %v3680
          %v3691 = vpack.c.b16 %v3683, %v3682
          %3700 = vmatpush.bf16.msra.mxu0 %v3691
          %3701 = vmatpush.bf16.msra.mxu0 %v3690
          %3702 = vmatpush.bf16.msra.mxu0 %v3689
          %3703 = vmatpush.bf16.msra.mxu0 %v3688
          %3704 = vmatpush.bf16.msra.mxu0 %v3687
          %3705 = vmatpush.bf16.msra.mxu0 %v3686
          %3706 = vmatpush.bf16.msra.mxu0 %v3685
          %3707 = vmatpush.bf16.msra.mxu0 %v3684
          %3708 = vmatmul.bf16.gmra.mxu0 %v3628
          %v3709 = vpop.f32.mrf.mxu0
          %v3710 = vadd.f32 0.0, %v3709
          %v3711 = vpop.f32.mrf.mxu0
          %v3712 = vadd.f32 0.0, %v3711
          %3713 = vmatmul.bf16.gmra.mxu0 %v3629
          %v3714 = vpop.f32.mrf.mxu0
          %v3715 = vadd.f32 0.0, %v3714
          %v3716 = vpop.f32.mrf.mxu0
          %v3717 = vadd.f32 0.0, %v3716
          %3718 = vmatmul.bf16.gmra.mxu0 %v3630
          %v3719 = vpop.f32.mrf.mxu0
          %v3720 = vadd.f32 0.0, %v3719
          %v3721 = vpop.f32.mrf.mxu0
          %v3722 = vadd.f32 0.0, %v3721
          %3723 = vmatmul.bf16.gmra.mxu0 %v3631
          %v3724 = vpop.f32.mrf.mxu0
          %v3725 = vadd.f32 0.0, %v3724
          %v3726 = vpop.f32.mrf.mxu0
          %v3727 = vadd.f32 0.0, %v3726
          %3728 = vmatmul.bf16.gmra.mxu0 %v3632
          %v3729 = vpop.f32.mrf.mxu0
          %v3730 = vadd.f32 0.0, %v3729
          %v3731 = vpop.f32.mrf.mxu0
          %v3732 = vadd.f32 0.0, %v3731
          %3733 = vmatmul.bf16.gmra.mxu0 %v3633
          %v3734 = vpop.f32.mrf.mxu0
          %v3735 = vadd.f32 0.0, %v3734
          %v3736 = vpop.f32.mrf.mxu0
          %v3737 = vadd.f32 0.0, %v3736
          %3738 = vmatmul.bf16.gmra.mxu0 %v3634
          %v3739 = vpop.f32.mrf.mxu0
          %v3740 = vadd.f32 0.0, %v3739
          %v3741 = vpop.f32.mrf.mxu0
          %v3742 = vadd.f32 0.0, %v3741
          %3743 = vmatmul.bf16.gmra.mxu0 %v3635
          %v3744 = vpop.f32.mrf.mxu0
          %v3745 = vadd.f32 0.0, %v3744
          %v3746 = vpop.f32.mrf.mxu0
          %v3747 = vadd.f32 0.0, %v3746
          %3748 = vdwg.mxu0
          %vm3749 = vcmask 64512
          %v3750 = vsel %vm3749, %v3710, 0.0
          %v3751 = vsel %vm3749, %v3712, 0.0
          %v3752 = vadd.f32 %v3750, %v3751
          %v3753 = vsel %vm3749, %v3715, 0.0
          %v3754 = vadd.f32 %v3752, %v3753
          %v3755 = vsel %vm3749, %v3717, 0.0
          %v3756 = vadd.f32 %v3754, %v3755
          %v3757 = vsel %vm3749, %v3720, 0.0
          %v3758 = vadd.f32 %v3756, %v3757
          %v3759 = vsel %vm3749, %v3722, 0.0
          %v3760 = vadd.f32 %v3758, %v3759
          %v3761 = vsel %vm3749, %v3725, 0.0
          %v3762 = vadd.f32 %v3760, %v3761
          %v3763 = vsel %vm3749, %v3727, 0.0
          %v3764 = vadd.f32 %v3762, %v3763
          %v3765 = vsel %vm3749, %v3730, 0.0
          %v3766 = vadd.f32 %v3764, %v3765
          %v3767 = vsel %vm3749, %v3732, 0.0
          %v3768 = vadd.f32 %v3766, %v3767
          %v3769 = vsel %vm3749, %v3735, 0.0
          %v3770 = vadd.f32 %v3768, %v3769
          %v3771 = vsel %vm3749, %v3737, 0.0
          %v3772 = vadd.f32 %v3770, %v3771
          %v3773 = vsel %vm3749, %v3740, 0.0
          %v3774 = vadd.f32 %v3772, %v3773
          %v3775 = vsel %vm3749, %v3742, 0.0
          %v3776 = vadd.f32 %v3774, %v3775
          %v3777 = vsel %vm3749, %v3745, 0.0
          %v3778 = vadd.f32 %v3776, %v3777
          %v3779 = vsel %vm3749, %v3747, 0.0
          %v3780 = vadd.f32 %v3778, %v3779
          %v3781 = vrot.slane %v3780, 4
          %v3782 = vadd.f32 %v3780, %v3781
          %v3783 = vrot.slane %v3782, 2
          %v3784 = vadd.f32 %v3782, %v3783
          %v3785 = vrot.slane %v3784, 1
          %v3786 = vadd.f32 %v3784, %v3785
          %v3787 = vmul.f32 %v3710, %v3710
          %v3788 = vmul.f32 %v3712, %v3712
          %v3789 = vmul.f32 %v3715, %v3715
          %v3790 = vmul.f32 %v3717, %v3717
          %v3791 = vmul.f32 %v3720, %v3720
          %v3792 = vmul.f32 %v3722, %v3722
          %v3793 = vmul.f32 %v3725, %v3725
          %v3794 = vmul.f32 %v3727, %v3727
          %v3795 = vmul.f32 %v3730, %v3730
          %v3796 = vmul.f32 %v3732, %v3732
          %v3797 = vmul.f32 %v3735, %v3735
          %v3798 = vmul.f32 %v3737, %v3737
          %v3799 = vmul.f32 %v3740, %v3740
          %v3800 = vmul.f32 %v3742, %v3742
          %v3801 = vmul.f32 %v3745, %v3745
          %v3802 = vmul.f32 %v3747, %v3747
          %v3803 = vsel %vm3749, %v3787, 0.0
          %v3804 = vsel %vm3749, %v3788, 0.0
          %v3805 = vadd.f32 %v3803, %v3804
          %v3806 = vsel %vm3749, %v3789, 0.0
          %v3807 = vadd.f32 %v3805, %v3806
          %v3808 = vsel %vm3749, %v3790, 0.0
          %v3809 = vadd.f32 %v3807, %v3808
          %v3810 = vsel %vm3749, %v3791, 0.0
          %v3811 = vadd.f32 %v3809, %v3810
          %v3812 = vsel %vm3749, %v3792, 0.0
          %v3813 = vadd.f32 %v3811, %v3812
          %v3814 = vsel %vm3749, %v3793, 0.0
          %v3815 = vadd.f32 %v3813, %v3814
          %v3816 = vsel %vm3749, %v3794, 0.0
          %v3817 = vadd.f32 %v3815, %v3816
          %v3818 = vsel %vm3749, %v3795, 0.0
          %v3819 = vadd.f32 %v3817, %v3818
          %v3820 = vsel %vm3749, %v3796, 0.0
          %v3821 = vadd.f32 %v3819, %v3820
          %v3822 = vsel %vm3749, %v3797, 0.0
          %v3823 = vadd.f32 %v3821, %v3822
          %v3824 = vsel %vm3749, %v3798, 0.0
          %v3825 = vadd.f32 %v3823, %v3824
          %v3826 = vsel %vm3749, %v3799, 0.0
          %v3827 = vadd.f32 %v3825, %v3826
          %v3828 = vsel %vm3749, %v3800, 0.0
          %v3829 = vadd.f32 %v3827, %v3828
          %v3830 = vsel %vm3749, %v3801, 0.0
          %v3831 = vadd.f32 %v3829, %v3830
          %v3832 = vsel %vm3749, %v3802, 0.0
          %v3833 = vadd.f32 %v3831, %v3832
          %v3834 = vrot.slane %v3833, 4
          %v3835 = vadd.f32 %v3833, %v3834
          %v3836 = vrot.slane %v3835, 2
          %v3837 = vadd.f32 %v3835, %v3836
          %v3838 = vrot.slane %v3837, 1
          %v3839 = vadd.f32 %v3837, %v3838
          %v3840 = vmul.f32 %v3786, 0.0078125
          %v3841 = vmul.f32 %v3839, 0.0078125
          %v3842 = vmul.f32 %v3840, %v3840
          %v3843 = vsub.f32 %v3841, %v3842
          %v3844 = vsub.f32 %v3710, %v3840
          %v3845 = vsub.f32 %v3712, %v3840
          %v3846 = vsub.f32 %v3715, %v3840
          %v3847 = vsub.f32 %v3717, %v3840
          %v3848 = vsub.f32 %v3720, %v3840
          %v3849 = vsub.f32 %v3722, %v3840
          %v3850 = vsub.f32 %v3725, %v3840
          %v3851 = vsub.f32 %v3727, %v3840
          %v3852 = vsub.f32 %v3730, %v3840
          %v3853 = vsub.f32 %v3732, %v3840
          %v3854 = vsub.f32 %v3735, %v3840
          %v3855 = vsub.f32 %v3737, %v3840
          %v3856 = vsub.f32 %v3740, %v3840
          %v3857 = vsub.f32 %v3742, %v3840
          %v3858 = vsub.f32 %v3745, %v3840
          %v3859 = vsub.f32 %v3747, %v3840
          %v3860 = vadd.f32 %v3843, 1e-05
          %v3861 = vrsqrt.pop %v3860
          %v3862 = vmul.f32 %v3861, %v3860
          %v3863 = vmul.f32 %v3862, %v3861
          %v3864 = vmul.f32 0.5, %v3863
          %v3865 = vsub.f32 1.5, %v3864
          %v3866 = vmul.f32 %v3861, %v3865
          %vm3867 = vweird.f32 %v3860
          %vm3868 = vweird.f32 %v3861
          %vm3869 = vmor %vm3867, %vm3868
          %v3870 = vsel %vm3869, %v3861, %v3866
          %v3871 = vmul.f32 %v3844, %v3870
          %v3872 = vmul.f32 %v3845, %v3870
          %v3873 = vmul.f32 %v3846, %v3870
          %v3874 = vmul.f32 %v3847, %v3870
          %v3875 = vmul.f32 %v3848, %v3870
          %v3876 = vmul.f32 %v3849, %v3870
          %v3877 = vmul.f32 %v3850, %v3870
          %v3878 = vmul.f32 %v3851, %v3870
          %v3879 = vmul.f32 %v3852, %v3870
          %v3880 = vmul.f32 %v3853, %v3870
          %v3881 = vmul.f32 %v3854, %v3870
          %v3882 = vmul.f32 %v3855, %v3870
          %v3883 = vmul.f32 %v3856, %v3870
          %v3884 = vmul.f32 %v3857, %v3870
          %v3885 = vmul.f32 %v3858, %v3870
          %v3886 = vmul.f32 %v3859, %v3870
          %v3887 = vld [vmem:[#allocation9] sm:$0x1]
          %v3889 = vperm.slane %v3887, 0
          %v3891 = vmul.f32 %v3871, %v3889
          %v3892 = vmul.f32 %v3872, %v3889
          %v3893 = vmul.f32 %v3873, %v3889
          %v3894 = vmul.f32 %v3874, %v3889
          %v3895 = vmul.f32 %v3875, %v3889
          %v3896 = vmul.f32 %v3876, %v3889
          %v3897 = vmul.f32 %v3877, %v3889
          %v3898 = vmul.f32 %v3878, %v3889
          %v3899 = vmul.f32 %v3879, %v3889
          %v3900 = vmul.f32 %v3880, %v3889
          %v3901 = vmul.f32 %v3881, %v3889
          %v3902 = vmul.f32 %v3882, %v3889
          %v3903 = vmul.f32 %v3883, %v3889
          %v3904 = vmul.f32 %v3884, %v3889
          %v3905 = vmul.f32 %v3885, %v3889
          %v3906 = vmul.f32 %v3886, %v3889
          %v3907 = vld [vmem:[#allocation11] sm:$0x1]
          %v3909 = vperm.slane %v3907, 0
          %v3911 = vadd.f32 %v3891, %v3909
          %v3912 = vadd.f32 %v3892, %v3909
          %v3913 = vadd.f32 %v3893, %v3909
          %v3914 = vadd.f32 %v3894, %v3909
          %v3915 = vadd.f32 %v3895, %v3909
          %v3916 = vadd.f32 %v3896, %v3909
          %v3917 = vadd.f32 %v3897, %v3909
          %v3918 = vadd.f32 %v3898, %v3909
          %v3919 = vadd.f32 %v3899, %v3909
          %v3920 = vadd.f32 %v3900, %v3909
          %v3921 = vadd.f32 %v3901, %v3909
          %v3922 = vadd.f32 %v3902, %v3909
          %v3923 = vadd.f32 %v3903, %v3909
          %v3924 = vadd.f32 %v3904, %v3909
          %v3925 = vadd.f32 %v3905, %v3909
          %v3926 = vadd.f32 %v3906, %v3909
          %v3927 = vmax.f32 %v3911, 0.0
          %v3928 = vmax.f32 %v3912, 0.0
          %v3929 = vmax.f32 %v3913, 0.0
          %v3930 = vmax.f32 %v3914, 0.0
          %v3931 = vmax.f32 %v3915, 0.0
          %v3932 = vmax.f32 %v3916, 0.0
          %v3933 = vmax.f32 %v3917, 0.0
          %v3934 = vmax.f32 %v3918, 0.0
          %v3935 = vmax.f32 %v3919, 0.0
          %v3936 = vmax.f32 %v3920, 0.0
          %v3937 = vmax.f32 %v3921, 0.0
          %v3938 = vmax.f32 %v3922, 0.0
          %v3939 = vmax.f32 %v3923, 0.0
          %v3940 = vmax.f32 %v3924, 0.0
          %v3941 = vmax.f32 %v3925, 0.0
          %v3942 = vmax.f32 %v3926, 0.0
          %3943 = vst.msk [vmem:[%s7] sm:$0xff] %vm3749, %v3927
          %3944 = vst.msk [vmem:[%s7 + $0x8] sm:$0xff] %vm3749, %v3928
          %3945 = vst.msk [vmem:[%s7 + $0x10] sm:$0xff] %vm3749, %v3929
          %3946 = vst.msk [vmem:[%s7 + $0x18] sm:$0xff] %vm3749, %v3930
          %3947 = vst.msk [vmem:[%s7 + $0x20] sm:$0xff] %vm3749, %v3931
          %3948 = vst.msk [vmem:[%s7 + $0x28] sm:$0xff] %vm3749, %v3932
          %3949 = vst.msk [vmem:[%s7 + $0x30] sm:$0xff] %vm3749, %v3933
          %3950 = vst.msk [vmem:[%s7 + $0x38] sm:$0xff] %vm3749, %v3934
          %3951 = vst.msk [vmem:[%s7 + $0x40] sm:$0xff] %vm3749, %v3935
          %3952 = vst.msk [vmem:[%s7 + $0x48] sm:$0xff] %vm3749, %v3936
          %3953 = vst.msk [vmem:[%s7 + $0x50] sm:$0xff] %vm3749, %v3937
          %3954 = vst.msk [vmem:[%s7 + $0x58] sm:$0xff] %vm3749, %v3938
          %3955 = vst.msk [vmem:[%s7 + $0x60] sm:$0xff] %vm3749, %v3939
          %3956 = vst.msk [vmem:[%s7 + $0x68] sm:$0xff] %vm3749, %v3940
          %3957 = vst.msk [vmem:[%s7 + $0x70] sm:$0xff] %vm3749, %v3941
          %3958 = vst.msk [vmem:[%s7 + $0x78] sm:$0xff] %vm3749, %v3942
        $region80: #{forward.2} parent=47 // pred_fallthru
          _
        // Predicated region
        $region81: #{forward.2} parent=47 // pred_check
          %p3959 = pneg %p200
        $region82: #{forward.2} parent=47 // pred_check_branch
          %3961 = sbr.rel (%p3959) target = $region84
        $region83: #{forward.2} parent=47 // pred_region
          _
        $region84: #{forward.2} parent=47 // pred_fallthru
          _
        // Predicated region
        $region85: #{forward.2} parent=47 // pred_check
          %p3962 = pneg %p200
        $region86: #{forward.2} parent=47 // pred_check_branch
          %3964 = sbr.rel (%p3962) target = $region88
        $region87: #{forward.2} parent=47 // pred_region
          _
        $region88: #{forward.2} parent=47 // pred_fallthru
          _
      $region48: #{forward.2} parent=5 // pred_fallthru
        _
      %p3965 = scmp.le.s32.totalorder 2, %s20
      // Predicated region
      $region89: #{forward.2} parent=5 // pred_check
        %p3966 = pneg %p3965
      $region90: #{forward.2} parent=5 // pred_check_branch
        %3968 = sbr.rel (%p3966) target = $region92
      $region91: #{forward.2} parent=5 // pred_region
        %s3969 = ssub.s32 %s20, 2
      $region92: #{forward.2} parent=5 // pred_fallthru
        _
    $region6: #{forward.2} parent=1 // loop_footer
      %s24 = sadd.s32 1, %s20
    $region7: #{forward.2} parent=1 // loop_footer_branch
      %19 = sbr.rel target = $region3
    $region8: #{forward.2} parent=1 // loop_exit
      _
    %3970 = vsyncpa [#allocation5], 1
    %s3971 = scalar_lea.sflag [#allocation5], 1
    %3972 = vsyncpa %s3971, 1
    %3973 = vsyncpa [#allocation7], 1
    %s3974 = scalar_lea.sflag [#allocation7], 1
    %3975 = vsyncpa %s3974, 1
    %3976 = vsyncpa [#allocation10], 1

</llo_original>
